<compile_context>
chip_gen: v6e
topology: v6e:2x2x1
jax: 0.10.0
libtpu: 0.0.40
codegen_flags: <defaults>
</compile_context>

<pallas_src>
import jax
import jax.numpy as jnp
from jax.experimental import pallas as pl
from jax.experimental.pallas import tpu as pltpu

NEURON_CDECAY = 0.5
NEURON_VTH = 0.5
THETA_V = -0.172
THETA_U = 0.529
THETA_R = 0.021
THETA_S = 0.132


def neuron_step(drive, cur, volt, spk, res):
    """One Izhikevich-like update; `drive` is the full synaptic input
    (Linear(pre) + bias [+ lateral]) precomputed by the caller."""
    cur = cur * NEURON_CDECAY + drive
    volt = volt * (1.0 - spk) + spk * THETA_R
    res = res + spk * THETA_S
    volt_delta = volt * volt - volt - res + cur
    res_delta = THETA_V * volt - THETA_U * res
    volt = volt + volt_delta
    res = res + res_delta
    spk = (volt > NEURON_VTH).astype(jnp.float32)  # PseudoSpikeRect.forward
    return cur, volt, spk, res


def spike_mlp_kernel(x_ref, w0_ref, b0_ref, wf_ref, bf_ref, wout_ref, bout_ref,
                     out_ref, drive0_ref):
    """One batch tile: full temporal unroll, recurrent state in vregs."""
    TB, od = out_ref.shape              # batch-tile rows, out_pop_dim
    TTB, h0 = drive0_ref.shape          # T*TB, hidden0
    T = TTB // TB                       # spike_ts (static)
    h1pod = wf_ref.shape[1]             # h1 + od (fused layer-1 | lateral width)
    h1 = h1pod - od
    mxu_dt = wf_ref.dtype               # f32 or bf16 MXU operands

    # Layer-0 has no recurrence -> ONE batched GEMM over all timesteps of this
    # tile, staged in VMEM scratch (per-step slice rides the idle vld slots,
    # keeps the unrolled loop from carrying a (T*TB, h0) live value -> no spills).
    drive0_ref[...] = (
        jnp.dot(x_ref[0], w0_ref[...], preferred_element_type=jnp.float32)
        + b0_ref[...])

    # Tiny biases: broadcast once, outside the loop (JAX does not CSE broadcasts).
    b_f = jnp.broadcast_to(bf_ref[...], (TB, h1pod))     # [b1 | 0]
    b_out = jnp.broadcast_to(bout_ref[...], (TB, od))    # bout + bconn (folded)

    def zeros(n):
        return jnp.zeros((TB, n), jnp.float32)

    c0, v0, s0, r0 = zeros(h0), zeros(h0), zeros(h0), zeros(h0)
    c1, v1, s1, r1 = zeros(h1), zeros(h1), zeros(h1), zeros(h1)
    co, vo, so, ro = zeros(od), zeros(od), zeros(od), zeros(od)
    acc = zeros(od)

    # Small static trip count -> fully unrolled; weight matrices are re-read from
    # VMEM each iteration (cheap) so large hidden sizes don't exhaust the vreg file.
    for t in range(T):
        # hidden layer 0: sublane-aligned static slice of the precomputed drive
        d0 = drive0_ref[pl.ds(t * TB, TB), :]
        c0, v0, s0, r0 = neuron_step(d0, c0, v0, s0, r0)

        # fused (layer-1 | 'intra' lateral) matmul:
        #   [s0_t | so_{t-1}] @ [[w1, 0], [0, wconn]]
        pre = jnp.concatenate([s0, so], axis=1).astype(mxu_dt)
        df = jnp.dot(pre, wf_ref[...], preferred_element_type=jnp.float32) + b_f
        d1 = df[:, :h1]
        lateral = df[:, h1:]
        c1, v1, s1, r1 = neuron_step(d1, c1, v1, s1, r1)

        # output population drive (bconn already folded into b_out)
        do = (jnp.dot(s1.astype(mxu_dt), wout_ref[...],
                      preferred_element_type=jnp.float32) + b_out + lateral)
        co, vo, so, ro = neuron_step(do, co, vo, so, ro)

        acc = acc + so

    out_ref[...] = acc * (1.0 / T)      # 'fr' decode: firing rate (no divide)


def spike_mlp_forward(x_tbd, params, *, tile_b=64, mxu_dtype=jnp.float32):
    """x_tbd: (spike_ts, batch, in_pop_dim) float32, time-major.

    tile_b:    batch-tile size (multiple of 8); grid over tiles is marked
               "parallel" so v7x's two TensorCores split the batch.
    mxu_dtype: jnp.bfloat16 on v6e/v7x halves weight/activation footprint and
               feeds the MXU at native bf16 rate (spikes are 0/1 -> exact);
               accumulation and neuron state stay f32.  Default f32 for exact
               parity with the f32 reference.
    """
    assert tile_b % 8 == 0
    T, B, din = x_tbd.shape
    h0 = params["w0"].shape[1]
    h1 = params["w1"].shape[1]
    od = params["wout"].shape[1]

    # Pad batch to a multiple of the tile (rows are independent; padded rows are
    # sliced off).  At small batch this collapses to one 8-row tile.
    tb = min(tile_b, ((B + 7) // 8) * 8)
    B_pad = ((B + tb - 1) // tb) * tb
    n_tiles = B_pad // tb
    if B_pad != B:
        x_tbd = jnp.pad(x_tbd, ((0, 0), (0, B_pad - B), (0, 0)))

    # Tile-major layout: (n_tiles, T*tb, din); rows within a tile ordered (t, b).
    x_tiled = (x_tbd.reshape(T, n_tiles, tb, din)
               .transpose(1, 0, 2, 3)
               .reshape(n_tiles, T * tb, din)).astype(mxu_dtype)

    # Fold the constant Conv1d bias into the output-layer bias (both added every step).
    bout_f = params["bout"] + params["bconn"]
    # Fused layer-1 + lateral weights: block-diagonal [[w1, 0], [0, wconn]].
    wf = jnp.zeros((h0 + od, h1 + od), jnp.float32)
    wf = wf.at[:h0, :h1].set(params["w1"]).at[h0:, h1:].set(params["wconn"])
    bf = jnp.concatenate([params["b1"], jnp.zeros((1, od), jnp.float32)], axis=1)

    w0 = params["w0"].astype(mxu_dtype)
    wf = wf.astype(mxu_dtype)
    wout = params["wout"].astype(mxu_dtype)

    # NOTE (v7x): total resident VMEM here is a few hundred KiB; if batch/spike_ts
    # or hidden sizes scale up, re-check (x tile + weights + double-buffering +
    # drive0 scratch) against the 32 MiB scoped / 64 MiB physical budget and shrink
    # tile_b or raise vmem_limit_bytes in CompilerParams.
    grid_spec = pltpu.PrefetchScalarGridSpec(
        num_scalar_prefetch=0,
        grid=(n_tiles,),
        in_specs=[
            pl.BlockSpec((1, T * tb, din), lambda i: (i, 0, 0)),   # x (per batch tile)
            pl.BlockSpec((din, h0), lambda i: (0, 0)),             # w0
            pl.BlockSpec((1, h0), lambda i: (0, 0)),               # b0
            pl.BlockSpec((h0 + od, h1 + od), lambda i: (0, 0)),    # fused [w1|wconn]
            pl.BlockSpec((1, h1 + od), lambda i: (0, 0)),          # fused [b1|0]
            pl.BlockSpec((h1, od), lambda i: (0, 0)),              # wout
            pl.BlockSpec((1, od), lambda i: (0, 0)),               # bout + bconn
        ],
        out_specs=pl.BlockSpec((tb, od), lambda i: (i, 0)),
        scratch_shapes=[pltpu.VMEM((T * tb, h0), jnp.float32)],    # staged layer-0 drive
    )
    out = pl.pallas_call(
        spike_mlp_kernel,
        out_shape=jax.ShapeDtypeStruct((B_pad, od), jnp.float32),
        grid_spec=grid_spec,
        compiler_params=pltpu.CompilerParams(dimension_semantics=("parallel",)),
    )(x_tiled, w0, params["b0"], wf, bf, wout, bout_f)
    return out[:B]


def reference_forward(x_tbd, params):
    """Pure-JAX reference mirroring the PyTorch SpikeMLP.forward
    (connections='intra', decode='fr'), including its update ordering."""
    T, B, _ = x_tbd.shape
    h0 = params["w0"].shape[1]
    h1 = params["w1"].shape[1]
    od = params["wout"].shape[1]

    def zeros(n):
        return jnp.zeros((B, n), jnp.float32)

    def membrane(cur, volt, spk, res):
        volt = volt * (1.0 - spk) + spk * THETA_R
        res = res + spk * THETA_S
        volt_delta = volt * volt - volt - res + cur
        res_delta = THETA_V * volt - THETA_U * res
        volt = volt + volt_delta
        res = res + res_delta
        spk = (volt > NEURON_VTH).astype(jnp.float32)
        return cur, volt, spk, res

    c0, v0, s0, r0 = zeros(h0), zeros(h0), zeros(h0), zeros(h0)
    c1, v1, s1, r1 = zeros(h1), zeros(h1), zeros(h1), zeros(h1)
    co, vo, so, ro = zeros(od), zeros(od), zeros(od), zeros(od)
    acc = zeros(od)

    for t in range(T):
        c0 = c0 * NEURON_CDECAY + (x_tbd[t] @ params["w0"] + params["b0"])
        c0, v0, s0, r0 = membrane(c0, v0, s0, r0)

        c1 = c1 * NEURON_CDECAY + (s0 @ params["w1"] + params["b1"])
        c1, v1, s1, r1 = membrane(c1, v1, s1, r1)

        co = co * NEURON_CDECAY + (s1 @ params["wout"] + params["bout"])
        co = co + (so @ params["wconn"] + params["bconn"])   # prev-step output spikes
        co, vo, so, ro = membrane(co, vo, so, ro)

        acc = acc + so
    return acc / T


if __name__ == "__main__":
    # Small, self-consistent SpikeMLP config (connections='intra', decode='fr')
    batch = 2
    in_pop_dim = 32
    hidden_sizes = (64, 32)
    act_dim = 4
    dec_pop_dim = 8
    out_pop_dim = act_dim * dec_pop_dim  # 32
    spike_ts = 8

    key = jax.random.PRNGKey(0)
    ks = jax.random.split(key, 10)

    def lin(kw, kb, fan_in, fan_out):
        bound = 1.0 / jnp.sqrt(fan_in)
        w = jax.random.uniform(kw, (fan_in, fan_out), jnp.float32, -bound, bound)
        b = jax.random.uniform(kb, (1, fan_out), jnp.float32, -bound, bound)
        return w, b

    w0, b0 = lin(ks[0], ks[1], in_pop_dim, hidden_sizes[0])
    w1, b1 = lin(ks[2], ks[3], hidden_sizes[0], hidden_sizes[1])
    wout, bout = lin(ks[4], ks[5], hidden_sizes[1], out_pop_dim)

    # Grouped Conv1d(act_dim, out_pop_dim, dec_pop_dim, groups=act_dim) as block-diag dense.
    conv_w = jax.random.uniform(ks[6], (out_pop_dim, 1, dec_pop_dim), jnp.float32,
                                -1.0 / jnp.sqrt(dec_pop_dim), 1.0 / jnp.sqrt(dec_pop_dim))
    conv_b = jax.random.uniform(ks[7], (1, out_pop_dim), jnp.float32,
                                -1.0 / jnp.sqrt(dec_pop_dim), 1.0 / jnp.sqrt(dec_pop_dim))
    wconn = jnp.zeros((out_pop_dim, out_pop_dim), jnp.float32)
    for o in range(out_pop_dim):
        g = o // dec_pop_dim
        wconn = wconn.at[g * dec_pop_dim:(g + 1) * dec_pop_dim, o].set(conv_w[o, 0, :])

    params = dict(w0=w0, b0=b0, w1=w1, b1=b1, wout=wout, bout=bout,
                  wconn=wconn, bconn=conv_b)

    # Input spike train, PyTorch layout (batch, in_pop_dim, spike_ts) -> time-major.
    x_nct = jax.random.bernoulli(ks[8], 0.5, (batch, in_pop_dim, spike_ts)).astype(jnp.float32)
    x_tbd = jnp.transpose(x_nct, (2, 0, 1))  # (spike_ts, batch, in_pop_dim)

    out = spike_mlp_forward(x_tbd, params)
    out = jax.block_until_ready(out)

    ref = reference_forward(x_tbd, params)
    assert out.shape == (batch, out_pop_dim)
    assert jnp.allclose(out, ref, atol=1e-5), (out, ref)

    print("KERNEL_OK")
</pallas_src>

<mosaic_0001>
module attributes {stable_mosaic.version = 11 : i64} {
  func.func @spike_mlp_kernel(%arg0: i32, %arg1: memref<1x64x32xf32, #tpu.memory_space<vmem>>, %arg2: memref<32x64xf32, #tpu.memory_space<vmem>>, %arg3: memref<1x64xf32, #tpu.memory_space<vmem>>, %arg4: memref<96x64xf32, #tpu.memory_space<vmem>>, %arg5: memref<1x64xf32, #tpu.memory_space<vmem>>, %arg6: memref<32x32xf32, #tpu.memory_space<vmem>>, %arg7: memref<1x32xf32, #tpu.memory_space<vmem>>, %arg8: memref<8x32xf32, #tpu.memory_space<vmem>>, %arg9: memref<64x64xf32, #tpu.memory_space<vmem>>) attributes {dimension_semantics = [#tpu.dimension_semantics<parallel>], iteration_bounds = array<i64: 1>, scalar_prefetch = 0 : i64, scratch_operands = 1 : i64, tpu.core_type = #tpu.core_type<tc>, window_params = [{transform_indices = @transform_0, window_bounds = array<i64: 1, 64, 32>}, {pipeline_mode = #tpu.pipeline_mode<synchronous>, transform_indices = @transform_1, window_bounds = array<i64: 32, 64>}, {pipeline_mode = #tpu.pipeline_mode<synchronous>, transform_indices = @transform_2, window_bounds = array<i64: 1, 64>}, {pipeline_mode = #tpu.pipeline_mode<synchronous>, transform_indices = @transform_3, window_bounds = array<i64: 96, 64>}, {pipeline_mode = #tpu.pipeline_mode<synchronous>, transform_indices = @transform_4, window_bounds = array<i64: 1, 64>}, {pipeline_mode = #tpu.pipeline_mode<synchronous>, transform_indices = @transform_5, window_bounds = array<i64: 32, 32>}, {pipeline_mode = #tpu.pipeline_mode<synchronous>, transform_indices = @transform_6, window_bounds = array<i64: 1, 32>}, {transform_indices = @transform_7, window_bounds = array<i64: 8, 32>}]} {
    %c0 = arith.constant 0 : index
    %c0_0 = arith.constant 0 : index
    %c0_1 = arith.constant 0 : index
    %0 = vector.load %arg1[%c0, %c0_0, %c0_1] : memref<1x64x32xf32, #tpu.memory_space<vmem>>, vector<1x64x32xf32>
    %1 = vector.shape_cast %0 : vector<1x64x32xf32> to vector<64x32xf32>
    %c0_2 = arith.constant 0 : index
    %c0_3 = arith.constant 0 : index
    %2 = vector.load %arg2[%c0_2, %c0_3] : memref<32x64xf32, #tpu.memory_space<vmem>>, vector<32x64xf32>
    %cst = arith.constant dense<0.000000e+00> : vector<64x64xf32>
    %3 = tpu.matmul %1, %2, %cst {dimension_numbers = #tpu.dot_dimension_numbers<[1], [0], [0], [1], [0, 0, 1, 1], [], []>} : vector<64x32xf32>, vector<32x64xf32>, vector<64x64xf32> -> vector<64x64xf32>
    %c0_4 = arith.constant 0 : index
    %c0_5 = arith.constant 0 : index
    %4 = vector.load %arg3[%c0_4, %c0_5] : memref<1x64xf32, #tpu.memory_space<vmem>>, vector<1x64xf32>
    %5 = vector.broadcast %4 : vector<1x64xf32> to vector<64x64xf32>
    %6 = arith.addf %3, %5 : vector<64x64xf32>
    %c0_6 = arith.constant 0 : index
    %c0_7 = arith.constant 0 : index
    %7 = vector.load %arg9[%c0_6, %c0_7] : memref<64x64xf32, #tpu.memory_space<vmem>>, vector<64x64xf32>
    tpu.vector_store %arg9[%c0_6, %c0_7], %6 {strides = array<i32>} : memref<64x64xf32, #tpu.memory_space<vmem>>, vector<64x64xf32>,
    %c0_8 = arith.constant 0 : index
    %c0_9 = arith.constant 0 : index
    %8 = vector.load %arg5[%c0_8, %c0_9] : memref<1x64xf32, #tpu.memory_space<vmem>>, vector<1x64xf32>
    %9 = vector.shape_cast %8 : vector<1x64xf32> to vector<1x64xf32>
    %10 = vector.broadcast %9 : vector<1x64xf32> to vector<8x64xf32>
    %c0_10 = arith.constant 0 : index
    %c0_11 = arith.constant 0 : index
    %11 = vector.load %arg7[%c0_10, %c0_11] : memref<1x32xf32, #tpu.memory_space<vmem>>, vector<1x32xf32>
    %12 = vector.shape_cast %11 : vector<1x32xf32> to vector<1x32xf32>
    %13 = vector.broadcast %12 : vector<1x32xf32> to vector<8x32xf32>
    %cst_12 = arith.constant 0.000000e+00 : f32
    %14 = vector.broadcast %cst_12 : f32 to vector<8x64xf32>
    %cst_13 = arith.constant 0.000000e+00 : f32
    %15 = vector.broadcast %cst_13 : f32 to vector<8x64xf32>
    %cst_14 = arith.constant 0.000000e+00 : f32
    %16 = vector.broadcast %cst_14 : f32 to vector<8x64xf32>
    %cst_15 = arith.constant 0.000000e+00 : f32
    %17 = vector.broadcast %cst_15 : f32 to vector<8x64xf32>
    %cst_16 = arith.constant 0.000000e+00 : f32
    %18 = vector.broadcast %cst_16 : f32 to vector<8x32xf32>
    %cst_17 = arith.constant 0.000000e+00 : f32
    %19 = vector.broadcast %cst_17 : f32 to vector<8x32xf32>
    %cst_18 = arith.constant 0.000000e+00 : f32
    %20 = vector.broadcast %cst_18 : f32 to vector<8x32xf32>
    %cst_19 = arith.constant 0.000000e+00 : f32
    %21 = vector.broadcast %cst_19 : f32 to vector<8x32xf32>
    %cst_20 = arith.constant 0.000000e+00 : f32
    %22 = vector.broadcast %cst_20 : f32 to vector<8x32xf32>
    %cst_21 = arith.constant 0.000000e+00 : f32
    %23 = vector.broadcast %cst_21 : f32 to vector<8x32xf32>
    %cst_22 = arith.constant 0.000000e+00 : f32
    %24 = vector.broadcast %cst_22 : f32 to vector<8x32xf32>
    %cst_23 = arith.constant 0.000000e+00 : f32
    %25 = vector.broadcast %cst_23 : f32 to vector<8x32xf32>
    %cst_24 = arith.constant 0.000000e+00 : f32
    %26 = vector.broadcast %cst_24 : f32 to vector<8x32xf32>
    %c0_25 = arith.constant 0 : index
    %c0_26 = arith.constant 0 : index
    %27 = vector.load %arg9[%c0_25, %c0_26] : memref<64x64xf32, #tpu.memory_space<vmem>>, vector<8x64xf32>
    %cst_27 = arith.constant 5.000000e-01 : f32
    %28 = vector.broadcast %cst_27 : f32 to vector<8x64xf32>
    %29 = arith.mulf %14, %28 : vector<8x64xf32>
    %30 = arith.addf %29, %27 : vector<8x64xf32>
    %cst_28 = arith.constant 1.000000e+00 : f32
    %31 = vector.broadcast %cst_28 : f32 to vector<8x64xf32>
    %32 = arith.subf %31, %16 : vector<8x64xf32>
    %33 = arith.mulf %15, %32 : vector<8x64xf32>
    %cst_29 = arith.constant 2.100000e-02 : f32
    %34 = vector.broadcast %cst_29 : f32 to vector<8x64xf32>
    %35 = arith.mulf %16, %34 : vector<8x64xf32>
    %36 = arith.addf %33, %35 : vector<8x64xf32>
    %cst_30 = arith.constant 1.320000e-01 : f32
    %37 = vector.broadcast %cst_30 : f32 to vector<8x64xf32>
    %38 = arith.mulf %16, %37 : vector<8x64xf32>
    %39 = arith.addf %17, %38 : vector<8x64xf32>
    %40 = arith.mulf %36, %36 : vector<8x64xf32>
    %41 = arith.subf %40, %36 : vector<8x64xf32>
    %42 = arith.subf %41, %39 : vector<8x64xf32>
    %43 = arith.addf %42, %30 : vector<8x64xf32>
    %cst_31 = arith.constant -1.720000e-01 : f32
    %44 = vector.broadcast %cst_31 : f32 to vector<8x64xf32>
    %45 = arith.mulf %44, %36 : vector<8x64xf32>
    %cst_32 = arith.constant 5.290000e-01 : f32
    %46 = vector.broadcast %cst_32 : f32 to vector<8x64xf32>
    %47 = arith.mulf %46, %39 : vector<8x64xf32>
    %48 = arith.subf %45, %47 : vector<8x64xf32>
    %49 = arith.addf %36, %43 : vector<8x64xf32>
    %50 = arith.addf %39, %48 : vector<8x64xf32>
    %cst_33 = arith.constant 5.000000e-01 : f32
    %51 = vector.broadcast %cst_33 : f32 to vector<8x64xf32>
    %52 = arith.cmpf ogt, %49, %51 : vector<8x64xf32>
    %53 = arith.extui %52 : vector<8x64xi1> to vector<8x64xi32>
    %54 = arith.sitofp %53 : vector<8x64xi32> to vector<8x64xf32>
    %55 = tpu.concatenate %54, %24 in 1 : vector<8x64xf32>, vector<8x32xf32> -> vector<8x96xf32>
    %c0_34 = arith.constant 0 : index
    %c0_35 = arith.constant 0 : index
    %56 = vector.load %arg4[%c0_34, %c0_35] : memref<96x64xf32, #tpu.memory_space<vmem>>, vector<96x64xf32>
    %cst_36 = arith.constant dense<0.000000e+00> : vector<8x64xf32>
    %57 = tpu.matmul %55, %56, %cst_36 {dimension_numbers = #tpu.dot_dimension_numbers<[1], [0], [0], [1], [0, 0, 1, 1], [], []>} : vector<8x96xf32>, vector<96x64xf32>, vector<8x64xf32> -> vector<8x64xf32>
    %58 = arith.addf %57, %10 : vector<8x64xf32>
    %59 = vector.extract_strided_slice %58 {offsets = [0, 0], sizes = [8, 32], strides = [1, 1]} : vector<8x64xf32> to vector<8x32xf32>
    %60 = vector.extract_strided_slice %58 {offsets = [0, 32], sizes = [8, 32], strides = [1, 1]} : vector<8x64xf32> to vector<8x32xf32>
    %cst_37 = arith.constant 5.000000e-01 : f32
    %61 = vector.broadcast %cst_37 : f32 to vector<8x32xf32>
    %62 = arith.mulf %18, %61 : vector<8x32xf32>
    %63 = arith.addf %62, %59 : vector<8x32xf32>
    %cst_38 = arith.constant 1.000000e+00 : f32
    %64 = vector.broadcast %cst_38 : f32 to vector<8x32xf32>
    %65 = arith.subf %64, %20 : vector<8x32xf32>
    %66 = arith.mulf %19, %65 : vector<8x32xf32>
    %cst_39 = arith.constant 2.100000e-02 : f32
    %67 = vector.broadcast %cst_39 : f32 to vector<8x32xf32>
    %68 = arith.mulf %20, %67 : vector<8x32xf32>
    %69 = arith.addf %66, %68 : vector<8x32xf32>
    %cst_40 = arith.constant 1.320000e-01 : f32
    %70 = vector.broadcast %cst_40 : f32 to vector<8x32xf32>
    %71 = arith.mulf %20, %70 : vector<8x32xf32>
    %72 = arith.addf %21, %71 : vector<8x32xf32>
    %73 = arith.mulf %69, %69 : vector<8x32xf32>
    %74 = arith.subf %73, %69 : vector<8x32xf32>
    %75 = arith.subf %74, %72 : vector<8x32xf32>
    %76 = arith.addf %75, %63 : vector<8x32xf32>
    %cst_41 = arith.constant -1.720000e-01 : f32
    %77 = vector.broadcast %cst_41 : f32 to vector<8x32xf32>
    %78 = arith.mulf %77, %69 : vector<8x32xf32>
    %cst_42 = arith.constant 5.290000e-01 : f32
    %79 = vector.broadcast %cst_42 : f32 to vector<8x32xf32>
    %80 = arith.mulf %79, %72 : vector<8x32xf32>
    %81 = arith.subf %78, %80 : vector<8x32xf32>
    %82 = arith.addf %69, %76 : vector<8x32xf32>
    %83 = arith.addf %72, %81 : vector<8x32xf32>
    %cst_43 = arith.constant 5.000000e-01 : f32
    %84 = vector.broadcast %cst_43 : f32 to vector<8x32xf32>
    %85 = arith.cmpf ogt, %82, %84 : vector<8x32xf32>
    %86 = arith.extui %85 : vector<8x32xi1> to vector<8x32xi32>
    %87 = arith.sitofp %86 : vector<8x32xi32> to vector<8x32xf32>
    %c0_44 = arith.constant 0 : index
    %c0_45 = arith.constant 0 : index
    %88 = vector.load %arg6[%c0_44, %c0_45] : memref<32x32xf32, #tpu.memory_space<vmem>>, vector<32x32xf32>
    %cst_46 = arith.constant dense<0.000000e+00> : vector<8x32xf32>
    %89 = tpu.matmul %87, %88, %cst_46 {dimension_numbers = #tpu.dot_dimension_numbers<[1], [0], [0], [1], [0, 0, 1, 1], [], []>} : vector<8x32xf32>, vector<32x32xf32>, vector<8x32xf32> -> vector<8x32xf32>
    %90 = arith.addf %89, %13 : vector<8x32xf32>
    %91 = arith.addf %90, %60 : vector<8x32xf32>
    %cst_47 = arith.constant 5.000000e-01 : f32
    %92 = vector.broadcast %cst_47 : f32 to vector<8x32xf32>
    %93 = arith.mulf %22, %92 : vector<8x32xf32>
    %94 = arith.addf %93, %91 : vector<8x32xf32>
    %cst_48 = arith.constant 1.000000e+00 : f32
    %95 = vector.broadcast %cst_48 : f32 to vector<8x32xf32>
    %96 = arith.subf %95, %24 : vector<8x32xf32>
    %97 = arith.mulf %23, %96 : vector<8x32xf32>
    %cst_49 = arith.constant 2.100000e-02 : f32
    %98 = vector.broadcast %cst_49 : f32 to vector<8x32xf32>
    %99 = arith.mulf %24, %98 : vector<8x32xf32>
    %100 = arith.addf %97, %99 : vector<8x32xf32>
    %cst_50 = arith.constant 1.320000e-01 : f32
    %101 = vector.broadcast %cst_50 : f32 to vector<8x32xf32>
    %102 = arith.mulf %24, %101 : vector<8x32xf32>
    %103 = arith.addf %25, %102 : vector<8x32xf32>
    %104 = arith.mulf %100, %100 : vector<8x32xf32>
    %105 = arith.subf %104, %100 : vector<8x32xf32>
    %106 = arith.subf %105, %103 : vector<8x32xf32>
    %107 = arith.addf %106, %94 : vector<8x32xf32>
    %cst_51 = arith.constant -1.720000e-01 : f32
    %108 = vector.broadcast %cst_51 : f32 to vector<8x32xf32>
    %109 = arith.mulf %108, %100 : vector<8x32xf32>
    %cst_52 = arith.constant 5.290000e-01 : f32
    %110 = vector.broadcast %cst_52 : f32 to vector<8x32xf32>
    %111 = arith.mulf %110, %103 : vector<8x32xf32>
    %112 = arith.subf %109, %111 : vector<8x32xf32>
    %113 = arith.addf %100, %107 : vector<8x32xf32>
    %114 = arith.addf %103, %112 : vector<8x32xf32>
    %cst_53 = arith.constant 5.000000e-01 : f32
    %115 = vector.broadcast %cst_53 : f32 to vector<8x32xf32>
    %116 = arith.cmpf ogt, %113, %115 : vector<8x32xf32>
    %117 = arith.extui %116 : vector<8x32xi1> to vector<8x32xi32>
    %118 = arith.sitofp %117 : vector<8x32xi32> to vector<8x32xf32>
    %119 = arith.addf %26, %118 : vector<8x32xf32>
    %c8 = arith.constant 8 : index
    %c0_54 = arith.constant 0 : index
    %120 = vector.load %arg9[%c8, %c0_54] : memref<64x64xf32, #tpu.memory_space<vmem>>, vector<8x64xf32>
    %cst_55 = arith.constant 5.000000e-01 : f32
    %121 = vector.broadcast %cst_55 : f32 to vector<8x64xf32>
    %122 = arith.mulf %30, %121 : vector<8x64xf32>
    %123 = arith.addf %122, %120 : vector<8x64xf32>
    %cst_56 = arith.constant 1.000000e+00 : f32
    %124 = vector.broadcast %cst_56 : f32 to vector<8x64xf32>
    %125 = arith.subf %124, %54 : vector<8x64xf32>
    %126 = arith.mulf %49, %125 : vector<8x64xf32>
    %cst_57 = arith.constant 2.100000e-02 : f32
    %127 = vector.broadcast %cst_57 : f32 to vector<8x64xf32>
    %128 = arith.mulf %54, %127 : vector<8x64xf32>
    %129 = arith.addf %126, %128 : vector<8x64xf32>
    %cst_58 = arith.constant 1.320000e-01 : f32
    %130 = vector.broadcast %cst_58 : f32 to vector<8x64xf32>
    %131 = arith.mulf %54, %130 : vector<8x64xf32>
    %132 = arith.addf %50, %131 : vector<8x64xf32>
    %133 = arith.mulf %129, %129 : vector<8x64xf32>
    %134 = arith.subf %133, %129 : vector<8x64xf32>
    %135 = arith.subf %134, %132 : vector<8x64xf32>
    %136 = arith.addf %135, %123 : vector<8x64xf32>
    %cst_59 = arith.constant -1.720000e-01 : f32
    %137 = vector.broadcast %cst_59 : f32 to vector<8x64xf32>
    %138 = arith.mulf %137, %129 : vector<8x64xf32>
    %cst_60 = arith.constant 5.290000e-01 : f32
    %139 = vector.broadcast %cst_60 : f32 to vector<8x64xf32>
    %140 = arith.mulf %139, %132 : vector<8x64xf32>
    %141 = arith.subf %138, %140 : vector<8x64xf32>
    %142 = arith.addf %129, %136 : vector<8x64xf32>
    %143 = arith.addf %132, %141 : vector<8x64xf32>
    %cst_61 = arith.constant 5.000000e-01 : f32
    %144 = vector.broadcast %cst_61 : f32 to vector<8x64xf32>
    %145 = arith.cmpf ogt, %142, %144 : vector<8x64xf32>
    %146 = arith.extui %145 : vector<8x64xi1> to vector<8x64xi32>
    %147 = arith.sitofp %146 : vector<8x64xi32> to vector<8x64xf32>
    %148 = tpu.concatenate %147, %118 in 1 : vector<8x64xf32>, vector<8x32xf32> -> vector<8x96xf32>
    %c0_62 = arith.constant 0 : index
    %c0_63 = arith.constant 0 : index
    %149 = vector.load %arg4[%c0_62, %c0_63] : memref<96x64xf32, #tpu.memory_space<vmem>>, vector<96x64xf32>
    %cst_64 = arith.constant dense<0.000000e+00> : vector<8x64xf32>
    %150 = tpu.matmul %148, %149, %cst_64 {dimension_numbers = #tpu.dot_dimension_numbers<[1], [0], [0], [1], [0, 0, 1, 1], [], []>} : vector<8x96xf32>, vector<96x64xf32>, vector<8x64xf32> -> vector<8x64xf32>
    %151 = arith.addf %150, %10 : vector<8x64xf32>
    %152 = vector.extract_strided_slice %151 {offsets = [0, 0], sizes = [8, 32], strides = [1, 1]} : vector<8x64xf32> to vector<8x32xf32>
    %153 = vector.extract_strided_slice %151 {offsets = [0, 32], sizes = [8, 32], strides = [1, 1]} : vector<8x64xf32> to vector<8x32xf32>
    %cst_65 = arith.constant 5.000000e-01 : f32
    %154 = vector.broadcast %cst_65 : f32 to vector<8x32xf32>
    %155 = arith.mulf %63, %154 : vector<8x32xf32>
    %156 = arith.addf %155, %152 : vector<8x32xf32>
    %cst_66 = arith.constant 1.000000e+00 : f32
    %157 = vector.broadcast %cst_66 : f32 to vector<8x32xf32>
    %158 = arith.subf %157, %87 : vector<8x32xf32>
    %159 = arith.mulf %82, %158 : vector<8x32xf32>
    %cst_67 = arith.constant 2.100000e-02 : f32
    %160 = vector.broadcast %cst_67 : f32 to vector<8x32xf32>
    %161 = arith.mulf %87, %160 : vector<8x32xf32>
    %162 = arith.addf %159, %161 : vector<8x32xf32>
    %cst_68 = arith.constant 1.320000e-01 : f32
    %163 = vector.broadcast %cst_68 : f32 to vector<8x32xf32>
    %164 = arith.mulf %87, %163 : vector<8x32xf32>
    %165 = arith.addf %83, %164 : vector<8x32xf32>
    %166 = arith.mulf %162, %162 : vector<8x32xf32>
    %167 = arith.subf %166, %162 : vector<8x32xf32>
    %168 = arith.subf %167, %165 : vector<8x32xf32>
    %169 = arith.addf %168, %156 : vector<8x32xf32>
    %cst_69 = arith.constant -1.720000e-01 : f32
    %170 = vector.broadcast %cst_69 : f32 to vector<8x32xf32>
    %171 = arith.mulf %170, %162 : vector<8x32xf32>
    %cst_70 = arith.constant 5.290000e-01 : f32
    %172 = vector.broadcast %cst_70 : f32 to vector<8x32xf32>
    %173 = arith.mulf %172, %165 : vector<8x32xf32>
    %174 = arith.subf %171, %173 : vector<8x32xf32>
    %175 = arith.addf %162, %169 : vector<8x32xf32>
    %176 = arith.addf %165, %174 : vector<8x32xf32>
    %cst_71 = arith.constant 5.000000e-01 : f32
    %177 = vector.broadcast %cst_71 : f32 to vector<8x32xf32>
    %178 = arith.cmpf ogt, %175, %177 : vector<8x32xf32>
    %179 = arith.extui %178 : vector<8x32xi1> to vector<8x32xi32>
    %180 = arith.sitofp %179 : vector<8x32xi32> to vector<8x32xf32>
    %c0_72 = arith.constant 0 : index
    %c0_73 = arith.constant 0 : index
    %181 = vector.load %arg6[%c0_72, %c0_73] : memref<32x32xf32, #tpu.memory_space<vmem>>, vector<32x32xf32>
    %cst_74 = arith.constant dense<0.000000e+00> : vector<8x32xf32>
    %182 = tpu.matmul %180, %181, %cst_74 {dimension_numbers = #tpu.dot_dimension_numbers<[1], [0], [0], [1], [0, 0, 1, 1], [], []>} : vector<8x32xf32>, vector<32x32xf32>, vector<8x32xf32> -> vector<8x32xf32>
    %183 = arith.addf %182, %13 : vector<8x32xf32>
    %184 = arith.addf %183, %153 : vector<8x32xf32>
    %cst_75 = arith.constant 5.000000e-01 : f32
    %185 = vector.broadcast %cst_75 : f32 to vector<8x32xf32>
    %186 = arith.mulf %94, %185 : vector<8x32xf32>
    %187 = arith.addf %186, %184 : vector<8x32xf32>
    %cst_76 = arith.constant 1.000000e+00 : f32
    %188 = vector.broadcast %cst_76 : f32 to vector<8x32xf32>
    %189 = arith.subf %188, %118 : vector<8x32xf32>
    %190 = arith.mulf %113, %189 : vector<8x32xf32>
    %cst_77 = arith.constant 2.100000e-02 : f32
    %191 = vector.broadcast %cst_77 : f32 to vector<8x32xf32>
    %192 = arith.mulf %118, %191 : vector<8x32xf32>
    %193 = arith.addf %190, %192 : vector<8x32xf32>
    %cst_78 = arith.constant 1.320000e-01 : f32
    %194 = vector.broadcast %cst_78 : f32 to vector<8x32xf32>
    %195 = arith.mulf %118, %194 : vector<8x32xf32>
    %196 = arith.addf %114, %195 : vector<8x32xf32>
    %197 = arith.mulf %193, %193 : vector<8x32xf32>
    %198 = arith.subf %197, %193 : vector<8x32xf32>
    %199 = arith.subf %198, %196 : vector<8x32xf32>
    %200 = arith.addf %199, %187 : vector<8x32xf32>
    %cst_79 = arith.constant -1.720000e-01 : f32
    %201 = vector.broadcast %cst_79 : f32 to vector<8x32xf32>
    %202 = arith.mulf %201, %193 : vector<8x32xf32>
    %cst_80 = arith.constant 5.290000e-01 : f32
    %203 = vector.broadcast %cst_80 : f32 to vector<8x32xf32>
    %204 = arith.mulf %203, %196 : vector<8x32xf32>
    %205 = arith.subf %202, %204 : vector<8x32xf32>
    %206 = arith.addf %193, %200 : vector<8x32xf32>
    %207 = arith.addf %196, %205 : vector<8x32xf32>
    %cst_81 = arith.constant 5.000000e-01 : f32
    %208 = vector.broadcast %cst_81 : f32 to vector<8x32xf32>
    %209 = arith.cmpf ogt, %206, %208 : vector<8x32xf32>
    %210 = arith.extui %209 : vector<8x32xi1> to vector<8x32xi32>
    %211 = arith.sitofp %210 : vector<8x32xi32> to vector<8x32xf32>
    %212 = arith.addf %119, %211 : vector<8x32xf32>
    %c16 = arith.constant 16 : index
    %c0_82 = arith.constant 0 : index
    %213 = vector.load %arg9[%c16, %c0_82] : memref<64x64xf32, #tpu.memory_space<vmem>>, vector<8x64xf32>
    %cst_83 = arith.constant 5.000000e-01 : f32
    %214 = vector.broadcast %cst_83 : f32 to vector<8x64xf32>
    %215 = arith.mulf %123, %214 : vector<8x64xf32>
    %216 = arith.addf %215, %213 : vector<8x64xf32>
    %cst_84 = arith.constant 1.000000e+00 : f32
    %217 = vector.broadcast %cst_84 : f32 to vector<8x64xf32>
    %218 = arith.subf %217, %147 : vector<8x64xf32>
    %219 = arith.mulf %142, %218 : vector<8x64xf32>
    %cst_85 = arith.constant 2.100000e-02 : f32
    %220 = vector.broadcast %cst_85 : f32 to vector<8x64xf32>
    %221 = arith.mulf %147, %220 : vector<8x64xf32>
    %222 = arith.addf %219, %221 : vector<8x64xf32>
    %cst_86 = arith.constant 1.320000e-01 : f32
    %223 = vector.broadcast %cst_86 : f32 to vector<8x64xf32>
    %224 = arith.mulf %147, %223 : vector<8x64xf32>
    %225 = arith.addf %143, %224 : vector<8x64xf32>
    %226 = arith.mulf %222, %222 : vector<8x64xf32>
    %227 = arith.subf %226, %222 : vector<8x64xf32>
    %228 = arith.subf %227, %225 : vector<8x64xf32>
    %229 = arith.addf %228, %216 : vector<8x64xf32>
    %cst_87 = arith.constant -1.720000e-01 : f32
    %230 = vector.broadcast %cst_87 : f32 to vector<8x64xf32>
    %231 = arith.mulf %230, %222 : vector<8x64xf32>
    %cst_88 = arith.constant 5.290000e-01 : f32
    %232 = vector.broadcast %cst_88 : f32 to vector<8x64xf32>
    %233 = arith.mulf %232, %225 : vector<8x64xf32>
    %234 = arith.subf %231, %233 : vector<8x64xf32>
    %235 = arith.addf %222, %229 : vector<8x64xf32>
    %236 = arith.addf %225, %234 : vector<8x64xf32>
    %cst_89 = arith.constant 5.000000e-01 : f32
    %237 = vector.broadcast %cst_89 : f32 to vector<8x64xf32>
    %238 = arith.cmpf ogt, %235, %237 : vector<8x64xf32>
    %239 = arith.extui %238 : vector<8x64xi1> to vector<8x64xi32>
    %240 = arith.sitofp %239 : vector<8x64xi32> to vector<8x64xf32>
    %241 = tpu.concatenate %240, %211 in 1 : vector<8x64xf32>, vector<8x32xf32> -> vector<8x96xf32>
    %c0_90 = arith.constant 0 : index
    %c0_91 = arith.constant 0 : index
    %242 = vector.load %arg4[%c0_90, %c0_91] : memref<96x64xf32, #tpu.memory_space<vmem>>, vector<96x64xf32>
    %cst_92 = arith.constant dense<0.000000e+00> : vector<8x64xf32>
    %243 = tpu.matmul %241, %242, %cst_92 {dimension_numbers = #tpu.dot_dimension_numbers<[1], [0], [0], [1], [0, 0, 1, 1], [], []>} : vector<8x96xf32>, vector<96x64xf32>, vector<8x64xf32> -> vector<8x64xf32>
    %244 = arith.addf %243, %10 : vector<8x64xf32>
    %245 = vector.extract_strided_slice %244 {offsets = [0, 0], sizes = [8, 32], strides = [1, 1]} : vector<8x64xf32> to vector<8x32xf32>
    %246 = vector.extract_strided_slice %244 {offsets = [0, 32], sizes = [8, 32], strides = [1, 1]} : vector<8x64xf32> to vector<8x32xf32>
    %cst_93 = arith.constant 5.000000e-01 : f32
    %247 = vector.broadcast %cst_93 : f32 to vector<8x32xf32>
    %248 = arith.mulf %156, %247 : vector<8x32xf32>
    %249 = arith.addf %248, %245 : vector<8x32xf32>
    %cst_94 = arith.constant 1.000000e+00 : f32
    %250 = vector.broadcast %cst_94 : f32 to vector<8x32xf32>
    %251 = arith.subf %250, %180 : vector<8x32xf32>
    %252 = arith.mulf %175, %251 : vector<8x32xf32>
    %cst_95 = arith.constant 2.100000e-02 : f32
    %253 = vector.broadcast %cst_95 : f32 to vector<8x32xf32>
    %254 = arith.mulf %180, %253 : vector<8x32xf32>
    %255 = arith.addf %252, %254 : vector<8x32xf32>
    %cst_96 = arith.constant 1.320000e-01 : f32
    %256 = vector.broadcast %cst_96 : f32 to vector<8x32xf32>
    %257 = arith.mulf %180, %256 : vector<8x32xf32>
    %258 = arith.addf %176, %257 : vector<8x32xf32>
    %259 = arith.mulf %255, %255 : vector<8x32xf32>
    %260 = arith.subf %259, %255 : vector<8x32xf32>
    %261 = arith.subf %260, %258 : vector<8x32xf32>
    %262 = arith.addf %261, %249 : vector<8x32xf32>
    %cst_97 = arith.constant -1.720000e-01 : f32
    %263 = vector.broadcast %cst_97 : f32 to vector<8x32xf32>
    %264 = arith.mulf %263, %255 : vector<8x32xf32>
    %cst_98 = arith.constant 5.290000e-01 : f32
    %265 = vector.broadcast %cst_98 : f32 to vector<8x32xf32>
    %266 = arith.mulf %265, %258 : vector<8x32xf32>
    %267 = arith.subf %264, %266 : vector<8x32xf32>
    %268 = arith.addf %255, %262 : vector<8x32xf32>
    %269 = arith.addf %258, %267 : vector<8x32xf32>
    %cst_99 = arith.constant 5.000000e-01 : f32
    %270 = vector.broadcast %cst_99 : f32 to vector<8x32xf32>
    %271 = arith.cmpf ogt, %268, %270 : vector<8x32xf32>
    %272 = arith.extui %271 : vector<8x32xi1> to vector<8x32xi32>
    %273 = arith.sitofp %272 : vector<8x32xi32> to vector<8x32xf32>
    %c0_100 = arith.constant 0 : index
    %c0_101 = arith.constant 0 : index
    %274 = vector.load %arg6[%c0_100, %c0_101] : memref<32x32xf32, #tpu.memory_space<vmem>>, vector<32x32xf32>
    %cst_102 = arith.constant dense<0.000000e+00> : vector<8x32xf32>
    %275 = tpu.matmul %273, %274, %cst_102 {dimension_numbers = #tpu.dot_dimension_numbers<[1], [0], [0], [1], [0, 0, 1, 1], [], []>} : vector<8x32xf32>, vector<32x32xf32>, vector<8x32xf32> -> vector<8x32xf32>
    %276 = arith.addf %275, %13 : vector<8x32xf32>
    %277 = arith.addf %276, %246 : vector<8x32xf32>
    %cst_103 = arith.constant 5.000000e-01 : f32
    %278 = vector.broadcast %cst_103 : f32 to vector<8x32xf32>
    %279 = arith.mulf %187, %278 : vector<8x32xf32>
    %280 = arith.addf %279, %277 : vector<8x32xf32>
    %cst_104 = arith.constant 1.000000e+00 : f32
    %281 = vector.broadcast %cst_104 : f32 to vector<8x32xf32>
    %282 = arith.subf %281, %211 : vector<8x32xf32>
    %283 = arith.mulf %206, %282 : vector<8x32xf32>
    %cst_105 = arith.constant 2.100000e-02 : f32
    %284 = vector.broadcast %cst_105 : f32 to vector<8x32xf32>
    %285 = arith.mulf %211, %284 : vector<8x32xf32>
    %286 = arith.addf %283, %285 : vector<8x32xf32>
    %cst_106 = arith.constant 1.320000e-01 : f32
    %287 = vector.broadcast %cst_106 : f32 to vector<8x32xf32>
    %288 = arith.mulf %211, %287 : vector<8x32xf32>
    %289 = arith.addf %207, %288 : vector<8x32xf32>
    %290 = arith.mulf %286, %286 : vector<8x32xf32>
    %291 = arith.subf %290, %286 : vector<8x32xf32>
    %292 = arith.subf %291, %289 : vector<8x32xf32>
    %293 = arith.addf %292, %280 : vector<8x32xf32>
    %cst_107 = arith.constant -1.720000e-01 : f32
    %294 = vector.broadcast %cst_107 : f32 to vector<8x32xf32>
    %295 = arith.mulf %294, %286 : vector<8x32xf32>
    %cst_108 = arith.constant 5.290000e-01 : f32
    %296 = vector.broadcast %cst_108 : f32 to vector<8x32xf32>
    %297 = arith.mulf %296, %289 : vector<8x32xf32>
    %298 = arith.subf %295, %297 : vector<8x32xf32>
    %299 = arith.addf %286, %293 : vector<8x32xf32>
    %300 = arith.addf %289, %298 : vector<8x32xf32>
    %cst_109 = arith.constant 5.000000e-01 : f32
    %301 = vector.broadcast %cst_109 : f32 to vector<8x32xf32>
    %302 = arith.cmpf ogt, %299, %301 : vector<8x32xf32>
    %303 = arith.extui %302 : vector<8x32xi1> to vector<8x32xi32>
    %304 = arith.sitofp %303 : vector<8x32xi32> to vector<8x32xf32>
    %305 = arith.addf %212, %304 : vector<8x32xf32>
    %c24 = arith.constant 24 : index
    %c0_110 = arith.constant 0 : index
    %306 = vector.load %arg9[%c24, %c0_110] : memref<64x64xf32, #tpu.memory_space<vmem>>, vector<8x64xf32>
    %cst_111 = arith.constant 5.000000e-01 : f32
    %307 = vector.broadcast %cst_111 : f32 to vector<8x64xf32>
    %308 = arith.mulf %216, %307 : vector<8x64xf32>
    %309 = arith.addf %308, %306 : vector<8x64xf32>
    %cst_112 = arith.constant 1.000000e+00 : f32
    %310 = vector.broadcast %cst_112 : f32 to vector<8x64xf32>
    %311 = arith.subf %310, %240 : vector<8x64xf32>
    %312 = arith.mulf %235, %311 : vector<8x64xf32>
    %cst_113 = arith.constant 2.100000e-02 : f32
    %313 = vector.broadcast %cst_113 : f32 to vector<8x64xf32>
    %314 = arith.mulf %240, %313 : vector<8x64xf32>
    %315 = arith.addf %312, %314 : vector<8x64xf32>
    %cst_114 = arith.constant 1.320000e-01 : f32
    %316 = vector.broadcast %cst_114 : f32 to vector<8x64xf32>
    %317 = arith.mulf %240, %316 : vector<8x64xf32>
    %318 = arith.addf %236, %317 : vector<8x64xf32>
    %319 = arith.mulf %315, %315 : vector<8x64xf32>
    %320 = arith.subf %319, %315 : vector<8x64xf32>
    %321 = arith.subf %320, %318 : vector<8x64xf32>
    %322 = arith.addf %321, %309 : vector<8x64xf32>
    %cst_115 = arith.constant -1.720000e-01 : f32
    %323 = vector.broadcast %cst_115 : f32 to vector<8x64xf32>
    %324 = arith.mulf %323, %315 : vector<8x64xf32>
    %cst_116 = arith.constant 5.290000e-01 : f32
    %325 = vector.broadcast %cst_116 : f32 to vector<8x64xf32>
    %326 = arith.mulf %325, %318 : vector<8x64xf32>
    %327 = arith.subf %324, %326 : vector<8x64xf32>
    %328 = arith.addf %315, %322 : vector<8x64xf32>
    %329 = arith.addf %318, %327 : vector<8x64xf32>
    %cst_117 = arith.constant 5.000000e-01 : f32
    %330 = vector.broadcast %cst_117 : f32 to vector<8x64xf32>
    %331 = arith.cmpf ogt, %328, %330 : vector<8x64xf32>
    %332 = arith.extui %331 : vector<8x64xi1> to vector<8x64xi32>
    %333 = arith.sitofp %332 : vector<8x64xi32> to vector<8x64xf32>
    %334 = tpu.concatenate %333, %304 in 1 : vector<8x64xf32>, vector<8x32xf32> -> vector<8x96xf32>
    %c0_118 = arith.constant 0 : index
    %c0_119 = arith.constant 0 : index
    %335 = vector.load %arg4[%c0_118, %c0_119] : memref<96x64xf32, #tpu.memory_space<vmem>>, vector<96x64xf32>
    %cst_120 = arith.constant dense<0.000000e+00> : vector<8x64xf32>
    %336 = tpu.matmul %334, %335, %cst_120 {dimension_numbers = #tpu.dot_dimension_numbers<[1], [0], [0], [1], [0, 0, 1, 1], [], []>} : vector<8x96xf32>, vector<96x64xf32>, vector<8x64xf32> -> vector<8x64xf32>
    %337 = arith.addf %336, %10 : vector<8x64xf32>
    %338 = vector.extract_strided_slice %337 {offsets = [0, 0], sizes = [8, 32], strides = [1, 1]} : vector<8x64xf32> to vector<8x32xf32>
    %339 = vector.extract_strided_slice %337 {offsets = [0, 32], sizes = [8, 32], strides = [1, 1]} : vector<8x64xf32> to vector<8x32xf32>
    %cst_121 = arith.constant 5.000000e-01 : f32
    %340 = vector.broadcast %cst_121 : f32 to vector<8x32xf32>
    %341 = arith.mulf %249, %340 : vector<8x32xf32>
    %342 = arith.addf %341, %338 : vector<8x32xf32>
    %cst_122 = arith.constant 1.000000e+00 : f32
    %343 = vector.broadcast %cst_122 : f32 to vector<8x32xf32>
    %344 = arith.subf %343, %273 : vector<8x32xf32>
    %345 = arith.mulf %268, %344 : vector<8x32xf32>
    %cst_123 = arith.constant 2.100000e-02 : f32
    %346 = vector.broadcast %cst_123 : f32 to vector<8x32xf32>
    %347 = arith.mulf %273, %346 : vector<8x32xf32>
    %348 = arith.addf %345, %347 : vector<8x32xf32>
    %cst_124 = arith.constant 1.320000e-01 : f32
    %349 = vector.broadcast %cst_124 : f32 to vector<8x32xf32>
    %350 = arith.mulf %273, %349 : vector<8x32xf32>
    %351 = arith.addf %269, %350 : vector<8x32xf32>
    %352 = arith.mulf %348, %348 : vector<8x32xf32>
    %353 = arith.subf %352, %348 : vector<8x32xf32>
    %354 = arith.subf %353, %351 : vector<8x32xf32>
    %355 = arith.addf %354, %342 : vector<8x32xf32>
    %cst_125 = arith.constant -1.720000e-01 : f32
    %356 = vector.broadcast %cst_125 : f32 to vector<8x32xf32>
    %357 = arith.mulf %356, %348 : vector<8x32xf32>
    %cst_126 = arith.constant 5.290000e-01 : f32
    %358 = vector.broadcast %cst_126 : f32 to vector<8x32xf32>
    %359 = arith.mulf %358, %351 : vector<8x32xf32>
    %360 = arith.subf %357, %359 : vector<8x32xf32>
    %361 = arith.addf %348, %355 : vector<8x32xf32>
    %362 = arith.addf %351, %360 : vector<8x32xf32>
    %cst_127 = arith.constant 5.000000e-01 : f32
    %363 = vector.broadcast %cst_127 : f32 to vector<8x32xf32>
    %364 = arith.cmpf ogt, %361, %363 : vector<8x32xf32>
    %365 = arith.extui %364 : vector<8x32xi1> to vector<8x32xi32>
    %366 = arith.sitofp %365 : vector<8x32xi32> to vector<8x32xf32>
    %c0_128 = arith.constant 0 : index
    %c0_129 = arith.constant 0 : index
    %367 = vector.load %arg6[%c0_128, %c0_129] : memref<32x32xf32, #tpu.memory_space<vmem>>, vector<32x32xf32>
    %cst_130 = arith.constant dense<0.000000e+00> : vector<8x32xf32>
    %368 = tpu.matmul %366, %367, %cst_130 {dimension_numbers = #tpu.dot_dimension_numbers<[1], [0], [0], [1], [0, 0, 1, 1], [], []>} : vector<8x32xf32>, vector<32x32xf32>, vector<8x32xf32> -> vector<8x32xf32>
    %369 = arith.addf %368, %13 : vector<8x32xf32>
    %370 = arith.addf %369, %339 : vector<8x32xf32>
    %cst_131 = arith.constant 5.000000e-01 : f32
    %371 = vector.broadcast %cst_131 : f32 to vector<8x32xf32>
    %372 = arith.mulf %280, %371 : vector<8x32xf32>
    %373 = arith.addf %372, %370 : vector<8x32xf32>
    %cst_132 = arith.constant 1.000000e+00 : f32
    %374 = vector.broadcast %cst_132 : f32 to vector<8x32xf32>
    %375 = arith.subf %374, %304 : vector<8x32xf32>
    %376 = arith.mulf %299, %375 : vector<8x32xf32>
    %cst_133 = arith.constant 2.100000e-02 : f32
    %377 = vector.broadcast %cst_133 : f32 to vector<8x32xf32>
    %378 = arith.mulf %304, %377 : vector<8x32xf32>
    %379 = arith.addf %376, %378 : vector<8x32xf32>
    %cst_134 = arith.constant 1.320000e-01 : f32
    %380 = vector.broadcast %cst_134 : f32 to vector<8x32xf32>
    %381 = arith.mulf %304, %380 : vector<8x32xf32>
    %382 = arith.addf %300, %381 : vector<8x32xf32>
    %383 = arith.mulf %379, %379 : vector<8x32xf32>
    %384 = arith.subf %383, %379 : vector<8x32xf32>
    %385 = arith.subf %384, %382 : vector<8x32xf32>
    %386 = arith.addf %385, %373 : vector<8x32xf32>
    %cst_135 = arith.constant -1.720000e-01 : f32
    %387 = vector.broadcast %cst_135 : f32 to vector<8x32xf32>
    %388 = arith.mulf %387, %379 : vector<8x32xf32>
    %cst_136 = arith.constant 5.290000e-01 : f32
    %389 = vector.broadcast %cst_136 : f32 to vector<8x32xf32>
    %390 = arith.mulf %389, %382 : vector<8x32xf32>
    %391 = arith.subf %388, %390 : vector<8x32xf32>
    %392 = arith.addf %379, %386 : vector<8x32xf32>
    %393 = arith.addf %382, %391 : vector<8x32xf32>
    %cst_137 = arith.constant 5.000000e-01 : f32
    %394 = vector.broadcast %cst_137 : f32 to vector<8x32xf32>
    %395 = arith.cmpf ogt, %392, %394 : vector<8x32xf32>
    %396 = arith.extui %395 : vector<8x32xi1> to vector<8x32xi32>
    %397 = arith.sitofp %396 : vector<8x32xi32> to vector<8x32xf32>
    %398 = arith.addf %305, %397 : vector<8x32xf32>
    %c32 = arith.constant 32 : index
    %c0_138 = arith.constant 0 : index
    %399 = vector.load %arg9[%c32, %c0_138] : memref<64x64xf32, #tpu.memory_space<vmem>>, vector<8x64xf32>
    %cst_139 = arith.constant 5.000000e-01 : f32
    %400 = vector.broadcast %cst_139 : f32 to vector<8x64xf32>
    %401 = arith.mulf %309, %400 : vector<8x64xf32>
    %402 = arith.addf %401, %399 : vector<8x64xf32>
    %cst_140 = arith.constant 1.000000e+00 : f32
    %403 = vector.broadcast %cst_140 : f32 to vector<8x64xf32>
    %404 = arith.subf %403, %333 : vector<8x64xf32>
    %405 = arith.mulf %328, %404 : vector<8x64xf32>
    %cst_141 = arith.constant 2.100000e-02 : f32
    %406 = vector.broadcast %cst_141 : f32 to vector<8x64xf32>
    %407 = arith.mulf %333, %406 : vector<8x64xf32>
    %408 = arith.addf %405, %407 : vector<8x64xf32>
    %cst_142 = arith.constant 1.320000e-01 : f32
    %409 = vector.broadcast %cst_142 : f32 to vector<8x64xf32>
    %410 = arith.mulf %333, %409 : vector<8x64xf32>
    %411 = arith.addf %329, %410 : vector<8x64xf32>
    %412 = arith.mulf %408, %408 : vector<8x64xf32>
    %413 = arith.subf %412, %408 : vector<8x64xf32>
    %414 = arith.subf %413, %411 : vector<8x64xf32>
    %415 = arith.addf %414, %402 : vector<8x64xf32>
    %cst_143 = arith.constant -1.720000e-01 : f32
    %416 = vector.broadcast %cst_143 : f32 to vector<8x64xf32>
    %417 = arith.mulf %416, %408 : vector<8x64xf32>
    %cst_144 = arith.constant 5.290000e-01 : f32
    %418 = vector.broadcast %cst_144 : f32 to vector<8x64xf32>
    %419 = arith.mulf %418, %411 : vector<8x64xf32>
    %420 = arith.subf %417, %419 : vector<8x64xf32>
    %421 = arith.addf %408, %415 : vector<8x64xf32>
    %422 = arith.addf %411, %420 : vector<8x64xf32>
    %cst_145 = arith.constant 5.000000e-01 : f32
    %423 = vector.broadcast %cst_145 : f32 to vector<8x64xf32>
    %424 = arith.cmpf ogt, %421, %423 : vector<8x64xf32>
    %425 = arith.extui %424 : vector<8x64xi1> to vector<8x64xi32>
    %426 = arith.sitofp %425 : vector<8x64xi32> to vector<8x64xf32>
    %427 = tpu.concatenate %426, %397 in 1 : vector<8x64xf32>, vector<8x32xf32> -> vector<8x96xf32>
    %c0_146 = arith.constant 0 : index
    %c0_147 = arith.constant 0 : index
    %428 = vector.load %arg4[%c0_146, %c0_147] : memref<96x64xf32, #tpu.memory_space<vmem>>, vector<96x64xf32>
    %cst_148 = arith.constant dense<0.000000e+00> : vector<8x64xf32>
    %429 = tpu.matmul %427, %428, %cst_148 {dimension_numbers = #tpu.dot_dimension_numbers<[1], [0], [0], [1], [0, 0, 1, 1], [], []>} : vector<8x96xf32>, vector<96x64xf32>, vector<8x64xf32> -> vector<8x64xf32>
    %430 = arith.addf %429, %10 : vector<8x64xf32>
    %431 = vector.extract_strided_slice %430 {offsets = [0, 0], sizes = [8, 32], strides = [1, 1]} : vector<8x64xf32> to vector<8x32xf32>
    %432 = vector.extract_strided_slice %430 {offsets = [0, 32], sizes = [8, 32], strides = [1, 1]} : vector<8x64xf32> to vector<8x32xf32>
    %cst_149 = arith.constant 5.000000e-01 : f32
    %433 = vector.broadcast %cst_149 : f32 to vector<8x32xf32>
    %434 = arith.mulf %342, %433 : vector<8x32xf32>
    %435 = arith.addf %434, %431 : vector<8x32xf32>
    %cst_150 = arith.constant 1.000000e+00 : f32
    %436 = vector.broadcast %cst_150 : f32 to vector<8x32xf32>
    %437 = arith.subf %436, %366 : vector<8x32xf32>
    %438 = arith.mulf %361, %437 : vector<8x32xf32>
    %cst_151 = arith.constant 2.100000e-02 : f32
    %439 = vector.broadcast %cst_151 : f32 to vector<8x32xf32>
    %440 = arith.mulf %366, %439 : vector<8x32xf32>
    %441 = arith.addf %438, %440 : vector<8x32xf32>
    %cst_152 = arith.constant 1.320000e-01 : f32
    %442 = vector.broadcast %cst_152 : f32 to vector<8x32xf32>
    %443 = arith.mulf %366, %442 : vector<8x32xf32>
    %444 = arith.addf %362, %443 : vector<8x32xf32>
    %445 = arith.mulf %441, %441 : vector<8x32xf32>
    %446 = arith.subf %445, %441 : vector<8x32xf32>
    %447 = arith.subf %446, %444 : vector<8x32xf32>
    %448 = arith.addf %447, %435 : vector<8x32xf32>
    %cst_153 = arith.constant -1.720000e-01 : f32
    %449 = vector.broadcast %cst_153 : f32 to vector<8x32xf32>
    %450 = arith.mulf %449, %441 : vector<8x32xf32>
    %cst_154 = arith.constant 5.290000e-01 : f32
    %451 = vector.broadcast %cst_154 : f32 to vector<8x32xf32>
    %452 = arith.mulf %451, %444 : vector<8x32xf32>
    %453 = arith.subf %450, %452 : vector<8x32xf32>
    %454 = arith.addf %441, %448 : vector<8x32xf32>
    %455 = arith.addf %444, %453 : vector<8x32xf32>
    %cst_155 = arith.constant 5.000000e-01 : f32
    %456 = vector.broadcast %cst_155 : f32 to vector<8x32xf32>
    %457 = arith.cmpf ogt, %454, %456 : vector<8x32xf32>
    %458 = arith.extui %457 : vector<8x32xi1> to vector<8x32xi32>
    %459 = arith.sitofp %458 : vector<8x32xi32> to vector<8x32xf32>
    %c0_156 = arith.constant 0 : index
    %c0_157 = arith.constant 0 : index
    %460 = vector.load %arg6[%c0_156, %c0_157] : memref<32x32xf32, #tpu.memory_space<vmem>>, vector<32x32xf32>
    %cst_158 = arith.constant dense<0.000000e+00> : vector<8x32xf32>
    %461 = tpu.matmul %459, %460, %cst_158 {dimension_numbers = #tpu.dot_dimension_numbers<[1], [0], [0], [1], [0, 0, 1, 1], [], []>} : vector<8x32xf32>, vector<32x32xf32>, vector<8x32xf32> -> vector<8x32xf32>
    %462 = arith.addf %461, %13 : vector<8x32xf32>
    %463 = arith.addf %462, %432 : vector<8x32xf32>
    %cst_159 = arith.constant 5.000000e-01 : f32
    %464 = vector.broadcast %cst_159 : f32 to vector<8x32xf32>
    %465 = arith.mulf %373, %464 : vector<8x32xf32>
    %466 = arith.addf %465, %463 : vector<8x32xf32>
    %cst_160 = arith.constant 1.000000e+00 : f32
    %467 = vector.broadcast %cst_160 : f32 to vector<8x32xf32>
    %468 = arith.subf %467, %397 : vector<8x32xf32>
    %469 = arith.mulf %392, %468 : vector<8x32xf32>
    %cst_161 = arith.constant 2.100000e-02 : f32
    %470 = vector.broadcast %cst_161 : f32 to vector<8x32xf32>
    %471 = arith.mulf %397, %470 : vector<8x32xf32>
    %472 = arith.addf %469, %471 : vector<8x32xf32>
    %cst_162 = arith.constant 1.320000e-01 : f32
    %473 = vector.broadcast %cst_162 : f32 to vector<8x32xf32>
    %474 = arith.mulf %397, %473 : vector<8x32xf32>
    %475 = arith.addf %393, %474 : vector<8x32xf32>
    %476 = arith.mulf %472, %472 : vector<8x32xf32>
    %477 = arith.subf %476, %472 : vector<8x32xf32>
    %478 = arith.subf %477, %475 : vector<8x32xf32>
    %479 = arith.addf %478, %466 : vector<8x32xf32>
    %cst_163 = arith.constant -1.720000e-01 : f32
    %480 = vector.broadcast %cst_163 : f32 to vector<8x32xf32>
    %481 = arith.mulf %480, %472 : vector<8x32xf32>
    %cst_164 = arith.constant 5.290000e-01 : f32
    %482 = vector.broadcast %cst_164 : f32 to vector<8x32xf32>
    %483 = arith.mulf %482, %475 : vector<8x32xf32>
    %484 = arith.subf %481, %483 : vector<8x32xf32>
    %485 = arith.addf %472, %479 : vector<8x32xf32>
    %486 = arith.addf %475, %484 : vector<8x32xf32>
    %cst_165 = arith.constant 5.000000e-01 : f32
    %487 = vector.broadcast %cst_165 : f32 to vector<8x32xf32>
    %488 = arith.cmpf ogt, %485, %487 : vector<8x32xf32>
    %489 = arith.extui %488 : vector<8x32xi1> to vector<8x32xi32>
    %490 = arith.sitofp %489 : vector<8x32xi32> to vector<8x32xf32>
    %491 = arith.addf %398, %490 : vector<8x32xf32>
    %c40 = arith.constant 40 : index
    %c0_166 = arith.constant 0 : index
    %492 = vector.load %arg9[%c40, %c0_166] : memref<64x64xf32, #tpu.memory_space<vmem>>, vector<8x64xf32>
    %cst_167 = arith.constant 5.000000e-01 : f32
    %493 = vector.broadcast %cst_167 : f32 to vector<8x64xf32>
    %494 = arith.mulf %402, %493 : vector<8x64xf32>
    %495 = arith.addf %494, %492 : vector<8x64xf32>
    %cst_168 = arith.constant 1.000000e+00 : f32
    %496 = vector.broadcast %cst_168 : f32 to vector<8x64xf32>
    %497 = arith.subf %496, %426 : vector<8x64xf32>
    %498 = arith.mulf %421, %497 : vector<8x64xf32>
    %cst_169 = arith.constant 2.100000e-02 : f32
    %499 = vector.broadcast %cst_169 : f32 to vector<8x64xf32>
    %500 = arith.mulf %426, %499 : vector<8x64xf32>
    %501 = arith.addf %498, %500 : vector<8x64xf32>
    %cst_170 = arith.constant 1.320000e-01 : f32
    %502 = vector.broadcast %cst_170 : f32 to vector<8x64xf32>
    %503 = arith.mulf %426, %502 : vector<8x64xf32>
    %504 = arith.addf %422, %503 : vector<8x64xf32>
    %505 = arith.mulf %501, %501 : vector<8x64xf32>
    %506 = arith.subf %505, %501 : vector<8x64xf32>
    %507 = arith.subf %506, %504 : vector<8x64xf32>
    %508 = arith.addf %507, %495 : vector<8x64xf32>
    %cst_171 = arith.constant -1.720000e-01 : f32
    %509 = vector.broadcast %cst_171 : f32 to vector<8x64xf32>
    %510 = arith.mulf %509, %501 : vector<8x64xf32>
    %cst_172 = arith.constant 5.290000e-01 : f32
    %511 = vector.broadcast %cst_172 : f32 to vector<8x64xf32>
    %512 = arith.mulf %511, %504 : vector<8x64xf32>
    %513 = arith.subf %510, %512 : vector<8x64xf32>
    %514 = arith.addf %501, %508 : vector<8x64xf32>
    %515 = arith.addf %504, %513 : vector<8x64xf32>
    %cst_173 = arith.constant 5.000000e-01 : f32
    %516 = vector.broadcast %cst_173 : f32 to vector<8x64xf32>
    %517 = arith.cmpf ogt, %514, %516 : vector<8x64xf32>
    %518 = arith.extui %517 : vector<8x64xi1> to vector<8x64xi32>
    %519 = arith.sitofp %518 : vector<8x64xi32> to vector<8x64xf32>
    %520 = tpu.concatenate %519, %490 in 1 : vector<8x64xf32>, vector<8x32xf32> -> vector<8x96xf32>
    %c0_174 = arith.constant 0 : index
    %c0_175 = arith.constant 0 : index
    %521 = vector.load %arg4[%c0_174, %c0_175] : memref<96x64xf32, #tpu.memory_space<vmem>>, vector<96x64xf32>
    %cst_176 = arith.constant dense<0.000000e+00> : vector<8x64xf32>
    %522 = tpu.matmul %520, %521, %cst_176 {dimension_numbers = #tpu.dot_dimension_numbers<[1], [0], [0], [1], [0, 0, 1, 1], [], []>} : vector<8x96xf32>, vector<96x64xf32>, vector<8x64xf32> -> vector<8x64xf32>
    %523 = arith.addf %522, %10 : vector<8x64xf32>
    %524 = vector.extract_strided_slice %523 {offsets = [0, 0], sizes = [8, 32], strides = [1, 1]} : vector<8x64xf32> to vector<8x32xf32>
    %525 = vector.extract_strided_slice %523 {offsets = [0, 32], sizes = [8, 32], strides = [1, 1]} : vector<8x64xf32> to vector<8x32xf32>
    %cst_177 = arith.constant 5.000000e-01 : f32
    %526 = vector.broadcast %cst_177 : f32 to vector<8x32xf32>
    %527 = arith.mulf %435, %526 : vector<8x32xf32>
    %528 = arith.addf %527, %524 : vector<8x32xf32>
    %cst_178 = arith.constant 1.000000e+00 : f32
    %529 = vector.broadcast %cst_178 : f32 to vector<8x32xf32>
    %530 = arith.subf %529, %459 : vector<8x32xf32>
    %531 = arith.mulf %454, %530 : vector<8x32xf32>
    %cst_179 = arith.constant 2.100000e-02 : f32
    %532 = vector.broadcast %cst_179 : f32 to vector<8x32xf32>
    %533 = arith.mulf %459, %532 : vector<8x32xf32>
    %534 = arith.addf %531, %533 : vector<8x32xf32>
    %cst_180 = arith.constant 1.320000e-01 : f32
    %535 = vector.broadcast %cst_180 : f32 to vector<8x32xf32>
    %536 = arith.mulf %459, %535 : vector<8x32xf32>
    %537 = arith.addf %455, %536 : vector<8x32xf32>
    %538 = arith.mulf %534, %534 : vector<8x32xf32>
    %539 = arith.subf %538, %534 : vector<8x32xf32>
    %540 = arith.subf %539, %537 : vector<8x32xf32>
    %541 = arith.addf %540, %528 : vector<8x32xf32>
    %cst_181 = arith.constant -1.720000e-01 : f32
    %542 = vector.broadcast %cst_181 : f32 to vector<8x32xf32>
    %543 = arith.mulf %542, %534 : vector<8x32xf32>
    %cst_182 = arith.constant 5.290000e-01 : f32
    %544 = vector.broadcast %cst_182 : f32 to vector<8x32xf32>
    %545 = arith.mulf %544, %537 : vector<8x32xf32>
    %546 = arith.subf %543, %545 : vector<8x32xf32>
    %547 = arith.addf %534, %541 : vector<8x32xf32>
    %548 = arith.addf %537, %546 : vector<8x32xf32>
    %cst_183 = arith.constant 5.000000e-01 : f32
    %549 = vector.broadcast %cst_183 : f32 to vector<8x32xf32>
    %550 = arith.cmpf ogt, %547, %549 : vector<8x32xf32>
    %551 = arith.extui %550 : vector<8x32xi1> to vector<8x32xi32>
    %552 = arith.sitofp %551 : vector<8x32xi32> to vector<8x32xf32>
    %c0_184 = arith.constant 0 : index
    %c0_185 = arith.constant 0 : index
    %553 = vector.load %arg6[%c0_184, %c0_185] : memref<32x32xf32, #tpu.memory_space<vmem>>, vector<32x32xf32>
    %cst_186 = arith.constant dense<0.000000e+00> : vector<8x32xf32>
    %554 = tpu.matmul %552, %553, %cst_186 {dimension_numbers = #tpu.dot_dimension_numbers<[1], [0], [0], [1], [0, 0, 1, 1], [], []>} : vector<8x32xf32>, vector<32x32xf32>, vector<8x32xf32> -> vector<8x32xf32>
    %555 = arith.addf %554, %13 : vector<8x32xf32>
    %556 = arith.addf %555, %525 : vector<8x32xf32>
    %cst_187 = arith.constant 5.000000e-01 : f32
    %557 = vector.broadcast %cst_187 : f32 to vector<8x32xf32>
    %558 = arith.mulf %466, %557 : vector<8x32xf32>
    %559 = arith.addf %558, %556 : vector<8x32xf32>
    %cst_188 = arith.constant 1.000000e+00 : f32
    %560 = vector.broadcast %cst_188 : f32 to vector<8x32xf32>
    %561 = arith.subf %560, %490 : vector<8x32xf32>
    %562 = arith.mulf %485, %561 : vector<8x32xf32>
    %cst_189 = arith.constant 2.100000e-02 : f32
    %563 = vector.broadcast %cst_189 : f32 to vector<8x32xf32>
    %564 = arith.mulf %490, %563 : vector<8x32xf32>
    %565 = arith.addf %562, %564 : vector<8x32xf32>
    %cst_190 = arith.constant 1.320000e-01 : f32
    %566 = vector.broadcast %cst_190 : f32 to vector<8x32xf32>
    %567 = arith.mulf %490, %566 : vector<8x32xf32>
    %568 = arith.addf %486, %567 : vector<8x32xf32>
    %569 = arith.mulf %565, %565 : vector<8x32xf32>
    %570 = arith.subf %569, %565 : vector<8x32xf32>
    %571 = arith.subf %570, %568 : vector<8x32xf32>
    %572 = arith.addf %571, %559 : vector<8x32xf32>
    %cst_191 = arith.constant -1.720000e-01 : f32
    %573 = vector.broadcast %cst_191 : f32 to vector<8x32xf32>
    %574 = arith.mulf %573, %565 : vector<8x32xf32>
    %cst_192 = arith.constant 5.290000e-01 : f32
    %575 = vector.broadcast %cst_192 : f32 to vector<8x32xf32>
    %576 = arith.mulf %575, %568 : vector<8x32xf32>
    %577 = arith.subf %574, %576 : vector<8x32xf32>
    %578 = arith.addf %565, %572 : vector<8x32xf32>
    %579 = arith.addf %568, %577 : vector<8x32xf32>
    %cst_193 = arith.constant 5.000000e-01 : f32
    %580 = vector.broadcast %cst_193 : f32 to vector<8x32xf32>
    %581 = arith.cmpf ogt, %578, %580 : vector<8x32xf32>
    %582 = arith.extui %581 : vector<8x32xi1> to vector<8x32xi32>
    %583 = arith.sitofp %582 : vector<8x32xi32> to vector<8x32xf32>
    %584 = arith.addf %491, %583 : vector<8x32xf32>
    %c48 = arith.constant 48 : index
    %c0_194 = arith.constant 0 : index
    %585 = vector.load %arg9[%c48, %c0_194] : memref<64x64xf32, #tpu.memory_space<vmem>>, vector<8x64xf32>
    %cst_195 = arith.constant 5.000000e-01 : f32
    %586 = vector.broadcast %cst_195 : f32 to vector<8x64xf32>
    %587 = arith.mulf %495, %586 : vector<8x64xf32>
    %588 = arith.addf %587, %585 : vector<8x64xf32>
    %cst_196 = arith.constant 1.000000e+00 : f32
    %589 = vector.broadcast %cst_196 : f32 to vector<8x64xf32>
    %590 = arith.subf %589, %519 : vector<8x64xf32>
    %591 = arith.mulf %514, %590 : vector<8x64xf32>
    %cst_197 = arith.constant 2.100000e-02 : f32
    %592 = vector.broadcast %cst_197 : f32 to vector<8x64xf32>
    %593 = arith.mulf %519, %592 : vector<8x64xf32>
    %594 = arith.addf %591, %593 : vector<8x64xf32>
    %cst_198 = arith.constant 1.320000e-01 : f32
    %595 = vector.broadcast %cst_198 : f32 to vector<8x64xf32>
    %596 = arith.mulf %519, %595 : vector<8x64xf32>
    %597 = arith.addf %515, %596 : vector<8x64xf32>
    %598 = arith.mulf %594, %594 : vector<8x64xf32>
    %599 = arith.subf %598, %594 : vector<8x64xf32>
    %600 = arith.subf %599, %597 : vector<8x64xf32>
    %601 = arith.addf %600, %588 : vector<8x64xf32>
    %cst_199 = arith.constant -1.720000e-01 : f32
    %602 = vector.broadcast %cst_199 : f32 to vector<8x64xf32>
    %603 = arith.mulf %602, %594 : vector<8x64xf32>
    %cst_200 = arith.constant 5.290000e-01 : f32
    %604 = vector.broadcast %cst_200 : f32 to vector<8x64xf32>
    %605 = arith.mulf %604, %597 : vector<8x64xf32>
    %606 = arith.subf %603, %605 : vector<8x64xf32>
    %607 = arith.addf %594, %601 : vector<8x64xf32>
    %608 = arith.addf %597, %606 : vector<8x64xf32>
    %cst_201 = arith.constant 5.000000e-01 : f32
    %609 = vector.broadcast %cst_201 : f32 to vector<8x64xf32>
    %610 = arith.cmpf ogt, %607, %609 : vector<8x64xf32>
    %611 = arith.extui %610 : vector<8x64xi1> to vector<8x64xi32>
    %612 = arith.sitofp %611 : vector<8x64xi32> to vector<8x64xf32>
    %613 = tpu.concatenate %612, %583 in 1 : vector<8x64xf32>, vector<8x32xf32> -> vector<8x96xf32>
    %c0_202 = arith.constant 0 : index
    %c0_203 = arith.constant 0 : index
    %614 = vector.load %arg4[%c0_202, %c0_203] : memref<96x64xf32, #tpu.memory_space<vmem>>, vector<96x64xf32>
    %cst_204 = arith.constant dense<0.000000e+00> : vector<8x64xf32>
    %615 = tpu.matmul %613, %614, %cst_204 {dimension_numbers = #tpu.dot_dimension_numbers<[1], [0], [0], [1], [0, 0, 1, 1], [], []>} : vector<8x96xf32>, vector<96x64xf32>, vector<8x64xf32> -> vector<8x64xf32>
    %616 = arith.addf %615, %10 : vector<8x64xf32>
    %617 = vector.extract_strided_slice %616 {offsets = [0, 0], sizes = [8, 32], strides = [1, 1]} : vector<8x64xf32> to vector<8x32xf32>
    %618 = vector.extract_strided_slice %616 {offsets = [0, 32], sizes = [8, 32], strides = [1, 1]} : vector<8x64xf32> to vector<8x32xf32>
    %cst_205 = arith.constant 5.000000e-01 : f32
    %619 = vector.broadcast %cst_205 : f32 to vector<8x32xf32>
    %620 = arith.mulf %528, %619 : vector<8x32xf32>
    %621 = arith.addf %620, %617 : vector<8x32xf32>
    %cst_206 = arith.constant 1.000000e+00 : f32
    %622 = vector.broadcast %cst_206 : f32 to vector<8x32xf32>
    %623 = arith.subf %622, %552 : vector<8x32xf32>
    %624 = arith.mulf %547, %623 : vector<8x32xf32>
    %cst_207 = arith.constant 2.100000e-02 : f32
    %625 = vector.broadcast %cst_207 : f32 to vector<8x32xf32>
    %626 = arith.mulf %552, %625 : vector<8x32xf32>
    %627 = arith.addf %624, %626 : vector<8x32xf32>
    %cst_208 = arith.constant 1.320000e-01 : f32
    %628 = vector.broadcast %cst_208 : f32 to vector<8x32xf32>
    %629 = arith.mulf %552, %628 : vector<8x32xf32>
    %630 = arith.addf %548, %629 : vector<8x32xf32>
    %631 = arith.mulf %627, %627 : vector<8x32xf32>
    %632 = arith.subf %631, %627 : vector<8x32xf32>
    %633 = arith.subf %632, %630 : vector<8x32xf32>
    %634 = arith.addf %633, %621 : vector<8x32xf32>
    %cst_209 = arith.constant -1.720000e-01 : f32
    %635 = vector.broadcast %cst_209 : f32 to vector<8x32xf32>
    %636 = arith.mulf %635, %627 : vector<8x32xf32>
    %cst_210 = arith.constant 5.290000e-01 : f32
    %637 = vector.broadcast %cst_210 : f32 to vector<8x32xf32>
    %638 = arith.mulf %637, %630 : vector<8x32xf32>
    %639 = arith.subf %636, %638 : vector<8x32xf32>
    %640 = arith.addf %627, %634 : vector<8x32xf32>
    %641 = arith.addf %630, %639 : vector<8x32xf32>
    %cst_211 = arith.constant 5.000000e-01 : f32
    %642 = vector.broadcast %cst_211 : f32 to vector<8x32xf32>
    %643 = arith.cmpf ogt, %640, %642 : vector<8x32xf32>
    %644 = arith.extui %643 : vector<8x32xi1> to vector<8x32xi32>
    %645 = arith.sitofp %644 : vector<8x32xi32> to vector<8x32xf32>
    %c0_212 = arith.constant 0 : index
    %c0_213 = arith.constant 0 : index
    %646 = vector.load %arg6[%c0_212, %c0_213] : memref<32x32xf32, #tpu.memory_space<vmem>>, vector<32x32xf32>
    %cst_214 = arith.constant dense<0.000000e+00> : vector<8x32xf32>
    %647 = tpu.matmul %645, %646, %cst_214 {dimension_numbers = #tpu.dot_dimension_numbers<[1], [0], [0], [1], [0, 0, 1, 1], [], []>} : vector<8x32xf32>, vector<32x32xf32>, vector<8x32xf32> -> vector<8x32xf32>
    %648 = arith.addf %647, %13 : vector<8x32xf32>
    %649 = arith.addf %648, %618 : vector<8x32xf32>
    %cst_215 = arith.constant 5.000000e-01 : f32
    %650 = vector.broadcast %cst_215 : f32 to vector<8x32xf32>
    %651 = arith.mulf %559, %650 : vector<8x32xf32>
    %652 = arith.addf %651, %649 : vector<8x32xf32>
    %cst_216 = arith.constant 1.000000e+00 : f32
    %653 = vector.broadcast %cst_216 : f32 to vector<8x32xf32>
    %654 = arith.subf %653, %583 : vector<8x32xf32>
    %655 = arith.mulf %578, %654 : vector<8x32xf32>
    %cst_217 = arith.constant 2.100000e-02 : f32
    %656 = vector.broadcast %cst_217 : f32 to vector<8x32xf32>
    %657 = arith.mulf %583, %656 : vector<8x32xf32>
    %658 = arith.addf %655, %657 : vector<8x32xf32>
    %cst_218 = arith.constant 1.320000e-01 : f32
    %659 = vector.broadcast %cst_218 : f32 to vector<8x32xf32>
    %660 = arith.mulf %583, %659 : vector<8x32xf32>
    %661 = arith.addf %579, %660 : vector<8x32xf32>
    %662 = arith.mulf %658, %658 : vector<8x32xf32>
    %663 = arith.subf %662, %658 : vector<8x32xf32>
    %664 = arith.subf %663, %661 : vector<8x32xf32>
    %665 = arith.addf %664, %652 : vector<8x32xf32>
    %cst_219 = arith.constant -1.720000e-01 : f32
    %666 = vector.broadcast %cst_219 : f32 to vector<8x32xf32>
    %667 = arith.mulf %666, %658 : vector<8x32xf32>
    %cst_220 = arith.constant 5.290000e-01 : f32
    %668 = vector.broadcast %cst_220 : f32 to vector<8x32xf32>
    %669 = arith.mulf %668, %661 : vector<8x32xf32>
    %670 = arith.subf %667, %669 : vector<8x32xf32>
    %671 = arith.addf %658, %665 : vector<8x32xf32>
    %672 = arith.addf %661, %670 : vector<8x32xf32>
    %cst_221 = arith.constant 5.000000e-01 : f32
    %673 = vector.broadcast %cst_221 : f32 to vector<8x32xf32>
    %674 = arith.cmpf ogt, %671, %673 : vector<8x32xf32>
    %675 = arith.extui %674 : vector<8x32xi1> to vector<8x32xi32>
    %676 = arith.sitofp %675 : vector<8x32xi32> to vector<8x32xf32>
    %677 = arith.addf %584, %676 : vector<8x32xf32>
    %c56 = arith.constant 56 : index
    %c0_222 = arith.constant 0 : index
    %678 = vector.load %arg9[%c56, %c0_222] : memref<64x64xf32, #tpu.memory_space<vmem>>, vector<8x64xf32>
    %cst_223 = arith.constant 5.000000e-01 : f32
    %679 = vector.broadcast %cst_223 : f32 to vector<8x64xf32>
    %680 = arith.mulf %588, %679 : vector<8x64xf32>
    %681 = arith.addf %680, %678 : vector<8x64xf32>
    %cst_224 = arith.constant 1.000000e+00 : f32
    %682 = vector.broadcast %cst_224 : f32 to vector<8x64xf32>
    %683 = arith.subf %682, %612 : vector<8x64xf32>
    %684 = arith.mulf %607, %683 : vector<8x64xf32>
    %cst_225 = arith.constant 2.100000e-02 : f32
    %685 = vector.broadcast %cst_225 : f32 to vector<8x64xf32>
    %686 = arith.mulf %612, %685 : vector<8x64xf32>
    %687 = arith.addf %684, %686 : vector<8x64xf32>
    %cst_226 = arith.constant 1.320000e-01 : f32
    %688 = vector.broadcast %cst_226 : f32 to vector<8x64xf32>
    %689 = arith.mulf %612, %688 : vector<8x64xf32>
    %690 = arith.addf %608, %689 : vector<8x64xf32>
    %691 = arith.mulf %687, %687 : vector<8x64xf32>
    %692 = arith.subf %691, %687 : vector<8x64xf32>
    %693 = arith.subf %692, %690 : vector<8x64xf32>
    %694 = arith.addf %693, %681 : vector<8x64xf32>
    %695 = arith.addf %687, %694 : vector<8x64xf32>
    %cst_227 = arith.constant 5.000000e-01 : f32
    %696 = vector.broadcast %cst_227 : f32 to vector<8x64xf32>
    %697 = arith.cmpf ogt, %695, %696 : vector<8x64xf32>
    %698 = arith.extui %697 : vector<8x64xi1> to vector<8x64xi32>
    %699 = arith.sitofp %698 : vector<8x64xi32> to vector<8x64xf32>
    %700 = tpu.concatenate %699, %676 in 1 : vector<8x64xf32>, vector<8x32xf32> -> vector<8x96xf32>
    %c0_228 = arith.constant 0 : index
    %c0_229 = arith.constant 0 : index
    %701 = vector.load %arg4[%c0_228, %c0_229] : memref<96x64xf32, #tpu.memory_space<vmem>>, vector<96x64xf32>
    %cst_230 = arith.constant dense<0.000000e+00> : vector<8x64xf32>
    %702 = tpu.matmul %700, %701, %cst_230 {dimension_numbers = #tpu.dot_dimension_numbers<[1], [0], [0], [1], [0, 0, 1, 1], [], []>} : vector<8x96xf32>, vector<96x64xf32>, vector<8x64xf32> -> vector<8x64xf32>
    %703 = arith.addf %702, %10 : vector<8x64xf32>
    %704 = vector.extract_strided_slice %703 {offsets = [0, 0], sizes = [8, 32], strides = [1, 1]} : vector<8x64xf32> to vector<8x32xf32>
    %705 = vector.extract_strided_slice %703 {offsets = [0, 32], sizes = [8, 32], strides = [1, 1]} : vector<8x64xf32> to vector<8x32xf32>
    %cst_231 = arith.constant 5.000000e-01 : f32
    %706 = vector.broadcast %cst_231 : f32 to vector<8x32xf32>
    %707 = arith.mulf %621, %706 : vector<8x32xf32>
    %708 = arith.addf %707, %704 : vector<8x32xf32>
    %cst_232 = arith.constant 1.000000e+00 : f32
    %709 = vector.broadcast %cst_232 : f32 to vector<8x32xf32>
    %710 = arith.subf %709, %645 : vector<8x32xf32>
    %711 = arith.mulf %640, %710 : vector<8x32xf32>
    %cst_233 = arith.constant 2.100000e-02 : f32
    %712 = vector.broadcast %cst_233 : f32 to vector<8x32xf32>
    %713 = arith.mulf %645, %712 : vector<8x32xf32>
    %714 = arith.addf %711, %713 : vector<8x32xf32>
    %cst_234 = arith.constant 1.320000e-01 : f32
    %715 = vector.broadcast %cst_234 : f32 to vector<8x32xf32>
    %716 = arith.mulf %645, %715 : vector<8x32xf32>
    %717 = arith.addf %641, %716 : vector<8x32xf32>
    %718 = arith.mulf %714, %714 : vector<8x32xf32>
    %719 = arith.subf %718, %714 : vector<8x32xf32>
    %720 = arith.subf %719, %717 : vector<8x32xf32>
    %721 = arith.addf %720, %708 : vector<8x32xf32>
    %722 = arith.addf %714, %721 : vector<8x32xf32>
    %cst_235 = arith.constant 5.000000e-01 : f32
    %723 = vector.broadcast %cst_235 : f32 to vector<8x32xf32>
    %724 = arith.cmpf ogt, %722, %723 : vector<8x32xf32>
    %725 = arith.extui %724 : vector<8x32xi1> to vector<8x32xi32>
    %726 = arith.sitofp %725 : vector<8x32xi32> to vector<8x32xf32>
    %c0_236 = arith.constant 0 : index
    %c0_237 = arith.constant 0 : index
    %727 = vector.load %arg6[%c0_236, %c0_237] : memref<32x32xf32, #tpu.memory_space<vmem>>, vector<32x32xf32>
    %cst_238 = arith.constant dense<0.000000e+00> : vector<8x32xf32>
    %728 = tpu.matmul %726, %727, %cst_238 {dimension_numbers = #tpu.dot_dimension_numbers<[1], [0], [0], [1], [0, 0, 1, 1], [], []>} : vector<8x32xf32>, vector<32x32xf32>, vector<8x32xf32> -> vector<8x32xf32>
    %729 = arith.addf %728, %13 : vector<8x32xf32>
    %730 = arith.addf %729, %705 : vector<8x32xf32>
    %cst_239 = arith.constant 5.000000e-01 : f32
    %731 = vector.broadcast %cst_239 : f32 to vector<8x32xf32>
    %732 = arith.mulf %652, %731 : vector<8x32xf32>
    %733 = arith.addf %732, %730 : vector<8x32xf32>
    %cst_240 = arith.constant 1.000000e+00 : f32
    %734 = vector.broadcast %cst_240 : f32 to vector<8x32xf32>
    %735 = arith.subf %734, %676 : vector<8x32xf32>
    %736 = arith.mulf %671, %735 : vector<8x32xf32>
    %cst_241 = arith.constant 2.100000e-02 : f32
    %737 = vector.broadcast %cst_241 : f32 to vector<8x32xf32>
    %738 = arith.mulf %676, %737 : vector<8x32xf32>
    %739 = arith.addf %736, %738 : vector<8x32xf32>
    %cst_242 = arith.constant 1.320000e-01 : f32
    %740 = vector.broadcast %cst_242 : f32 to vector<8x32xf32>
    %741 = arith.mulf %676, %740 : vector<8x32xf32>
    %742 = arith.addf %672, %741 : vector<8x32xf32>
    %743 = arith.mulf %739, %739 : vector<8x32xf32>
    %744 = arith.subf %743, %739 : vector<8x32xf32>
    %745 = arith.subf %744, %742 : vector<8x32xf32>
    %746 = arith.addf %745, %733 : vector<8x32xf32>
    %747 = arith.addf %739, %746 : vector<8x32xf32>
    %cst_243 = arith.constant 5.000000e-01 : f32
    %748 = vector.broadcast %cst_243 : f32 to vector<8x32xf32>
    %749 = arith.cmpf ogt, %747, %748 : vector<8x32xf32>
    %750 = arith.extui %749 : vector<8x32xi1> to vector<8x32xi32>
    %751 = arith.sitofp %750 : vector<8x32xi32> to vector<8x32xf32>
    %752 = arith.addf %677, %751 : vector<8x32xf32>
    %cst_244 = arith.constant 1.250000e-01 : f32
    %753 = vector.broadcast %cst_244 : f32 to vector<8x32xf32>
    %754 = arith.mulf %752, %753 : vector<8x32xf32>
    %c0_245 = arith.constant 0 : index
    %c0_246 = arith.constant 0 : index
    %755 = vector.load %arg8[%c0_245, %c0_246] : memref<8x32xf32, #tpu.memory_space<vmem>>, vector<8x32xf32>
    tpu.vector_store %arg8[%c0_245, %c0_246], %754 {strides = array<i32>} : memref<8x32xf32, #tpu.memory_space<vmem>>, vector<8x32xf32>,
    return
  }
  func.func @transform_0(%arg0: i32) -> (i32, i32, i32) {
    %c0_i32 = arith.constant 0 : i32
    %c0_i32_0 = arith.constant 0 : i32
    %c0_i32_1 = arith.constant 0 : i32
    return %arg0, %c0_i32, %c0_i32_0 : i32, i32, i32
  }
  func.func @transform_1(%arg0: i32) -> (i32, i32) {
    %c0_i32 = arith.constant 0 : i32
    %c0_i32_0 = arith.constant 0 : i32
    %c0_i32_1 = arith.constant 0 : i32
    return %c0_i32, %c0_i32_0 : i32, i32
  }
  func.func @transform_2(%arg0: i32) -> (i32, i32) {
    %c0_i32 = arith.constant 0 : i32
    %c0_i32_0 = arith.constant 0 : i32
    %c0_i32_1 = arith.constant 0 : i32
    return %c0_i32, %c0_i32_0 : i32, i32
  }
  func.func @transform_3(%arg0: i32) -> (i32, i32) {
    %c0_i32 = arith.constant 0 : i32
    %c0_i32_0 = arith.constant 0 : i32
    %c0_i32_1 = arith.constant 0 : i32
    return %c0_i32, %c0_i32_0 : i32, i32
  }
  func.func @transform_4(%arg0: i32) -> (i32, i32) {
    %c0_i32 = arith.constant 0 : i32
    %c0_i32_0 = arith.constant 0 : i32
    %c0_i32_1 = arith.constant 0 : i32
    return %c0_i32, %c0_i32_0 : i32, i32
  }
  func.func @transform_5(%arg0: i32) -> (i32, i32) {
    %c0_i32 = arith.constant 0 : i32
    %c0_i32_0 = arith.constant 0 : i32
    %c0_i32_1 = arith.constant 0 : i32
    return %c0_i32, %c0_i32_0 : i32, i32
  }
  func.func @transform_6(%arg0: i32) -> (i32, i32) {
    %c0_i32 = arith.constant 0 : i32
    %c0_i32_0 = arith.constant 0 : i32
    %c0_i32_1 = arith.constant 0 : i32
    return %c0_i32, %c0_i32_0 : i32, i32
  }
  func.func @transform_7(%arg0: i32) -> (i32, i32) {
    %c0_i32 = arith.constant 0 : i32
    %c0_i32_0 = arith.constant 0 : i32
    return %arg0, %c0_i32 : i32, i32
  }
}

</mosaic_0001>

<llo_original>
// kernel: tpu_custom_call.1
$region0: #{tpu_custom_call.1}
  #allocation0 [shape = 'u32[]', space=smem, size = 0x4, offset = 0x4, fixed_abs, tag = 'smem constant byte address 0x4 - core index']
  #allocation1 [shape = 'u32[144,128]{1,0:T(1,128)}', space=vmem, size = 0x12000, scoped, tag = 'internal scratch']
  #allocation2 [shape = 'f32[64,64]{1,0:T(8,128)}', space=vmem, size = 0x8000, scoped, tag = 'scratch operand']
  %s0 = inlined_call_operand.vmem [shape: f32[1,64,32], index: 0, kind: input, shape index: {}]
  %s1 = inlined_call_operand.vmem [shape: f32[32,64], index: 1, kind: input, shape index: {}]
  %s2 = inlined_call_operand.vmem [shape: f32[1,64], index: 2, kind: input, shape index: {}]
  %s3 = inlined_call_operand.vmem [shape: f32[96,64], index: 3, kind: input, shape index: {}]
  %s4 = inlined_call_operand.vmem [shape: f32[1,64], index: 4, kind: input, shape index: {}]
  %s5 = inlined_call_operand.vmem [shape: f32[32,32], index: 5, kind: input, shape index: {}]
  %s6 = inlined_call_operand.vmem [shape: f32[1,32], index: 6, kind: input, shape index: {}]
  %s7 = inlined_call_operand.hbm [shape: f32[8,32], index: 7, kind: output, shape index: {}]
  %s8 = sld [smem:[#allocation0]]
  $region38: #{tpu_custom_call.1} parent=0
    _
  %s10 = ssub.s32 1, %s8
  %s11 = scalar_select 0, %s10, %s8
  $region1: #{tpu_custom_call.1} parent=0
    #allocation3 [shape = 'u8[4096]{0}', space=vmem, size = 0x1000, scoped, tag = 'output window, operand 0, single buffered']
    #allocation4 [shape = 's32[1]{0}', space=sflag, size = 0x4, scoped, tag = 'scoped memory for tpu_custom_call.1']
    %12 = vsyncpa [#allocation4], 0
    // Predicated region
    $region2: #{tpu_custom_call.1} parent=1 // pred_check
      _
    $region3: #{tpu_custom_call.1} parent=1 // pred_check_branch
      %14 = sbr.rel (0) target = $region5
    $region4: #{tpu_custom_call.1} parent=1 // pred_region
      _
    $region5: #{tpu_custom_call.1} parent=1 // pred_fallthru
      _
    // Predicated region
    $region6: #{tpu_custom_call.1} parent=1 // pred_check
      _
    $region7: #{tpu_custom_call.1} parent=1 // pred_check_branch
      %16 = sbr.rel (0) target = $region9
    $region8: #{tpu_custom_call.1} parent=1 // pred_region
      _
    $region9: #{tpu_custom_call.1} parent=1 // pred_fallthru
      _
    // Predicated region
    $region10: #{tpu_custom_call.1} parent=1 // pred_check
      _
    $region11: #{tpu_custom_call.1} parent=1 // pred_check_branch
      %18 = sbr.rel (0) target = $region13
    $region12: #{tpu_custom_call.1} parent=1 // pred_region
      _
    $region13: #{tpu_custom_call.1} parent=1 // pred_fallthru
      _
    // Predicated region
    $region14: #{tpu_custom_call.1} parent=1 // pred_check
      _
    $region15: #{tpu_custom_call.1} parent=1 // pred_check_branch
      %20 = sbr.rel (0) target = $region17
    $region16: #{tpu_custom_call.1} parent=1 // pred_region
      _
    $region17: #{tpu_custom_call.1} parent=1 // pred_fallthru
      _
    // Predicated region
    $region18: #{tpu_custom_call.1} parent=1 // pred_check
      _
    $region19: #{tpu_custom_call.1} parent=1 // pred_check_branch
      %22 = sbr.rel (0) target = $region21
    $region20: #{tpu_custom_call.1} parent=1 // pred_region
      _
    $region21: #{tpu_custom_call.1} parent=1 // pred_fallthru
      _
    // Predicated region
    $region22: #{tpu_custom_call.1} parent=1 // pred_check
      _
    $region23: #{tpu_custom_call.1} parent=1 // pred_check_branch
      %24 = sbr.rel (0) target = $region25
    $region24: #{tpu_custom_call.1} parent=1 // pred_region
      _
    $region25: #{tpu_custom_call.1} parent=1 // pred_fallthru
      _
    // Predicated region
    $region26: #{tpu_custom_call.1} parent=1 // pred_check
      _
    $region27: #{tpu_custom_call.1} parent=1 // pred_check_branch
      %26 = sbr.rel (0) target = $region29
    $region28: #{tpu_custom_call.1} parent=1 // pred_region
      _
    $region29: #{tpu_custom_call.1} parent=1 // pred_fallthru
      _
    %v27 = vld [vmem:[%s0] sm:$0xff]
    %v28 = vld [vmem:[%s0 + $0x8] sm:$0xff]
    %v29 = vld [vmem:[%s0 + $0x10] sm:$0xff]
    %v30 = vld [vmem:[%s0 + $0x18] sm:$0xff]
    %v31 = vld [vmem:[%s0 + $0x20] sm:$0xff]
    %v32 = vld [vmem:[%s0 + $0x28] sm:$0xff]
    %v33 = vld [vmem:[%s0 + $0x30] sm:$0xff]
    %v34 = vld [vmem:[%s0 + $0x38] sm:$0xff]
    %v35 = vld [vmem:[%s1] sm:$0xff]
    %v36 = vld [vmem:[%s1 + $0x8] sm:$0xff]
    %v37 = vld [vmem:[%s1 + $0x10] sm:$0xff]
    %v38 = vld [vmem:[%s1 + $0x18] sm:$0xff]
    %v39 = vld [vmem:[%s2] sm:$0x1]
    %v41 = vlaneseq
    %v42 = vshrl.u32 %v41, 7
    %v43 = vsub.s32 0, %v42
    %v44 = vrot.slane %v39, %v43
    %vm46 = vcmask 261120
    %v48 = vsel %vm46, %v27, 0
    %v51 = vsel %vm46, %v28, 0
    %v54 = vsel %vm46, %v29, 0
    %v57 = vsel %vm46, %v30, 0
    %v60 = vsel %vm46, %v31, 0
    %v63 = vsel %vm46, %v32, 0
    %v66 = vsel %vm46, %v33, 0
    %v69 = vsel %vm46, %v34, 0
    %71 = vmatprep.subr.mxu0 0.0
    %72 = vmatpush1.msra.mxu0 0.0
    %73 = vmatprep.subr.mxu0 0.0
    %74 = vmatpush1.msra.mxu0 0.0
    %75 = vmatprep.subr.mxu0 0.0
    %76 = vmatpush1.msra.mxu0 0.0
    %77 = vmatprep.subr.mxu0 0.0
    %78 = vmatpush1.msra.mxu0 0.0
    %79 = vmatprep.subr.mxu0 0.0
    %80 = vmatpush1.msra.mxu0 0.0
    %81 = vmatprep.subr.mxu0 0.0
    %82 = vmatpush1.msra.mxu0 0.0
    %83 = vmatprep.subr.mxu0 0.0
    %84 = vmatpush1.msra.mxu0 0.0
    %85 = vmatprep.subr.mxu0 0.0
    %86 = vmatpush1.msra.mxu0 0.0
    %87 = vmatprep.subr.mxu0 0.0
    %88 = vmatpush1.msra.mxu0 0.0
    %89 = vmatprep.subr.mxu0 0.0
    %90 = vmatpush1.msra.mxu0 0.0
    %91 = vmatprep.subr.mxu0 0.0
    %92 = vmatpush1.msra.mxu0 0.0
    %93 = vmatprep.subr.mxu0 0.0
    %94 = vmatpush1.msra.mxu0 0.0
    %95 = vmatprep.subr.mxu0 0.0
    %96 = vmatpush1.msra.mxu0 %v38
    %97 = vmatprep.subr.mxu0 0.0
    %98 = vmatpush1.msra.mxu0 %v37
    %99 = vmatprep.subr.mxu0 0.0
    %100 = vmatpush1.msra.mxu0 %v36
    %101 = vmatprep.subr.mxu0 0.0
    %102 = vmatpush1.msra.mxu0 %v35
    %103 = vmatprep.subr.mxu0 0.0
    %104 = vmatpush2.msra.mxu0 0.0
    %105 = vmatprep.subr.mxu0 0.0
    %106 = vmatpush2.msra.mxu0 0.0
    %107 = vmatprep.subr.mxu0 0.0
    %108 = vmatpush2.msra.mxu0 0.0
    %109 = vmatprep.subr.mxu0 0.0
    %110 = vmatpush2.msra.mxu0 0.0
    %111 = vmatprep.subr.mxu0 0.0
    %112 = vmatpush2.msra.mxu0 0.0
    %113 = vmatprep.subr.mxu0 0.0
    %114 = vmatpush2.msra.mxu0 0.0
    %115 = vmatprep.subr.mxu0 0.0
    %116 = vmatpush2.msra.mxu0 0.0
    %117 = vmatprep.subr.mxu0 0.0
    %118 = vmatpush2.msra.mxu0 0.0
    %119 = vmatprep.subr.mxu0 0.0
    %120 = vmatpush2.msra.mxu0 0.0
    %121 = vmatprep.subr.mxu0 0.0
    %122 = vmatpush2.msra.mxu0 0.0
    %123 = vmatprep.subr.mxu0 0.0
    %124 = vmatpush2.msra.mxu0 0.0
    %125 = vmatprep.subr.mxu0 0.0
    %126 = vmatpush2.msra.mxu0 0.0
    %127 = vmatprep.subr.mxu0 0.0
    %128 = vmatpush2.msra.mxu0 0.0
    %129 = vmatprep.subr.mxu0 0.0
    %130 = vmatpush2.msra.mxu0 0.0
    %131 = vmatprep.subr.mxu0 0.0
    %132 = vmatpush2.msra.mxu0 0.0
    %133 = vmatprep.subr.mxu0 0.0
    %134 = vmatpush2.msra.mxu0 0.0
    %135 = vmatprep.mubr.f32.mxu0 0.0
    %136 = vmatmul.mubr.f32.gmra.mxu0 %v48
    %v137 = vpop.f32.mrf.mxu0
    %v138 = vadd.f32 %v44, %v137
    %v139 = vpop.f32.mrf.mxu0
    %140 = vmatprep.mubr.f32.mxu0 0.0
    %141 = vmatmul.mubr.f32.gmra.mxu0 %v51
    %v142 = vpop.f32.mrf.mxu0
    %v143 = vadd.f32 %v44, %v142
    %v144 = vpop.f32.mrf.mxu0
    %145 = vmatprep.mubr.f32.mxu0 0.0
    %146 = vmatmul.mubr.f32.gmra.mxu0 %v54
    %v147 = vpop.f32.mrf.mxu0
    %v148 = vadd.f32 %v44, %v147
    %v149 = vpop.f32.mrf.mxu0
    %150 = vmatprep.mubr.f32.mxu0 0.0
    %151 = vmatmul.mubr.f32.gmra.mxu0 %v57
    %v152 = vpop.f32.mrf.mxu0
    %v153 = vadd.f32 %v44, %v152
    %v154 = vpop.f32.mrf.mxu0
    %155 = vmatprep.mubr.f32.mxu0 0.0
    %156 = vmatmul.mubr.f32.gmra.mxu0 %v60
    %v157 = vpop.f32.mrf.mxu0
    %v158 = vadd.f32 %v44, %v157
    %v159 = vpop.f32.mrf.mxu0
    %160 = vmatprep.mubr.f32.mxu0 0.0
    %161 = vmatmul.mubr.f32.gmra.mxu0 %v63
    %v162 = vpop.f32.mrf.mxu0
    %v163 = vadd.f32 %v44, %v162
    %v164 = vpop.f32.mrf.mxu0
    %165 = vmatprep.mubr.f32.mxu0 0.0
    %166 = vmatmul.mubr.f32.gmra.mxu0 %v66
    %v167 = vpop.f32.mrf.mxu0
    %v168 = vadd.f32 %v44, %v167
    %v169 = vpop.f32.mrf.mxu0
    %170 = vmatprep.mubr.f32.mxu0 0.0
    %171 = vmatmul.mubr.f32.gmra.mxu0 %v69
    %v172 = vpop.f32.mrf.mxu0
    %v173 = vadd.f32 %v44, %v172
    %v174 = vpop.f32.mrf.mxu0
    %175 = vdwg.mxu0
    %vm176 = vcmask 523264
    %177 = vst.msk [vmem:[#allocation2] sm:$0xff] %vm176, %v138
    %178 = vst.msk [vmem:[#allocation2 + $0x8] sm:$0xff] %vm176, %v143
    %179 = vst.msk [vmem:[#allocation2 + $0x10] sm:$0xff] %vm176, %v148
    %180 = vst.msk [vmem:[#allocation2 + $0x18] sm:$0xff] %vm176, %v153
    %181 = vst.msk [vmem:[#allocation2 + $0x20] sm:$0xff] %vm176, %v158
    %182 = vst.msk [vmem:[#allocation2 + $0x28] sm:$0xff] %vm176, %v163
    %183 = vst.msk [vmem:[#allocation2 + $0x30] sm:$0xff] %vm176, %v168
    %184 = vst.msk [vmem:[#allocation2 + $0x38] sm:$0xff] %vm176, %v173
    %v185 = vld [vmem:[%s4] sm:$0x1]
    %v187 = vlaneseq
    %v188 = vshrl.u32 %v187, 7
    %v189 = vsub.s32 0, %v188
    %v190 = vrot.slane %v185, %v189
    %v192 = vld [vmem:[%s6] sm:$0x1]
    %v194 = vlaneseq
    %v195 = vshrl.u32 %v194, 7
    %v196 = vsub.s32 0, %v195
    %v197 = vrot.slane %v192, %v196
    %v199 = vld [vmem:[#allocation2] sm:$0xff]
    %v200 = vadd.f32 %v199, 0.0
    %v201 = vadd.f32 %v200, 0.0
    %v202 = vadd.f32 %v201, 0.0
    %vm203 = vcmp.gt.f32.partialorder %v202, 0.5
    %v204 = vsel %vm203, 1, 0
    %v205 = vcvt.s32.f32 %v204
    %v206 = vsel %vm176, %v205, 0.0
    %v207 = vld [vmem:[%s3] sm:$0xff]
    %v208 = vld [vmem:[%s3 + $0x8] sm:$0xff]
    %v209 = vld [vmem:[%s3 + $0x10] sm:$0xff]
    %v210 = vld [vmem:[%s3 + $0x18] sm:$0xff]
    %v211 = vld [vmem:[%s3 + $0x20] sm:$0xff]
    %v212 = vld [vmem:[%s3 + $0x28] sm:$0xff]
    %v213 = vld [vmem:[%s3 + $0x30] sm:$0xff]
    %v214 = vld [vmem:[%s3 + $0x38] sm:$0xff]
    %v215 = vld [vmem:[%s3 + $0x40] sm:$0xff]
    %v216 = vld [vmem:[%s3 + $0x48] sm:$0xff]
    %v217 = vld [vmem:[%s3 + $0x50] sm:$0xff]
    %v218 = vld [vmem:[%s3 + $0x58] sm:$0xff]
    %vm219 = vcmask 785408
    %v221 = vsel %vm219, %v206, 0
    %223 = vmatprep.subr.mxu0 0.0
    %224 = vmatpush1.msra.mxu0 0.0
    %225 = vmatprep.subr.mxu0 0.0
    %226 = vmatpush1.msra.mxu0 0.0
    %227 = vmatprep.subr.mxu0 0.0
    %228 = vmatpush1.msra.mxu0 0.0
    %229 = vmatprep.subr.mxu0 0.0
    %230 = vmatpush1.msra.mxu0 0.0
    %231 = vmatprep.subr.mxu0 0.0
    %232 = vmatpush1.msra.mxu0 %v218
    %233 = vmatprep.subr.mxu0 0.0
    %234 = vmatpush1.msra.mxu0 %v217
    %235 = vmatprep.subr.mxu0 0.0
    %236 = vmatpush1.msra.mxu0 %v216
    %237 = vmatprep.subr.mxu0 0.0
    %238 = vmatpush1.msra.mxu0 %v215
    %239 = vmatprep.subr.mxu0 0.0
    %240 = vmatpush1.msra.mxu0 %v214
    %241 = vmatprep.subr.mxu0 0.0
    %242 = vmatpush1.msra.mxu0 %v213
    %243 = vmatprep.subr.mxu0 0.0
    %244 = vmatpush1.msra.mxu0 %v212
    %245 = vmatprep.subr.mxu0 0.0
    %246 = vmatpush1.msra.mxu0 %v211
    %247 = vmatprep.subr.mxu0 0.0
    %248 = vmatpush1.msra.mxu0 %v210
    %249 = vmatprep.subr.mxu0 0.0
    %250 = vmatpush1.msra.mxu0 %v209
    %251 = vmatprep.subr.mxu0 0.0
    %252 = vmatpush1.msra.mxu0 %v208
    %253 = vmatprep.subr.mxu0 0.0
    %254 = vmatpush1.msra.mxu0 %v207
    %255 = vmatprep.subr.mxu0 0.0
    %256 = vmatpush2.msra.mxu0 0.0
    %257 = vmatprep.subr.mxu0 0.0
    %258 = vmatpush2.msra.mxu0 0.0
    %259 = vmatprep.subr.mxu0 0.0
    %260 = vmatpush2.msra.mxu0 0.0
    %261 = vmatprep.subr.mxu0 0.0
    %262 = vmatpush2.msra.mxu0 0.0
    %263 = vmatprep.subr.mxu0 0.0
    %264 = vmatpush2.msra.mxu0 0.0
    %265 = vmatprep.subr.mxu0 0.0
    %266 = vmatpush2.msra.mxu0 0.0
    %267 = vmatprep.subr.mxu0 0.0
    %268 = vmatpush2.msra.mxu0 0.0
    %269 = vmatprep.subr.mxu0 0.0
    %270 = vmatpush2.msra.mxu0 0.0
    %271 = vmatprep.subr.mxu0 0.0
    %272 = vmatpush2.msra.mxu0 0.0
    %273 = vmatprep.subr.mxu0 0.0
    %274 = vmatpush2.msra.mxu0 0.0
    %275 = vmatprep.subr.mxu0 0.0
    %276 = vmatpush2.msra.mxu0 0.0
    %277 = vmatprep.subr.mxu0 0.0
    %278 = vmatpush2.msra.mxu0 0.0
    %279 = vmatprep.subr.mxu0 0.0
    %280 = vmatpush2.msra.mxu0 0.0
    %281 = vmatprep.subr.mxu0 0.0
    %282 = vmatpush2.msra.mxu0 0.0
    %283 = vmatprep.subr.mxu0 0.0
    %284 = vmatpush2.msra.mxu0 0.0
    %285 = vmatprep.subr.mxu0 0.0
    %286 = vmatpush2.msra.mxu0 0.0
    %287 = vmatprep.mubr.f32.mxu0 0.0
    %288 = vmatmul.mubr.f32.gmra.mxu0 %v221
    %v289 = vpop.f32.mrf.mxu0
    %v290 = vadd.f32 %v190, %v289
    %v291 = vpop.f32.mrf.mxu0
    %292 = vdwg.mxu0
    %v293 = vadd.f32 %v290, 0.0
    %v294 = vadd.f32 %v293, 0.0
    %v295 = vadd.f32 %v294, 0.0
    %vm296 = vcmp.gt.f32.partialorder %v295, 0.5
    %v297 = vsel %vm296, 1, 0
    %v298 = vcvt.s32.f32 %v297
    %v299 = vld [vmem:[%s5] sm:$0xff]
    %v300 = vld [vmem:[%s5 + $0x8] sm:$0xff]
    %v301 = vld [vmem:[%s5 + $0x10] sm:$0xff]
    %v302 = vld [vmem:[%s5 + $0x18] sm:$0xff]
    %v304 = vsel %vm46, %v298, 0
    %306 = vmatprep.subr.mxu0 0.0
    %307 = vmatpush1.msra.mxu0 0.0
    %308 = vmatprep.subr.mxu0 0.0
    %309 = vmatpush1.msra.mxu0 0.0
    %310 = vmatprep.subr.mxu0 0.0
    %311 = vmatpush1.msra.mxu0 0.0
    %312 = vmatprep.subr.mxu0 0.0
    %313 = vmatpush1.msra.mxu0 0.0
    %314 = vmatprep.subr.mxu0 0.0
    %315 = vmatpush1.msra.mxu0 0.0
    %316 = vmatprep.subr.mxu0 0.0
    %317 = vmatpush1.msra.mxu0 0.0
    %318 = vmatprep.subr.mxu0 0.0
    %319 = vmatpush1.msra.mxu0 0.0
    %320 = vmatprep.subr.mxu0 0.0
    %321 = vmatpush1.msra.mxu0 0.0
    %322 = vmatprep.subr.mxu0 0.0
    %323 = vmatpush1.msra.mxu0 0.0
    %324 = vmatprep.subr.mxu0 0.0
    %325 = vmatpush1.msra.mxu0 0.0
    %326 = vmatprep.subr.mxu0 0.0
    %327 = vmatpush1.msra.mxu0 0.0
    %328 = vmatprep.subr.mxu0 0.0
    %329 = vmatpush1.msra.mxu0 0.0
    %330 = vmatprep.subr.mxu0 0.0
    %331 = vmatpush1.msra.mxu0 %v302
    %332 = vmatprep.subr.mxu0 0.0
    %333 = vmatpush1.msra.mxu0 %v301
    %334 = vmatprep.subr.mxu0 0.0
    %335 = vmatpush1.msra.mxu0 %v300
    %336 = vmatprep.subr.mxu0 0.0
    %337 = vmatpush1.msra.mxu0 %v299
    %338 = vmatprep.subr.mxu0 0.0
    %339 = vmatpush2.msra.mxu0 0.0
    %340 = vmatprep.subr.mxu0 0.0
    %341 = vmatpush2.msra.mxu0 0.0
    %342 = vmatprep.subr.mxu0 0.0
    %343 = vmatpush2.msra.mxu0 0.0
    %344 = vmatprep.subr.mxu0 0.0
    %345 = vmatpush2.msra.mxu0 0.0
    %346 = vmatprep.subr.mxu0 0.0
    %347 = vmatpush2.msra.mxu0 0.0
    %348 = vmatprep.subr.mxu0 0.0
    %349 = vmatpush2.msra.mxu0 0.0
    %350 = vmatprep.subr.mxu0 0.0
    %351 = vmatpush2.msra.mxu0 0.0
    %352 = vmatprep.subr.mxu0 0.0
    %353 = vmatpush2.msra.mxu0 0.0
    %354 = vmatprep.subr.mxu0 0.0
    %355 = vmatpush2.msra.mxu0 0.0
    %356 = vmatprep.subr.mxu0 0.0
    %357 = vmatpush2.msra.mxu0 0.0
    %358 = vmatprep.subr.mxu0 0.0
    %359 = vmatpush2.msra.mxu0 0.0
    %360 = vmatprep.subr.mxu0 0.0
    %361 = vmatpush2.msra.mxu0 0.0
    %362 = vmatprep.subr.mxu0 0.0
    %363 = vmatpush2.msra.mxu0 0.0
    %364 = vmatprep.subr.mxu0 0.0
    %365 = vmatpush2.msra.mxu0 0.0
    %366 = vmatprep.subr.mxu0 0.0
    %367 = vmatpush2.msra.mxu0 0.0
    %368 = vmatprep.subr.mxu0 0.0
    %369 = vmatpush2.msra.mxu0 0.0
    %370 = vmatprep.mubr.f32.mxu0 0.0
    %371 = vmatmul.mubr.f32.gmra.mxu0 %v304
    %v372 = vpop.f32.mrf.mxu0
    %v373 = vadd.f32 %v197, %v372
    %v374 = vpop.f32.mrf.mxu0
    %375 = vdwg.mxu0
    %377 = vrot.lane.b32.xlu0 %v290, 96
    %v378 = vpop.permute.xlu0 %377
    %v380 = vadd.f32 %v373, %v378
    %v381 = vadd.f32 %v380, 0.0
    %v382 = vadd.f32 %v381, 0.0
    %v383 = vadd.f32 %v382, 0.0
    %vm384 = vcmp.gt.f32.partialorder %v383, 0.5
    %v385 = vsel %vm384, 1, 0
    %v386 = vcvt.s32.f32 %v385
    %v387 = vadd.f32 %v386, 0.0
    %v388 = vld [vmem:[#allocation2 + $0x8] sm:$0xff]
    %v389 = vmul.f32 %v200, 0.5
    %v390 = vadd.f32 %v389, %v388
    %v391 = vsub.f32 1.0, %v205
    %v392 = vmul.f32 %v202, %v391
    %v393 = vmul.f32 %v205, 0.021
    %v394 = vadd.f32 %v392, %v393
    %v395 = vmul.f32 %v205, 0.132
    %v396 = vadd.f32 %v395, 0.0
    %v397 = vmul.f32 %v394, %v394
    %v398 = vsub.f32 %v397, %v394
    %v399 = vsub.f32 %v398, %v396
    %v400 = vadd.f32 %v399, %v390
    %v401 = vmul.f32 %v394, -0.172
    %v402 = vmul.f32 %v396, 0.529
    %v403 = vsub.f32 %v401, %v402
    %v404 = vadd.f32 %v394, %v400
    %v405 = vadd.f32 %v396, %v403
    %vm406 = vcmp.gt.f32.partialorder %v404, 0.5
    %v407 = vsel %vm406, 1, 0
    %v408 = vcvt.s32.f32 %v407
    %410 = vrot.lane.b32.xlu0 %v386, 64
    %v411 = vpop.permute.xlu0 %410
    %v413 = vsel %vm176, %v408, %v411
    %v415 = vsel %vm219, %v413, 0
    %417 = vmatprep.subr.mxu0 0.0
    %418 = vmatpush1.msra.mxu0 0.0
    %419 = vmatprep.subr.mxu0 0.0
    %420 = vmatpush1.msra.mxu0 0.0
    %421 = vmatprep.subr.mxu0 0.0
    %422 = vmatpush1.msra.mxu0 0.0
    %423 = vmatprep.subr.mxu0 0.0
    %424 = vmatpush1.msra.mxu0 0.0
    %425 = vmatprep.subr.mxu0 0.0
    %426 = vmatpush1.msra.mxu0 %v218
    %427 = vmatprep.subr.mxu0 0.0
    %428 = vmatpush1.msra.mxu0 %v217
    %429 = vmatprep.subr.mxu0 0.0
    %430 = vmatpush1.msra.mxu0 %v216
    %431 = vmatprep.subr.mxu0 0.0
    %432 = vmatpush1.msra.mxu0 %v215
    %433 = vmatprep.subr.mxu0 0.0
    %434 = vmatpush1.msra.mxu0 %v214
    %435 = vmatprep.subr.mxu0 0.0
    %436 = vmatpush1.msra.mxu0 %v213
    %437 = vmatprep.subr.mxu0 0.0
    %438 = vmatpush1.msra.mxu0 %v212
    %439 = vmatprep.subr.mxu0 0.0
    %440 = vmatpush1.msra.mxu0 %v211
    %441 = vmatprep.subr.mxu0 0.0
    %442 = vmatpush1.msra.mxu0 %v210
    %443 = vmatprep.subr.mxu0 0.0
    %444 = vmatpush1.msra.mxu0 %v209
    %445 = vmatprep.subr.mxu0 0.0
    %446 = vmatpush1.msra.mxu0 %v208
    %447 = vmatprep.subr.mxu0 0.0
    %448 = vmatpush1.msra.mxu0 %v207
    %449 = vmatprep.subr.mxu0 0.0
    %450 = vmatpush2.msra.mxu0 0.0
    %451 = vmatprep.subr.mxu0 0.0
    %452 = vmatpush2.msra.mxu0 0.0
    %453 = vmatprep.subr.mxu0 0.0
    %454 = vmatpush2.msra.mxu0 0.0
    %455 = vmatprep.subr.mxu0 0.0
    %456 = vmatpush2.msra.mxu0 0.0
    %457 = vmatprep.subr.mxu0 0.0
    %458 = vmatpush2.msra.mxu0 0.0
    %459 = vmatprep.subr.mxu0 0.0
    %460 = vmatpush2.msra.mxu0 0.0
    %461 = vmatprep.subr.mxu0 0.0
    %462 = vmatpush2.msra.mxu0 0.0
    %463 = vmatprep.subr.mxu0 0.0
    %464 = vmatpush2.msra.mxu0 0.0
    %465 = vmatprep.subr.mxu0 0.0
    %466 = vmatpush2.msra.mxu0 0.0
    %467 = vmatprep.subr.mxu0 0.0
    %468 = vmatpush2.msra.mxu0 0.0
    %469 = vmatprep.subr.mxu0 0.0
    %470 = vmatpush2.msra.mxu0 0.0
    %471 = vmatprep.subr.mxu0 0.0
    %472 = vmatpush2.msra.mxu0 0.0
    %473 = vmatprep.subr.mxu0 0.0
    %474 = vmatpush2.msra.mxu0 0.0
    %475 = vmatprep.subr.mxu0 0.0
    %476 = vmatpush2.msra.mxu0 0.0
    %477 = vmatprep.subr.mxu0 0.0
    %478 = vmatpush2.msra.mxu0 0.0
    %479 = vmatprep.subr.mxu0 0.0
    %480 = vmatpush2.msra.mxu0 0.0
    %481 = vmatprep.mubr.f32.mxu0 0.0
    %482 = vmatmul.mubr.f32.gmra.mxu0 %v415
    %v483 = vpop.f32.mrf.mxu0
    %v484 = vadd.f32 %v190, %v483
    %v485 = vpop.f32.mrf.mxu0
    %486 = vdwg.mxu0
    %v487 = vmul.f32 %v293, 0.5
    %v488 = vadd.f32 %v487, %v484
    %v489 = vsub.f32 1.0, %v298
    %v490 = vmul.f32 %v295, %v489
    %v491 = vmul.f32 %v298, 0.021
    %v492 = vadd.f32 %v490, %v491
    %v493 = vmul.f32 %v298, 0.132
    %v494 = vadd.f32 %v493, 0.0
    %v495 = vmul.f32 %v492, %v492
    %v496 = vsub.f32 %v495, %v492
    %v497 = vsub.f32 %v496, %v494
    %v498 = vadd.f32 %v497, %v488
    %v499 = vmul.f32 %v492, -0.172
    %v500 = vmul.f32 %v494, 0.529
    %v501 = vsub.f32 %v499, %v500
    %v502 = vadd.f32 %v492, %v498
    %v503 = vadd.f32 %v494, %v501
    %vm504 = vcmp.gt.f32.partialorder %v502, 0.5
    %v505 = vsel %vm504, 1, 0
    %v506 = vcvt.s32.f32 %v505
    %v508 = vsel %vm46, %v506, 0
    %510 = vmatprep.subr.mxu0 0.0
    %511 = vmatpush1.msra.mxu0 0.0
    %512 = vmatprep.subr.mxu0 0.0
    %513 = vmatpush1.msra.mxu0 0.0
    %514 = vmatprep.subr.mxu0 0.0
    %515 = vmatpush1.msra.mxu0 0.0
    %516 = vmatprep.subr.mxu0 0.0
    %517 = vmatpush1.msra.mxu0 0.0
    %518 = vmatprep.subr.mxu0 0.0
    %519 = vmatpush1.msra.mxu0 0.0
    %520 = vmatprep.subr.mxu0 0.0
    %521 = vmatpush1.msra.mxu0 0.0
    %522 = vmatprep.subr.mxu0 0.0
    %523 = vmatpush1.msra.mxu0 0.0
    %524 = vmatprep.subr.mxu0 0.0
    %525 = vmatpush1.msra.mxu0 0.0
    %526 = vmatprep.subr.mxu0 0.0
    %527 = vmatpush1.msra.mxu0 0.0
    %528 = vmatprep.subr.mxu0 0.0
    %529 = vmatpush1.msra.mxu0 0.0
    %530 = vmatprep.subr.mxu0 0.0
    %531 = vmatpush1.msra.mxu0 0.0
    %532 = vmatprep.subr.mxu0 0.0
    %533 = vmatpush1.msra.mxu0 0.0
    %534 = vmatprep.subr.mxu0 0.0
    %535 = vmatpush1.msra.mxu0 %v302
    %536 = vmatprep.subr.mxu0 0.0
    %537 = vmatpush1.msra.mxu0 %v301
    %538 = vmatprep.subr.mxu0 0.0
    %539 = vmatpush1.msra.mxu0 %v300
    %540 = vmatprep.subr.mxu0 0.0
    %541 = vmatpush1.msra.mxu0 %v299
    %542 = vmatprep.subr.mxu0 0.0
    %543 = vmatpush2.msra.mxu0 0.0
    %544 = vmatprep.subr.mxu0 0.0
    %545 = vmatpush2.msra.mxu0 0.0
    %546 = vmatprep.subr.mxu0 0.0
    %547 = vmatpush2.msra.mxu0 0.0
    %548 = vmatprep.subr.mxu0 0.0
    %549 = vmatpush2.msra.mxu0 0.0
    %550 = vmatprep.subr.mxu0 0.0
    %551 = vmatpush2.msra.mxu0 0.0
    %552 = vmatprep.subr.mxu0 0.0
    %553 = vmatpush2.msra.mxu0 0.0
    %554 = vmatprep.subr.mxu0 0.0
    %555 = vmatpush2.msra.mxu0 0.0
    %556 = vmatprep.subr.mxu0 0.0
    %557 = vmatpush2.msra.mxu0 0.0
    %558 = vmatprep.subr.mxu0 0.0
    %559 = vmatpush2.msra.mxu0 0.0
    %560 = vmatprep.subr.mxu0 0.0
    %561 = vmatpush2.msra.mxu0 0.0
    %562 = vmatprep.subr.mxu0 0.0
    %563 = vmatpush2.msra.mxu0 0.0
    %564 = vmatprep.subr.mxu0 0.0
    %565 = vmatpush2.msra.mxu0 0.0
    %566 = vmatprep.subr.mxu0 0.0
    %567 = vmatpush2.msra.mxu0 0.0
    %568 = vmatprep.subr.mxu0 0.0
    %569 = vmatpush2.msra.mxu0 0.0
    %570 = vmatprep.subr.mxu0 0.0
    %571 = vmatpush2.msra.mxu0 0.0
    %572 = vmatprep.subr.mxu0 0.0
    %573 = vmatpush2.msra.mxu0 0.0
    %574 = vmatprep.mubr.f32.mxu0 0.0
    %575 = vmatmul.mubr.f32.gmra.mxu0 %v508
    %v576 = vpop.f32.mrf.mxu0
    %v577 = vadd.f32 %v197, %v576
    %v578 = vpop.f32.mrf.mxu0
    %579 = vdwg.mxu0
    %581 = vrot.lane.b32.xlu0 %v484, 96
    %v582 = vpop.permute.xlu0 %581
    %v584 = vadd.f32 %v577, %v582
    %v585 = vmul.f32 %v381, 0.5
    %v586 = vadd.f32 %v585, %v584
    %v587 = vsub.f32 1.0, %v386
    %v588 = vmul.f32 %v383, %v587
    %v589 = vmul.f32 %v386, 0.021
    %v590 = vadd.f32 %v588, %v589
    %v591 = vmul.f32 %v386, 0.132
    %v592 = vadd.f32 %v591, 0.0
    %v593 = vmul.f32 %v590, %v590
    %v594 = vsub.f32 %v593, %v590
    %v595 = vsub.f32 %v594, %v592
    %v596 = vadd.f32 %v595, %v586
    %v597 = vmul.f32 %v590, -0.172
    %v598 = vmul.f32 %v592, 0.529
    %v599 = vsub.f32 %v597, %v598
    %v600 = vadd.f32 %v590, %v596
    %v601 = vadd.f32 %v592, %v599
    %vm602 = vcmp.gt.f32.partialorder %v600, 0.5
    %v603 = vsel %vm602, 1, 0
    %v604 = vcvt.s32.f32 %v603
    %v605 = vadd.f32 %v387, %v604
    %v606 = vld [vmem:[#allocation2 + $0x10] sm:$0xff]
    %v607 = vmul.f32 %v390, 0.5
    %v608 = vadd.f32 %v607, %v606
    %v609 = vsub.f32 1.0, %v408
    %v610 = vmul.f32 %v404, %v609
    %v611 = vmul.f32 %v408, 0.021
    %v612 = vadd.f32 %v610, %v611
    %v613 = vmul.f32 %v408, 0.132
    %v614 = vadd.f32 %v405, %v613
    %v615 = vmul.f32 %v612, %v612
    %v616 = vsub.f32 %v615, %v612
    %v617 = vsub.f32 %v616, %v614
    %v618 = vadd.f32 %v617, %v608
    %v619 = vmul.f32 %v612, -0.172
    %v620 = vmul.f32 %v614, 0.529
    %v621 = vsub.f32 %v619, %v620
    %v622 = vadd.f32 %v612, %v618
    %v623 = vadd.f32 %v614, %v621
    %vm624 = vcmp.gt.f32.partialorder %v622, 0.5
    %v625 = vsel %vm624, 1, 0
    %v626 = vcvt.s32.f32 %v625
    %628 = vrot.lane.b32.xlu0 %v604, 64
    %v629 = vpop.permute.xlu0 %628
    %v631 = vsel %vm176, %v626, %v629
    %v633 = vsel %vm219, %v631, 0
    %635 = vmatprep.subr.mxu0 0.0
    %636 = vmatpush1.msra.mxu0 0.0
    %637 = vmatprep.subr.mxu0 0.0
    %638 = vmatpush1.msra.mxu0 0.0
    %639 = vmatprep.subr.mxu0 0.0
    %640 = vmatpush1.msra.mxu0 0.0
    %641 = vmatprep.subr.mxu0 0.0
    %642 = vmatpush1.msra.mxu0 0.0
    %643 = vmatprep.subr.mxu0 0.0
    %644 = vmatpush1.msra.mxu0 %v218
    %645 = vmatprep.subr.mxu0 0.0
    %646 = vmatpush1.msra.mxu0 %v217
    %647 = vmatprep.subr.mxu0 0.0
    %648 = vmatpush1.msra.mxu0 %v216
    %649 = vmatprep.subr.mxu0 0.0
    %650 = vmatpush1.msra.mxu0 %v215
    %651 = vmatprep.subr.mxu0 0.0
    %652 = vmatpush1.msra.mxu0 %v214
    %653 = vmatprep.subr.mxu0 0.0
    %654 = vmatpush1.msra.mxu0 %v213
    %655 = vmatprep.subr.mxu0 0.0
    %656 = vmatpush1.msra.mxu0 %v212
    %657 = vmatprep.subr.mxu0 0.0
    %658 = vmatpush1.msra.mxu0 %v211
    %659 = vmatprep.subr.mxu0 0.0
    %660 = vmatpush1.msra.mxu0 %v210
    %661 = vmatprep.subr.mxu0 0.0
    %662 = vmatpush1.msra.mxu0 %v209
    %663 = vmatprep.subr.mxu0 0.0
    %664 = vmatpush1.msra.mxu0 %v208
    %665 = vmatprep.subr.mxu0 0.0
    %666 = vmatpush1.msra.mxu0 %v207
    %667 = vmatprep.subr.mxu0 0.0
    %668 = vmatpush2.msra.mxu0 0.0
    %669 = vmatprep.subr.mxu0 0.0
    %670 = vmatpush2.msra.mxu0 0.0
    %671 = vmatprep.subr.mxu0 0.0
    %672 = vmatpush2.msra.mxu0 0.0
    %673 = vmatprep.subr.mxu0 0.0
    %674 = vmatpush2.msra.mxu0 0.0
    %675 = vmatprep.subr.mxu0 0.0
    %676 = vmatpush2.msra.mxu0 0.0
    %677 = vmatprep.subr.mxu0 0.0
    %678 = vmatpush2.msra.mxu0 0.0
    %679 = vmatprep.subr.mxu0 0.0
    %680 = vmatpush2.msra.mxu0 0.0
    %681 = vmatprep.subr.mxu0 0.0
    %682 = vmatpush2.msra.mxu0 0.0
    %683 = vmatprep.subr.mxu0 0.0
    %684 = vmatpush2.msra.mxu0 0.0
    %685 = vmatprep.subr.mxu0 0.0
    %686 = vmatpush2.msra.mxu0 0.0
    %687 = vmatprep.subr.mxu0 0.0
    %688 = vmatpush2.msra.mxu0 0.0
    %689 = vmatprep.subr.mxu0 0.0
    %690 = vmatpush2.msra.mxu0 0.0
    %691 = vmatprep.subr.mxu0 0.0
    %692 = vmatpush2.msra.mxu0 0.0
    %693 = vmatprep.subr.mxu0 0.0
    %694 = vmatpush2.msra.mxu0 0.0
    %695 = vmatprep.subr.mxu0 0.0
    %696 = vmatpush2.msra.mxu0 0.0
    %697 = vmatprep.subr.mxu0 0.0
    %698 = vmatpush2.msra.mxu0 0.0
    %699 = vmatprep.mubr.f32.mxu0 0.0
    %700 = vmatmul.mubr.f32.gmra.mxu0 %v633
    %v701 = vpop.f32.mrf.mxu0
    %v702 = vadd.f32 %v190, %v701
    %v703 = vpop.f32.mrf.mxu0
    %704 = vdwg.mxu0
    %v705 = vmul.f32 %v488, 0.5
    %v706 = vadd.f32 %v705, %v702
    %v707 = vsub.f32 1.0, %v506
    %v708 = vmul.f32 %v502, %v707
    %v709 = vmul.f32 %v506, 0.021
    %v710 = vadd.f32 %v708, %v709
    %v711 = vmul.f32 %v506, 0.132
    %v712 = vadd.f32 %v503, %v711
    %v713 = vmul.f32 %v710, %v710
    %v714 = vsub.f32 %v713, %v710
    %v715 = vsub.f32 %v714, %v712
    %v716 = vadd.f32 %v715, %v706
    %v717 = vmul.f32 %v710, -0.172
    %v718 = vmul.f32 %v712, 0.529
    %v719 = vsub.f32 %v717, %v718
    %v720 = vadd.f32 %v710, %v716
    %v721 = vadd.f32 %v712, %v719
    %vm722 = vcmp.gt.f32.partialorder %v720, 0.5
    %v723 = vsel %vm722, 1, 0
    %v724 = vcvt.s32.f32 %v723
    %v726 = vsel %vm46, %v724, 0
    %728 = vmatprep.subr.mxu0 0.0
    %729 = vmatpush1.msra.mxu0 0.0
    %730 = vmatprep.subr.mxu0 0.0
    %731 = vmatpush1.msra.mxu0 0.0
    %732 = vmatprep.subr.mxu0 0.0
    %733 = vmatpush1.msra.mxu0 0.0
    %734 = vmatprep.subr.mxu0 0.0
    %735 = vmatpush1.msra.mxu0 0.0
    %736 = vmatprep.subr.mxu0 0.0
    %737 = vmatpush1.msra.mxu0 0.0
    %738 = vmatprep.subr.mxu0 0.0
    %739 = vmatpush1.msra.mxu0 0.0
    %740 = vmatprep.subr.mxu0 0.0
    %741 = vmatpush1.msra.mxu0 0.0
    %742 = vmatprep.subr.mxu0 0.0
    %743 = vmatpush1.msra.mxu0 0.0
    %744 = vmatprep.subr.mxu0 0.0
    %745 = vmatpush1.msra.mxu0 0.0
    %746 = vmatprep.subr.mxu0 0.0
    %747 = vmatpush1.msra.mxu0 0.0
    %748 = vmatprep.subr.mxu0 0.0
    %749 = vmatpush1.msra.mxu0 0.0
    %750 = vmatprep.subr.mxu0 0.0
    %751 = vmatpush1.msra.mxu0 0.0
    %752 = vmatprep.subr.mxu0 0.0
    %753 = vmatpush1.msra.mxu0 %v302
    %754 = vmatprep.subr.mxu0 0.0
    %755 = vmatpush1.msra.mxu0 %v301
    %756 = vmatprep.subr.mxu0 0.0
    %757 = vmatpush1.msra.mxu0 %v300
    %758 = vmatprep.subr.mxu0 0.0
    %759 = vmatpush1.msra.mxu0 %v299
    %760 = vmatprep.subr.mxu0 0.0
    %761 = vmatpush2.msra.mxu0 0.0
    %762 = vmatprep.subr.mxu0 0.0
    %763 = vmatpush2.msra.mxu0 0.0
    %764 = vmatprep.subr.mxu0 0.0
    %765 = vmatpush2.msra.mxu0 0.0
    %766 = vmatprep.subr.mxu0 0.0
    %767 = vmatpush2.msra.mxu0 0.0
    %768 = vmatprep.subr.mxu0 0.0
    %769 = vmatpush2.msra.mxu0 0.0
    %770 = vmatprep.subr.mxu0 0.0
    %771 = vmatpush2.msra.mxu0 0.0
    %772 = vmatprep.subr.mxu0 0.0
    %773 = vmatpush2.msra.mxu0 0.0
    %774 = vmatprep.subr.mxu0 0.0
    %775 = vmatpush2.msra.mxu0 0.0
    %776 = vmatprep.subr.mxu0 0.0
    %777 = vmatpush2.msra.mxu0 0.0
    %778 = vmatprep.subr.mxu0 0.0
    %779 = vmatpush2.msra.mxu0 0.0
    %780 = vmatprep.subr.mxu0 0.0
    %781 = vmatpush2.msra.mxu0 0.0
    %782 = vmatprep.subr.mxu0 0.0
    %783 = vmatpush2.msra.mxu0 0.0
    %784 = vmatprep.subr.mxu0 0.0
    %785 = vmatpush2.msra.mxu0 0.0
    %786 = vmatprep.subr.mxu0 0.0
    %787 = vmatpush2.msra.mxu0 0.0
    %788 = vmatprep.subr.mxu0 0.0
    %789 = vmatpush2.msra.mxu0 0.0
    %790 = vmatprep.subr.mxu0 0.0
    %791 = vmatpush2.msra.mxu0 0.0
    %792 = vmatprep.mubr.f32.mxu0 0.0
    %793 = vmatmul.mubr.f32.gmra.mxu0 %v726
    %v794 = vpop.f32.mrf.mxu0
    %v795 = vadd.f32 %v197, %v794
    %v796 = vpop.f32.mrf.mxu0
    %797 = vdwg.mxu0
    %799 = vrot.lane.b32.xlu0 %v702, 96
    %v800 = vpop.permute.xlu0 %799
    %v802 = vadd.f32 %v795, %v800
    %v803 = vmul.f32 %v586, 0.5
    %v804 = vadd.f32 %v803, %v802
    %v805 = vsub.f32 1.0, %v604
    %v806 = vmul.f32 %v600, %v805
    %v807 = vmul.f32 %v604, 0.021
    %v808 = vadd.f32 %v806, %v807
    %v809 = vmul.f32 %v604, 0.132
    %v810 = vadd.f32 %v601, %v809
    %v811 = vmul.f32 %v808, %v808
    %v812 = vsub.f32 %v811, %v808
    %v813 = vsub.f32 %v812, %v810
    %v814 = vadd.f32 %v813, %v804
    %v815 = vmul.f32 %v808, -0.172
    %v816 = vmul.f32 %v810, 0.529
    %v817 = vsub.f32 %v815, %v816
    %v818 = vadd.f32 %v808, %v814
    %v819 = vadd.f32 %v810, %v817
    %vm820 = vcmp.gt.f32.partialorder %v818, 0.5
    %v821 = vsel %vm820, 1, 0
    %v822 = vcvt.s32.f32 %v821
    %v823 = vadd.f32 %v605, %v822
    %v824 = vld [vmem:[#allocation2 + $0x18] sm:$0xff]
    %v825 = vmul.f32 %v608, 0.5
    %v826 = vadd.f32 %v825, %v824
    %v827 = vsub.f32 1.0, %v626
    %v828 = vmul.f32 %v622, %v827
    %v829 = vmul.f32 %v626, 0.021
    %v830 = vadd.f32 %v828, %v829
    %v831 = vmul.f32 %v626, 0.132
    %v832 = vadd.f32 %v623, %v831
    %v833 = vmul.f32 %v830, %v830
    %v834 = vsub.f32 %v833, %v830
    %v835 = vsub.f32 %v834, %v832
    %v836 = vadd.f32 %v835, %v826
    %v837 = vmul.f32 %v830, -0.172
    %v838 = vmul.f32 %v832, 0.529
    %v839 = vsub.f32 %v837, %v838
    %v840 = vadd.f32 %v830, %v836
    %v841 = vadd.f32 %v832, %v839
    %vm842 = vcmp.gt.f32.partialorder %v840, 0.5
    %v843 = vsel %vm842, 1, 0
    %v844 = vcvt.s32.f32 %v843
    %846 = vrot.lane.b32.xlu0 %v822, 64
    %v847 = vpop.permute.xlu0 %846
    %v849 = vsel %vm176, %v844, %v847
    %v851 = vsel %vm219, %v849, 0
    %853 = vmatprep.subr.mxu0 0.0
    %854 = vmatpush1.msra.mxu0 0.0
    %855 = vmatprep.subr.mxu0 0.0
    %856 = vmatpush1.msra.mxu0 0.0
    %857 = vmatprep.subr.mxu0 0.0
    %858 = vmatpush1.msra.mxu0 0.0
    %859 = vmatprep.subr.mxu0 0.0
    %860 = vmatpush1.msra.mxu0 0.0
    %861 = vmatprep.subr.mxu0 0.0
    %862 = vmatpush1.msra.mxu0 %v218
    %863 = vmatprep.subr.mxu0 0.0
    %864 = vmatpush1.msra.mxu0 %v217
    %865 = vmatprep.subr.mxu0 0.0
    %866 = vmatpush1.msra.mxu0 %v216
    %867 = vmatprep.subr.mxu0 0.0
    %868 = vmatpush1.msra.mxu0 %v215
    %869 = vmatprep.subr.mxu0 0.0
    %870 = vmatpush1.msra.mxu0 %v214
    %871 = vmatprep.subr.mxu0 0.0
    %872 = vmatpush1.msra.mxu0 %v213
    %873 = vmatprep.subr.mxu0 0.0
    %874 = vmatpush1.msra.mxu0 %v212
    %875 = vmatprep.subr.mxu0 0.0
    %876 = vmatpush1.msra.mxu0 %v211
    %877 = vmatprep.subr.mxu0 0.0
    %878 = vmatpush1.msra.mxu0 %v210
    %879 = vmatprep.subr.mxu0 0.0
    %880 = vmatpush1.msra.mxu0 %v209
    %881 = vmatprep.subr.mxu0 0.0
    %882 = vmatpush1.msra.mxu0 %v208
    %883 = vmatprep.subr.mxu0 0.0
    %884 = vmatpush1.msra.mxu0 %v207
    %885 = vmatprep.subr.mxu0 0.0
    %886 = vmatpush2.msra.mxu0 0.0
    %887 = vmatprep.subr.mxu0 0.0
    %888 = vmatpush2.msra.mxu0 0.0
    %889 = vmatprep.subr.mxu0 0.0
    %890 = vmatpush2.msra.mxu0 0.0
    %891 = vmatprep.subr.mxu0 0.0
    %892 = vmatpush2.msra.mxu0 0.0
    %893 = vmatprep.subr.mxu0 0.0
    %894 = vmatpush2.msra.mxu0 0.0
    %895 = vmatprep.subr.mxu0 0.0
    %896 = vmatpush2.msra.mxu0 0.0
    %897 = vmatprep.subr.mxu0 0.0
    %898 = vmatpush2.msra.mxu0 0.0
    %899 = vmatprep.subr.mxu0 0.0
    %900 = vmatpush2.msra.mxu0 0.0
    %901 = vmatprep.subr.mxu0 0.0
    %902 = vmatpush2.msra.mxu0 0.0
    %903 = vmatprep.subr.mxu0 0.0
    %904 = vmatpush2.msra.mxu0 0.0
    %905 = vmatprep.subr.mxu0 0.0
    %906 = vmatpush2.msra.mxu0 0.0
    %907 = vmatprep.subr.mxu0 0.0
    %908 = vmatpush2.msra.mxu0 0.0
    %909 = vmatprep.subr.mxu0 0.0
    %910 = vmatpush2.msra.mxu0 0.0
    %911 = vmatprep.subr.mxu0 0.0
    %912 = vmatpush2.msra.mxu0 0.0
    %913 = vmatprep.subr.mxu0 0.0
    %914 = vmatpush2.msra.mxu0 0.0
    %915 = vmatprep.subr.mxu0 0.0
    %916 = vmatpush2.msra.mxu0 0.0
    %917 = vmatprep.mubr.f32.mxu0 0.0
    %918 = vmatmul.mubr.f32.gmra.mxu0 %v851
    %v919 = vpop.f32.mrf.mxu0
    %v920 = vadd.f32 %v190, %v919
    %v921 = vpop.f32.mrf.mxu0
    %922 = vdwg.mxu0
    %v923 = vmul.f32 %v706, 0.5
    %v924 = vadd.f32 %v923, %v920
    %v925 = vsub.f32 1.0, %v724
    %v926 = vmul.f32 %v720, %v925
    %v927 = vmul.f32 %v724, 0.021
    %v928 = vadd.f32 %v926, %v927
    %v929 = vmul.f32 %v724, 0.132
    %v930 = vadd.f32 %v721, %v929
    %v931 = vmul.f32 %v928, %v928
    %v932 = vsub.f32 %v931, %v928
    %v933 = vsub.f32 %v932, %v930
    %v934 = vadd.f32 %v933, %v924
    %v935 = vmul.f32 %v928, -0.172
    %v936 = vmul.f32 %v930, 0.529
    %v937 = vsub.f32 %v935, %v936
    %v938 = vadd.f32 %v928, %v934
    %v939 = vadd.f32 %v930, %v937
    %vm940 = vcmp.gt.f32.partialorder %v938, 0.5
    %v941 = vsel %vm940, 1, 0
    %v942 = vcvt.s32.f32 %v941
    %v944 = vsel %vm46, %v942, 0
    %946 = vmatprep.subr.mxu0 0.0
    %947 = vmatpush1.msra.mxu0 0.0
    %948 = vmatprep.subr.mxu0 0.0
    %949 = vmatpush1.msra.mxu0 0.0
    %950 = vmatprep.subr.mxu0 0.0
    %951 = vmatpush1.msra.mxu0 0.0
    %952 = vmatprep.subr.mxu0 0.0
    %953 = vmatpush1.msra.mxu0 0.0
    %954 = vmatprep.subr.mxu0 0.0
    %955 = vmatpush1.msra.mxu0 0.0
    %956 = vmatprep.subr.mxu0 0.0
    %957 = vmatpush1.msra.mxu0 0.0
    %958 = vmatprep.subr.mxu0 0.0
    %959 = vmatpush1.msra.mxu0 0.0
    %960 = vmatprep.subr.mxu0 0.0
    %961 = vmatpush1.msra.mxu0 0.0
    %962 = vmatprep.subr.mxu0 0.0
    %963 = vmatpush1.msra.mxu0 0.0
    %964 = vmatprep.subr.mxu0 0.0
    %965 = vmatpush1.msra.mxu0 0.0
    %966 = vmatprep.subr.mxu0 0.0
    %967 = vmatpush1.msra.mxu0 0.0
    %968 = vmatprep.subr.mxu0 0.0
    %969 = vmatpush1.msra.mxu0 0.0
    %970 = vmatprep.subr.mxu0 0.0
    %971 = vmatpush1.msra.mxu0 %v302
    %972 = vmatprep.subr.mxu0 0.0
    %973 = vmatpush1.msra.mxu0 %v301
    %974 = vmatprep.subr.mxu0 0.0
    %975 = vmatpush1.msra.mxu0 %v300
    %976 = vmatprep.subr.mxu0 0.0
    %977 = vmatpush1.msra.mxu0 %v299
    %978 = vmatprep.subr.mxu0 0.0
    %979 = vmatpush2.msra.mxu0 0.0
    %980 = vmatprep.subr.mxu0 0.0
    %981 = vmatpush2.msra.mxu0 0.0
    %982 = vmatprep.subr.mxu0 0.0
    %983 = vmatpush2.msra.mxu0 0.0
    %984 = vmatprep.subr.mxu0 0.0
    %985 = vmatpush2.msra.mxu0 0.0
    %986 = vmatprep.subr.mxu0 0.0
    %987 = vmatpush2.msra.mxu0 0.0
    %988 = vmatprep.subr.mxu0 0.0
    %989 = vmatpush2.msra.mxu0 0.0
    %990 = vmatprep.subr.mxu0 0.0
    %991 = vmatpush2.msra.mxu0 0.0
    %992 = vmatprep.subr.mxu0 0.0
    %993 = vmatpush2.msra.mxu0 0.0
    %994 = vmatprep.subr.mxu0 0.0
    %995 = vmatpush2.msra.mxu0 0.0
    %996 = vmatprep.subr.mxu0 0.0
    %997 = vmatpush2.msra.mxu0 0.0
    %998 = vmatprep.subr.mxu0 0.0
    %999 = vmatpush2.msra.mxu0 0.0
    %1000 = vmatprep.subr.mxu0 0.0
    %1001 = vmatpush2.msra.mxu0 0.0
    %1002 = vmatprep.subr.mxu0 0.0
    %1003 = vmatpush2.msra.mxu0 0.0
    %1004 = vmatprep.subr.mxu0 0.0
    %1005 = vmatpush2.msra.mxu0 0.0
    %1006 = vmatprep.subr.mxu0 0.0
    %1007 = vmatpush2.msra.mxu0 0.0
    %1008 = vmatprep.subr.mxu0 0.0
    %1009 = vmatpush2.msra.mxu0 0.0
    %1010 = vmatprep.mubr.f32.mxu0 0.0
    %1011 = vmatmul.mubr.f32.gmra.mxu0 %v944
    %v1012 = vpop.f32.mrf.mxu0
    %v1013 = vadd.f32 %v197, %v1012
    %v1014 = vpop.f32.mrf.mxu0
    %1015 = vdwg.mxu0
    %1017 = vrot.lane.b32.xlu0 %v920, 96
    %v1018 = vpop.permute.xlu0 %1017
    %v1020 = vadd.f32 %v1013, %v1018
    %v1021 = vmul.f32 %v804, 0.5
    %v1022 = vadd.f32 %v1021, %v1020
    %v1023 = vsub.f32 1.0, %v822
    %v1024 = vmul.f32 %v818, %v1023
    %v1025 = vmul.f32 %v822, 0.021
    %v1026 = vadd.f32 %v1024, %v1025
    %v1027 = vmul.f32 %v822, 0.132
    %v1028 = vadd.f32 %v819, %v1027
    %v1029 = vmul.f32 %v1026, %v1026
    %v1030 = vsub.f32 %v1029, %v1026
    %v1031 = vsub.f32 %v1030, %v1028
    %v1032 = vadd.f32 %v1031, %v1022
    %v1033 = vmul.f32 %v1026, -0.172
    %v1034 = vmul.f32 %v1028, 0.529
    %v1035 = vsub.f32 %v1033, %v1034
    %v1036 = vadd.f32 %v1026, %v1032
    %v1037 = vadd.f32 %v1028, %v1035
    %vm1038 = vcmp.gt.f32.partialorder %v1036, 0.5
    %v1039 = vsel %vm1038, 1, 0
    %v1040 = vcvt.s32.f32 %v1039
    %v1041 = vadd.f32 %v823, %v1040
    %v1042 = vld [vmem:[#allocation2 + $0x20] sm:$0xff]
    %v1043 = vmul.f32 %v826, 0.5
    %v1044 = vadd.f32 %v1043, %v1042
    %v1045 = vsub.f32 1.0, %v844
    %v1046 = vmul.f32 %v840, %v1045
    %v1047 = vmul.f32 %v844, 0.021
    %v1048 = vadd.f32 %v1046, %v1047
    %v1049 = vmul.f32 %v844, 0.132
    %v1050 = vadd.f32 %v841, %v1049
    %v1051 = vmul.f32 %v1048, %v1048
    %v1052 = vsub.f32 %v1051, %v1048
    %v1053 = vsub.f32 %v1052, %v1050
    %v1054 = vadd.f32 %v1053, %v1044
    %v1055 = vmul.f32 %v1048, -0.172
    %v1056 = vmul.f32 %v1050, 0.529
    %v1057 = vsub.f32 %v1055, %v1056
    %v1058 = vadd.f32 %v1048, %v1054
    %v1059 = vadd.f32 %v1050, %v1057
    %vm1060 = vcmp.gt.f32.partialorder %v1058, 0.5
    %v1061 = vsel %vm1060, 1, 0
    %v1062 = vcvt.s32.f32 %v1061
    %1064 = vrot.lane.b32.xlu0 %v1040, 64
    %v1065 = vpop.permute.xlu0 %1064
    %v1067 = vsel %vm176, %v1062, %v1065
    %v1069 = vsel %vm219, %v1067, 0
    %1071 = vmatprep.subr.mxu0 0.0
    %1072 = vmatpush1.msra.mxu0 0.0
    %1073 = vmatprep.subr.mxu0 0.0
    %1074 = vmatpush1.msra.mxu0 0.0
    %1075 = vmatprep.subr.mxu0 0.0
    %1076 = vmatpush1.msra.mxu0 0.0
    %1077 = vmatprep.subr.mxu0 0.0
    %1078 = vmatpush1.msra.mxu0 0.0
    %1079 = vmatprep.subr.mxu0 0.0
    %1080 = vmatpush1.msra.mxu0 %v218
    %1081 = vmatprep.subr.mxu0 0.0
    %1082 = vmatpush1.msra.mxu0 %v217
    %1083 = vmatprep.subr.mxu0 0.0
    %1084 = vmatpush1.msra.mxu0 %v216
    %1085 = vmatprep.subr.mxu0 0.0
    %1086 = vmatpush1.msra.mxu0 %v215
    %1087 = vmatprep.subr.mxu0 0.0
    %1088 = vmatpush1.msra.mxu0 %v214
    %1089 = vmatprep.subr.mxu0 0.0
    %1090 = vmatpush1.msra.mxu0 %v213
    %1091 = vmatprep.subr.mxu0 0.0
    %1092 = vmatpush1.msra.mxu0 %v212
    %1093 = vmatprep.subr.mxu0 0.0
    %1094 = vmatpush1.msra.mxu0 %v211
    %1095 = vmatprep.subr.mxu0 0.0
    %1096 = vmatpush1.msra.mxu0 %v210
    %1097 = vmatprep.subr.mxu0 0.0
    %1098 = vmatpush1.msra.mxu0 %v209
    %1099 = vmatprep.subr.mxu0 0.0
    %1100 = vmatpush1.msra.mxu0 %v208
    %1101 = vmatprep.subr.mxu0 0.0
    %1102 = vmatpush1.msra.mxu0 %v207
    %1103 = vmatprep.subr.mxu0 0.0
    %1104 = vmatpush2.msra.mxu0 0.0
    %1105 = vmatprep.subr.mxu0 0.0
    %1106 = vmatpush2.msra.mxu0 0.0
    %1107 = vmatprep.subr.mxu0 0.0
    %1108 = vmatpush2.msra.mxu0 0.0
    %1109 = vmatprep.subr.mxu0 0.0
    %1110 = vmatpush2.msra.mxu0 0.0
    %1111 = vmatprep.subr.mxu0 0.0
    %1112 = vmatpush2.msra.mxu0 0.0
    %1113 = vmatprep.subr.mxu0 0.0
    %1114 = vmatpush2.msra.mxu0 0.0
    %1115 = vmatprep.subr.mxu0 0.0
    %1116 = vmatpush2.msra.mxu0 0.0
    %1117 = vmatprep.subr.mxu0 0.0
    %1118 = vmatpush2.msra.mxu0 0.0
    %1119 = vmatprep.subr.mxu0 0.0
    %1120 = vmatpush2.msra.mxu0 0.0
    %1121 = vmatprep.subr.mxu0 0.0
    %1122 = vmatpush2.msra.mxu0 0.0
    %1123 = vmatprep.subr.mxu0 0.0
    %1124 = vmatpush2.msra.mxu0 0.0
    %1125 = vmatprep.subr.mxu0 0.0
    %1126 = vmatpush2.msra.mxu0 0.0
    %1127 = vmatprep.subr.mxu0 0.0
    %1128 = vmatpush2.msra.mxu0 0.0
    %1129 = vmatprep.subr.mxu0 0.0
    %1130 = vmatpush2.msra.mxu0 0.0
    %1131 = vmatprep.subr.mxu0 0.0
    %1132 = vmatpush2.msra.mxu0 0.0
    %1133 = vmatprep.subr.mxu0 0.0
    %1134 = vmatpush2.msra.mxu0 0.0
    %1135 = vmatprep.mubr.f32.mxu0 0.0
    %1136 = vmatmul.mubr.f32.gmra.mxu0 %v1069
    %v1137 = vpop.f32.mrf.mxu0
    %v1138 = vadd.f32 %v190, %v1137
    %v1139 = vpop.f32.mrf.mxu0
    %1140 = vdwg.mxu0
    %v1141 = vmul.f32 %v924, 0.5
    %v1142 = vadd.f32 %v1141, %v1138
    %v1143 = vsub.f32 1.0, %v942
    %v1144 = vmul.f32 %v938, %v1143
    %v1145 = vmul.f32 %v942, 0.021
    %v1146 = vadd.f32 %v1144, %v1145
    %v1147 = vmul.f32 %v942, 0.132
    %v1148 = vadd.f32 %v939, %v1147
    %v1149 = vmul.f32 %v1146, %v1146
    %v1150 = vsub.f32 %v1149, %v1146
    %v1151 = vsub.f32 %v1150, %v1148
    %v1152 = vadd.f32 %v1151, %v1142
    %v1153 = vmul.f32 %v1146, -0.172
    %v1154 = vmul.f32 %v1148, 0.529
    %v1155 = vsub.f32 %v1153, %v1154
    %v1156 = vadd.f32 %v1146, %v1152
    %v1157 = vadd.f32 %v1148, %v1155
    %vm1158 = vcmp.gt.f32.partialorder %v1156, 0.5
    %v1159 = vsel %vm1158, 1, 0
    %v1160 = vcvt.s32.f32 %v1159
    %v1162 = vsel %vm46, %v1160, 0
    %1164 = vmatprep.subr.mxu0 0.0
    %1165 = vmatpush1.msra.mxu0 0.0
    %1166 = vmatprep.subr.mxu0 0.0
    %1167 = vmatpush1.msra.mxu0 0.0
    %1168 = vmatprep.subr.mxu0 0.0
    %1169 = vmatpush1.msra.mxu0 0.0
    %1170 = vmatprep.subr.mxu0 0.0
    %1171 = vmatpush1.msra.mxu0 0.0
    %1172 = vmatprep.subr.mxu0 0.0
    %1173 = vmatpush1.msra.mxu0 0.0
    %1174 = vmatprep.subr.mxu0 0.0
    %1175 = vmatpush1.msra.mxu0 0.0
    %1176 = vmatprep.subr.mxu0 0.0
    %1177 = vmatpush1.msra.mxu0 0.0
    %1178 = vmatprep.subr.mxu0 0.0
    %1179 = vmatpush1.msra.mxu0 0.0
    %1180 = vmatprep.subr.mxu0 0.0
    %1181 = vmatpush1.msra.mxu0 0.0
    %1182 = vmatprep.subr.mxu0 0.0
    %1183 = vmatpush1.msra.mxu0 0.0
    %1184 = vmatprep.subr.mxu0 0.0
    %1185 = vmatpush1.msra.mxu0 0.0
    %1186 = vmatprep.subr.mxu0 0.0
    %1187 = vmatpush1.msra.mxu0 0.0
    %1188 = vmatprep.subr.mxu0 0.0
    %1189 = vmatpush1.msra.mxu0 %v302
    %1190 = vmatprep.subr.mxu0 0.0
    %1191 = vmatpush1.msra.mxu0 %v301
    %1192 = vmatprep.subr.mxu0 0.0
    %1193 = vmatpush1.msra.mxu0 %v300
    %1194 = vmatprep.subr.mxu0 0.0
    %1195 = vmatpush1.msra.mxu0 %v299
    %1196 = vmatprep.subr.mxu0 0.0
    %1197 = vmatpush2.msra.mxu0 0.0
    %1198 = vmatprep.subr.mxu0 0.0
    %1199 = vmatpush2.msra.mxu0 0.0
    %1200 = vmatprep.subr.mxu0 0.0
    %1201 = vmatpush2.msra.mxu0 0.0
    %1202 = vmatprep.subr.mxu0 0.0
    %1203 = vmatpush2.msra.mxu0 0.0
    %1204 = vmatprep.subr.mxu0 0.0
    %1205 = vmatpush2.msra.mxu0 0.0
    %1206 = vmatprep.subr.mxu0 0.0
    %1207 = vmatpush2.msra.mxu0 0.0
    %1208 = vmatprep.subr.mxu0 0.0
    %1209 = vmatpush2.msra.mxu0 0.0
    %1210 = vmatprep.subr.mxu0 0.0
    %1211 = vmatpush2.msra.mxu0 0.0
    %1212 = vmatprep.subr.mxu0 0.0
    %1213 = vmatpush2.msra.mxu0 0.0
    %1214 = vmatprep.subr.mxu0 0.0
    %1215 = vmatpush2.msra.mxu0 0.0
    %1216 = vmatprep.subr.mxu0 0.0
    %1217 = vmatpush2.msra.mxu0 0.0
    %1218 = vmatprep.subr.mxu0 0.0
    %1219 = vmatpush2.msra.mxu0 0.0
    %1220 = vmatprep.subr.mxu0 0.0
    %1221 = vmatpush2.msra.mxu0 0.0
    %1222 = vmatprep.subr.mxu0 0.0
    %1223 = vmatpush2.msra.mxu0 0.0
    %1224 = vmatprep.subr.mxu0 0.0
    %1225 = vmatpush2.msra.mxu0 0.0
    %1226 = vmatprep.subr.mxu0 0.0
    %1227 = vmatpush2.msra.mxu0 0.0
    %1228 = vmatprep.mubr.f32.mxu0 0.0
    %1229 = vmatmul.mubr.f32.gmra.mxu0 %v1162
    %v1230 = vpop.f32.mrf.mxu0
    %v1231 = vadd.f32 %v197, %v1230
    %v1232 = vpop.f32.mrf.mxu0
    %1233 = vdwg.mxu0
    %1235 = vrot.lane.b32.xlu0 %v1138, 96
    %v1236 = vpop.permute.xlu0 %1235
    %v1238 = vadd.f32 %v1231, %v1236
    %v1239 = vmul.f32 %v1022, 0.5
    %v1240 = vadd.f32 %v1239, %v1238
    %v1241 = vsub.f32 1.0, %v1040
    %v1242 = vmul.f32 %v1036, %v1241
    %v1243 = vmul.f32 %v1040, 0.021
    %v1244 = vadd.f32 %v1242, %v1243
    %v1245 = vmul.f32 %v1040, 0.132
    %v1246 = vadd.f32 %v1037, %v1245
    %v1247 = vmul.f32 %v1244, %v1244
    %v1248 = vsub.f32 %v1247, %v1244
    %v1249 = vsub.f32 %v1248, %v1246
    %v1250 = vadd.f32 %v1249, %v1240
    %v1251 = vmul.f32 %v1244, -0.172
    %v1252 = vmul.f32 %v1246, 0.529
    %v1253 = vsub.f32 %v1251, %v1252
    %v1254 = vadd.f32 %v1244, %v1250
    %v1255 = vadd.f32 %v1246, %v1253
    %vm1256 = vcmp.gt.f32.partialorder %v1254, 0.5
    %v1257 = vsel %vm1256, 1, 0
    %v1258 = vcvt.s32.f32 %v1257
    %v1259 = vadd.f32 %v1041, %v1258
    %v1260 = vld [vmem:[#allocation2 + $0x28] sm:$0xff]
    %v1261 = vmul.f32 %v1044, 0.5
    %v1262 = vadd.f32 %v1261, %v1260
    %v1263 = vsub.f32 1.0, %v1062
    %v1264 = vmul.f32 %v1058, %v1263
    %v1265 = vmul.f32 %v1062, 0.021
    %v1266 = vadd.f32 %v1264, %v1265
    %v1267 = vmul.f32 %v1062, 0.132
    %v1268 = vadd.f32 %v1059, %v1267
    %v1269 = vmul.f32 %v1266, %v1266
    %v1270 = vsub.f32 %v1269, %v1266
    %v1271 = vsub.f32 %v1270, %v1268
    %v1272 = vadd.f32 %v1271, %v1262
    %v1273 = vmul.f32 %v1266, -0.172
    %v1274 = vmul.f32 %v1268, 0.529
    %v1275 = vsub.f32 %v1273, %v1274
    %v1276 = vadd.f32 %v1266, %v1272
    %v1277 = vadd.f32 %v1268, %v1275
    %vm1278 = vcmp.gt.f32.partialorder %v1276, 0.5
    %v1279 = vsel %vm1278, 1, 0
    %v1280 = vcvt.s32.f32 %v1279
    %1282 = vrot.lane.b32.xlu0 %v1258, 64
    %v1283 = vpop.permute.xlu0 %1282
    %v1285 = vsel %vm176, %v1280, %v1283
    %v1287 = vsel %vm219, %v1285, 0
    %1289 = vmatprep.subr.mxu0 0.0
    %1290 = vmatpush1.msra.mxu0 0.0
    %1291 = vmatprep.subr.mxu0 0.0
    %1292 = vmatpush1.msra.mxu0 0.0
    %1293 = vmatprep.subr.mxu0 0.0
    %1294 = vmatpush1.msra.mxu0 0.0
    %1295 = vmatprep.subr.mxu0 0.0
    %1296 = vmatpush1.msra.mxu0 0.0
    %1297 = vmatprep.subr.mxu0 0.0
    %1298 = vmatpush1.msra.mxu0 %v218
    %1299 = vmatprep.subr.mxu0 0.0
    %1300 = vmatpush1.msra.mxu0 %v217
    %1301 = vmatprep.subr.mxu0 0.0
    %1302 = vmatpush1.msra.mxu0 %v216
    %1303 = vmatprep.subr.mxu0 0.0
    %1304 = vmatpush1.msra.mxu0 %v215
    %1305 = vmatprep.subr.mxu0 0.0
    %1306 = vmatpush1.msra.mxu0 %v214
    %1307 = vmatprep.subr.mxu0 0.0
    %1308 = vmatpush1.msra.mxu0 %v213
    %1309 = vmatprep.subr.mxu0 0.0
    %1310 = vmatpush1.msra.mxu0 %v212
    %1311 = vmatprep.subr.mxu0 0.0
    %1312 = vmatpush1.msra.mxu0 %v211
    %1313 = vmatprep.subr.mxu0 0.0
    %1314 = vmatpush1.msra.mxu0 %v210
    %1315 = vmatprep.subr.mxu0 0.0
    %1316 = vmatpush1.msra.mxu0 %v209
    %1317 = vmatprep.subr.mxu0 0.0
    %1318 = vmatpush1.msra.mxu0 %v208
    %1319 = vmatprep.subr.mxu0 0.0
    %1320 = vmatpush1.msra.mxu0 %v207
    %1321 = vmatprep.subr.mxu0 0.0
    %1322 = vmatpush2.msra.mxu0 0.0
    %1323 = vmatprep.subr.mxu0 0.0
    %1324 = vmatpush2.msra.mxu0 0.0
    %1325 = vmatprep.subr.mxu0 0.0
    %1326 = vmatpush2.msra.mxu0 0.0
    %1327 = vmatprep.subr.mxu0 0.0
    %1328 = vmatpush2.msra.mxu0 0.0
    %1329 = vmatprep.subr.mxu0 0.0
    %1330 = vmatpush2.msra.mxu0 0.0
    %1331 = vmatprep.subr.mxu0 0.0
    %1332 = vmatpush2.msra.mxu0 0.0
    %1333 = vmatprep.subr.mxu0 0.0
    %1334 = vmatpush2.msra.mxu0 0.0
    %1335 = vmatprep.subr.mxu0 0.0
    %1336 = vmatpush2.msra.mxu0 0.0
    %1337 = vmatprep.subr.mxu0 0.0
    %1338 = vmatpush2.msra.mxu0 0.0
    %1339 = vmatprep.subr.mxu0 0.0
    %1340 = vmatpush2.msra.mxu0 0.0
    %1341 = vmatprep.subr.mxu0 0.0
    %1342 = vmatpush2.msra.mxu0 0.0
    %1343 = vmatprep.subr.mxu0 0.0
    %1344 = vmatpush2.msra.mxu0 0.0
    %1345 = vmatprep.subr.mxu0 0.0
    %1346 = vmatpush2.msra.mxu0 0.0
    %1347 = vmatprep.subr.mxu0 0.0
    %1348 = vmatpush2.msra.mxu0 0.0
    %1349 = vmatprep.subr.mxu0 0.0
    %1350 = vmatpush2.msra.mxu0 0.0
    %1351 = vmatprep.subr.mxu0 0.0
    %1352 = vmatpush2.msra.mxu0 0.0
    %1353 = vmatprep.mubr.f32.mxu0 0.0
    %1354 = vmatmul.mubr.f32.gmra.mxu0 %v1287
    %v1355 = vpop.f32.mrf.mxu0
    %v1356 = vadd.f32 %v190, %v1355
    %v1357 = vpop.f32.mrf.mxu0
    %1358 = vdwg.mxu0
    %v1359 = vmul.f32 %v1142, 0.5
    %v1360 = vadd.f32 %v1359, %v1356
    %v1361 = vsub.f32 1.0, %v1160
    %v1362 = vmul.f32 %v1156, %v1361
    %v1363 = vmul.f32 %v1160, 0.021
    %v1364 = vadd.f32 %v1362, %v1363
    %v1365 = vmul.f32 %v1160, 0.132
    %v1366 = vadd.f32 %v1157, %v1365
    %v1367 = vmul.f32 %v1364, %v1364
    %v1368 = vsub.f32 %v1367, %v1364
    %v1369 = vsub.f32 %v1368, %v1366
    %v1370 = vadd.f32 %v1369, %v1360
    %v1371 = vmul.f32 %v1364, -0.172
    %v1372 = vmul.f32 %v1366, 0.529
    %v1373 = vsub.f32 %v1371, %v1372
    %v1374 = vadd.f32 %v1364, %v1370
    %v1375 = vadd.f32 %v1366, %v1373
    %vm1376 = vcmp.gt.f32.partialorder %v1374, 0.5
    %v1377 = vsel %vm1376, 1, 0
    %v1378 = vcvt.s32.f32 %v1377
    %v1380 = vsel %vm46, %v1378, 0
    %1382 = vmatprep.subr.mxu0 0.0
    %1383 = vmatpush1.msra.mxu0 0.0
    %1384 = vmatprep.subr.mxu0 0.0
    %1385 = vmatpush1.msra.mxu0 0.0
    %1386 = vmatprep.subr.mxu0 0.0
    %1387 = vmatpush1.msra.mxu0 0.0
    %1388 = vmatprep.subr.mxu0 0.0
    %1389 = vmatpush1.msra.mxu0 0.0
    %1390 = vmatprep.subr.mxu0 0.0
    %1391 = vmatpush1.msra.mxu0 0.0
    %1392 = vmatprep.subr.mxu0 0.0
    %1393 = vmatpush1.msra.mxu0 0.0
    %1394 = vmatprep.subr.mxu0 0.0
    %1395 = vmatpush1.msra.mxu0 0.0
    %1396 = vmatprep.subr.mxu0 0.0
    %1397 = vmatpush1.msra.mxu0 0.0
    %1398 = vmatprep.subr.mxu0 0.0
    %1399 = vmatpush1.msra.mxu0 0.0
    %1400 = vmatprep.subr.mxu0 0.0
    %1401 = vmatpush1.msra.mxu0 0.0
    %1402 = vmatprep.subr.mxu0 0.0
    %1403 = vmatpush1.msra.mxu0 0.0
    %1404 = vmatprep.subr.mxu0 0.0
    %1405 = vmatpush1.msra.mxu0 0.0
    %1406 = vmatprep.subr.mxu0 0.0
    %1407 = vmatpush1.msra.mxu0 %v302
    %1408 = vmatprep.subr.mxu0 0.0
    %1409 = vmatpush1.msra.mxu0 %v301
    %1410 = vmatprep.subr.mxu0 0.0
    %1411 = vmatpush1.msra.mxu0 %v300
    %1412 = vmatprep.subr.mxu0 0.0
    %1413 = vmatpush1.msra.mxu0 %v299
    %1414 = vmatprep.subr.mxu0 0.0
    %1415 = vmatpush2.msra.mxu0 0.0
    %1416 = vmatprep.subr.mxu0 0.0
    %1417 = vmatpush2.msra.mxu0 0.0
    %1418 = vmatprep.subr.mxu0 0.0
    %1419 = vmatpush2.msra.mxu0 0.0
    %1420 = vmatprep.subr.mxu0 0.0
    %1421 = vmatpush2.msra.mxu0 0.0
    %1422 = vmatprep.subr.mxu0 0.0
    %1423 = vmatpush2.msra.mxu0 0.0
    %1424 = vmatprep.subr.mxu0 0.0
    %1425 = vmatpush2.msra.mxu0 0.0
    %1426 = vmatprep.subr.mxu0 0.0
    %1427 = vmatpush2.msra.mxu0 0.0
    %1428 = vmatprep.subr.mxu0 0.0
    %1429 = vmatpush2.msra.mxu0 0.0
    %1430 = vmatprep.subr.mxu0 0.0
    %1431 = vmatpush2.msra.mxu0 0.0
    %1432 = vmatprep.subr.mxu0 0.0
    %1433 = vmatpush2.msra.mxu0 0.0
    %1434 = vmatprep.subr.mxu0 0.0
    %1435 = vmatpush2.msra.mxu0 0.0
    %1436 = vmatprep.subr.mxu0 0.0
    %1437 = vmatpush2.msra.mxu0 0.0
    %1438 = vmatprep.subr.mxu0 0.0
    %1439 = vmatpush2.msra.mxu0 0.0
    %1440 = vmatprep.subr.mxu0 0.0
    %1441 = vmatpush2.msra.mxu0 0.0
    %1442 = vmatprep.subr.mxu0 0.0
    %1443 = vmatpush2.msra.mxu0 0.0
    %1444 = vmatprep.subr.mxu0 0.0
    %1445 = vmatpush2.msra.mxu0 0.0
    %1446 = vmatprep.mubr.f32.mxu0 0.0
    %1447 = vmatmul.mubr.f32.gmra.mxu0 %v1380
    %v1448 = vpop.f32.mrf.mxu0
    %v1449 = vadd.f32 %v197, %v1448
    %v1450 = vpop.f32.mrf.mxu0
    %1451 = vdwg.mxu0
    %1453 = vrot.lane.b32.xlu0 %v1356, 96
    %v1454 = vpop.permute.xlu0 %1453
    %v1456 = vadd.f32 %v1449, %v1454
    %v1457 = vmul.f32 %v1240, 0.5
    %v1458 = vadd.f32 %v1457, %v1456
    %v1459 = vsub.f32 1.0, %v1258
    %v1460 = vmul.f32 %v1254, %v1459
    %v1461 = vmul.f32 %v1258, 0.021
    %v1462 = vadd.f32 %v1460, %v1461
    %v1463 = vmul.f32 %v1258, 0.132
    %v1464 = vadd.f32 %v1255, %v1463
    %v1465 = vmul.f32 %v1462, %v1462
    %v1466 = vsub.f32 %v1465, %v1462
    %v1467 = vsub.f32 %v1466, %v1464
    %v1468 = vadd.f32 %v1467, %v1458
    %v1469 = vmul.f32 %v1462, -0.172
    %v1470 = vmul.f32 %v1464, 0.529
    %v1471 = vsub.f32 %v1469, %v1470
    %v1472 = vadd.f32 %v1462, %v1468
    %v1473 = vadd.f32 %v1464, %v1471
    %vm1474 = vcmp.gt.f32.partialorder %v1472, 0.5
    %v1475 = vsel %vm1474, 1, 0
    %v1476 = vcvt.s32.f32 %v1475
    %v1477 = vadd.f32 %v1259, %v1476
    %v1478 = vld [vmem:[#allocation2 + $0x30] sm:$0xff]
    %v1479 = vmul.f32 %v1262, 0.5
    %v1480 = vadd.f32 %v1479, %v1478
    %v1481 = vsub.f32 1.0, %v1280
    %v1482 = vmul.f32 %v1276, %v1481
    %v1483 = vmul.f32 %v1280, 0.021
    %v1484 = vadd.f32 %v1482, %v1483
    %v1485 = vmul.f32 %v1280, 0.132
    %v1486 = vadd.f32 %v1277, %v1485
    %v1487 = vmul.f32 %v1484, %v1484
    %v1488 = vsub.f32 %v1487, %v1484
    %v1489 = vsub.f32 %v1488, %v1486
    %v1490 = vadd.f32 %v1489, %v1480
    %v1491 = vmul.f32 %v1484, -0.172
    %v1492 = vmul.f32 %v1486, 0.529
    %v1493 = vsub.f32 %v1491, %v1492
    %v1494 = vadd.f32 %v1484, %v1490
    %v1495 = vadd.f32 %v1486, %v1493
    %vm1496 = vcmp.gt.f32.partialorder %v1494, 0.5
    %v1497 = vsel %vm1496, 1, 0
    %v1498 = vcvt.s32.f32 %v1497
    %1500 = vrot.lane.b32.xlu0 %v1476, 64
    %v1501 = vpop.permute.xlu0 %1500
    %v1503 = vsel %vm176, %v1498, %v1501
    %v1505 = vsel %vm219, %v1503, 0
    %1507 = vmatprep.subr.mxu0 0.0
    %1508 = vmatpush1.msra.mxu0 0.0
    %1509 = vmatprep.subr.mxu0 0.0
    %1510 = vmatpush1.msra.mxu0 0.0
    %1511 = vmatprep.subr.mxu0 0.0
    %1512 = vmatpush1.msra.mxu0 0.0
    %1513 = vmatprep.subr.mxu0 0.0
    %1514 = vmatpush1.msra.mxu0 0.0
    %1515 = vmatprep.subr.mxu0 0.0
    %1516 = vmatpush1.msra.mxu0 %v218
    %1517 = vmatprep.subr.mxu0 0.0
    %1518 = vmatpush1.msra.mxu0 %v217
    %1519 = vmatprep.subr.mxu0 0.0
    %1520 = vmatpush1.msra.mxu0 %v216
    %1521 = vmatprep.subr.mxu0 0.0
    %1522 = vmatpush1.msra.mxu0 %v215
    %1523 = vmatprep.subr.mxu0 0.0
    %1524 = vmatpush1.msra.mxu0 %v214
    %1525 = vmatprep.subr.mxu0 0.0
    %1526 = vmatpush1.msra.mxu0 %v213
    %1527 = vmatprep.subr.mxu0 0.0
    %1528 = vmatpush1.msra.mxu0 %v212
    %1529 = vmatprep.subr.mxu0 0.0
    %1530 = vmatpush1.msra.mxu0 %v211
    %1531 = vmatprep.subr.mxu0 0.0
    %1532 = vmatpush1.msra.mxu0 %v210
    %1533 = vmatprep.subr.mxu0 0.0
    %1534 = vmatpush1.msra.mxu0 %v209
    %1535 = vmatprep.subr.mxu0 0.0
    %1536 = vmatpush1.msra.mxu0 %v208
    %1537 = vmatprep.subr.mxu0 0.0
    %1538 = vmatpush1.msra.mxu0 %v207
    %1539 = vmatprep.subr.mxu0 0.0
    %1540 = vmatpush2.msra.mxu0 0.0
    %1541 = vmatprep.subr.mxu0 0.0
    %1542 = vmatpush2.msra.mxu0 0.0
    %1543 = vmatprep.subr.mxu0 0.0
    %1544 = vmatpush2.msra.mxu0 0.0
    %1545 = vmatprep.subr.mxu0 0.0
    %1546 = vmatpush2.msra.mxu0 0.0
    %1547 = vmatprep.subr.mxu0 0.0
    %1548 = vmatpush2.msra.mxu0 0.0
    %1549 = vmatprep.subr.mxu0 0.0
    %1550 = vmatpush2.msra.mxu0 0.0
    %1551 = vmatprep.subr.mxu0 0.0
    %1552 = vmatpush2.msra.mxu0 0.0
    %1553 = vmatprep.subr.mxu0 0.0
    %1554 = vmatpush2.msra.mxu0 0.0
    %1555 = vmatprep.subr.mxu0 0.0
    %1556 = vmatpush2.msra.mxu0 0.0
    %1557 = vmatprep.subr.mxu0 0.0
    %1558 = vmatpush2.msra.mxu0 0.0
    %1559 = vmatprep.subr.mxu0 0.0
    %1560 = vmatpush2.msra.mxu0 0.0
    %1561 = vmatprep.subr.mxu0 0.0
    %1562 = vmatpush2.msra.mxu0 0.0
    %1563 = vmatprep.subr.mxu0 0.0
    %1564 = vmatpush2.msra.mxu0 0.0
    %1565 = vmatprep.subr.mxu0 0.0
    %1566 = vmatpush2.msra.mxu0 0.0
    %1567 = vmatprep.subr.mxu0 0.0
    %1568 = vmatpush2.msra.mxu0 0.0
    %1569 = vmatprep.subr.mxu0 0.0
    %1570 = vmatpush2.msra.mxu0 0.0
    %1571 = vmatprep.mubr.f32.mxu0 0.0
    %1572 = vmatmul.mubr.f32.gmra.mxu0 %v1505
    %v1573 = vpop.f32.mrf.mxu0
    %v1574 = vadd.f32 %v190, %v1573
    %v1575 = vpop.f32.mrf.mxu0
    %1576 = vdwg.mxu0
    %v1577 = vmul.f32 %v1360, 0.5
    %v1578 = vadd.f32 %v1577, %v1574
    %v1579 = vsub.f32 1.0, %v1378
    %v1580 = vmul.f32 %v1374, %v1579
    %v1581 = vmul.f32 %v1378, 0.021
    %v1582 = vadd.f32 %v1580, %v1581
    %v1583 = vmul.f32 %v1378, 0.132
    %v1584 = vadd.f32 %v1375, %v1583
    %v1585 = vmul.f32 %v1582, %v1582
    %v1586 = vsub.f32 %v1585, %v1582
    %v1587 = vsub.f32 %v1586, %v1584
    %v1588 = vadd.f32 %v1587, %v1578
    %v1589 = vmul.f32 %v1582, -0.172
    %v1590 = vmul.f32 %v1584, 0.529
    %v1591 = vsub.f32 %v1589, %v1590
    %v1592 = vadd.f32 %v1582, %v1588
    %v1593 = vadd.f32 %v1584, %v1591
    %vm1594 = vcmp.gt.f32.partialorder %v1592, 0.5
    %v1595 = vsel %vm1594, 1, 0
    %v1596 = vcvt.s32.f32 %v1595
    %v1598 = vsel %vm46, %v1596, 0
    %1600 = vmatprep.subr.mxu0 0.0
    %1601 = vmatpush1.msra.mxu0 0.0
    %1602 = vmatprep.subr.mxu0 0.0
    %1603 = vmatpush1.msra.mxu0 0.0
    %1604 = vmatprep.subr.mxu0 0.0
    %1605 = vmatpush1.msra.mxu0 0.0
    %1606 = vmatprep.subr.mxu0 0.0
    %1607 = vmatpush1.msra.mxu0 0.0
    %1608 = vmatprep.subr.mxu0 0.0
    %1609 = vmatpush1.msra.mxu0 0.0
    %1610 = vmatprep.subr.mxu0 0.0
    %1611 = vmatpush1.msra.mxu0 0.0
    %1612 = vmatprep.subr.mxu0 0.0
    %1613 = vmatpush1.msra.mxu0 0.0
    %1614 = vmatprep.subr.mxu0 0.0
    %1615 = vmatpush1.msra.mxu0 0.0
    %1616 = vmatprep.subr.mxu0 0.0
    %1617 = vmatpush1.msra.mxu0 0.0
    %1618 = vmatprep.subr.mxu0 0.0
    %1619 = vmatpush1.msra.mxu0 0.0
    %1620 = vmatprep.subr.mxu0 0.0
    %1621 = vmatpush1.msra.mxu0 0.0
    %1622 = vmatprep.subr.mxu0 0.0
    %1623 = vmatpush1.msra.mxu0 0.0
    %1624 = vmatprep.subr.mxu0 0.0
    %1625 = vmatpush1.msra.mxu0 %v302
    %1626 = vmatprep.subr.mxu0 0.0
    %1627 = vmatpush1.msra.mxu0 %v301
    %1628 = vmatprep.subr.mxu0 0.0
    %1629 = vmatpush1.msra.mxu0 %v300
    %1630 = vmatprep.subr.mxu0 0.0
    %1631 = vmatpush1.msra.mxu0 %v299
    %1632 = vmatprep.subr.mxu0 0.0
    %1633 = vmatpush2.msra.mxu0 0.0
    %1634 = vmatprep.subr.mxu0 0.0
    %1635 = vmatpush2.msra.mxu0 0.0
    %1636 = vmatprep.subr.mxu0 0.0
    %1637 = vmatpush2.msra.mxu0 0.0
    %1638 = vmatprep.subr.mxu0 0.0
    %1639 = vmatpush2.msra.mxu0 0.0
    %1640 = vmatprep.subr.mxu0 0.0
    %1641 = vmatpush2.msra.mxu0 0.0
    %1642 = vmatprep.subr.mxu0 0.0
    %1643 = vmatpush2.msra.mxu0 0.0
    %1644 = vmatprep.subr.mxu0 0.0
    %1645 = vmatpush2.msra.mxu0 0.0
    %1646 = vmatprep.subr.mxu0 0.0
    %1647 = vmatpush2.msra.mxu0 0.0
    %1648 = vmatprep.subr.mxu0 0.0
    %1649 = vmatpush2.msra.mxu0 0.0
    %1650 = vmatprep.subr.mxu0 0.0
    %1651 = vmatpush2.msra.mxu0 0.0
    %1652 = vmatprep.subr.mxu0 0.0
    %1653 = vmatpush2.msra.mxu0 0.0
    %1654 = vmatprep.subr.mxu0 0.0
    %1655 = vmatpush2.msra.mxu0 0.0
    %1656 = vmatprep.subr.mxu0 0.0
    %1657 = vmatpush2.msra.mxu0 0.0
    %1658 = vmatprep.subr.mxu0 0.0
    %1659 = vmatpush2.msra.mxu0 0.0
    %1660 = vmatprep.subr.mxu0 0.0
    %1661 = vmatpush2.msra.mxu0 0.0
    %1662 = vmatprep.subr.mxu0 0.0
    %1663 = vmatpush2.msra.mxu0 0.0
    %1664 = vmatprep.mubr.f32.mxu0 0.0
    %1665 = vmatmul.mubr.f32.gmra.mxu0 %v1598
    %v1666 = vpop.f32.mrf.mxu0
    %v1667 = vadd.f32 %v197, %v1666
    %v1668 = vpop.f32.mrf.mxu0
    %1669 = vdwg.mxu0
    %1671 = vrot.lane.b32.xlu0 %v1574, 96
    %v1672 = vpop.permute.xlu0 %1671
    %v1674 = vadd.f32 %v1667, %v1672
    %v1675 = vmul.f32 %v1458, 0.5
    %v1676 = vadd.f32 %v1675, %v1674
    %v1677 = vsub.f32 1.0, %v1476
    %v1678 = vmul.f32 %v1472, %v1677
    %v1679 = vmul.f32 %v1476, 0.021
    %v1680 = vadd.f32 %v1678, %v1679
    %v1681 = vmul.f32 %v1476, 0.132
    %v1682 = vadd.f32 %v1473, %v1681
    %v1683 = vmul.f32 %v1680, %v1680
    %v1684 = vsub.f32 %v1683, %v1680
    %v1685 = vsub.f32 %v1684, %v1682
    %v1686 = vadd.f32 %v1685, %v1676
    %v1687 = vmul.f32 %v1680, -0.172
    %v1688 = vmul.f32 %v1682, 0.529
    %v1689 = vsub.f32 %v1687, %v1688
    %v1690 = vadd.f32 %v1680, %v1686
    %v1691 = vadd.f32 %v1682, %v1689
    %vm1692 = vcmp.gt.f32.partialorder %v1690, 0.5
    %v1693 = vsel %vm1692, 1, 0
    %v1694 = vcvt.s32.f32 %v1693
    %v1695 = vadd.f32 %v1477, %v1694
    %v1696 = vld [vmem:[#allocation2 + $0x38] sm:$0xff]
    %v1697 = vmul.f32 %v1480, 0.5
    %v1698 = vadd.f32 %v1697, %v1696
    %v1699 = vsub.f32 1.0, %v1498
    %v1700 = vmul.f32 %v1494, %v1699
    %v1701 = vmul.f32 %v1498, 0.021
    %v1702 = vadd.f32 %v1700, %v1701
    %v1703 = vmul.f32 %v1498, 0.132
    %v1704 = vadd.f32 %v1495, %v1703
    %v1705 = vmul.f32 %v1702, %v1702
    %v1706 = vsub.f32 %v1705, %v1702
    %v1707 = vsub.f32 %v1706, %v1704
    %v1708 = vadd.f32 %v1707, %v1698
    %v1709 = vadd.f32 %v1702, %v1708
    %vm1710 = vcmp.gt.f32.partialorder %v1709, 0.5
    %v1711 = vsel %vm1710, 1, 0
    %v1712 = vcvt.s32.f32 %v1711
    %1714 = vrot.lane.b32.xlu0 %v1694, 64
    %v1715 = vpop.permute.xlu0 %1714
    %v1717 = vsel %vm176, %v1712, %v1715
    %v1719 = vsel %vm219, %v1717, 0
    %1721 = vmatprep.subr.mxu0 0.0
    %1722 = vmatpush1.msra.mxu0 0.0
    %1723 = vmatprep.subr.mxu0 0.0
    %1724 = vmatpush1.msra.mxu0 0.0
    %1725 = vmatprep.subr.mxu0 0.0
    %1726 = vmatpush1.msra.mxu0 0.0
    %1727 = vmatprep.subr.mxu0 0.0
    %1728 = vmatpush1.msra.mxu0 0.0
    %1729 = vmatprep.subr.mxu0 0.0
    %1730 = vmatpush1.msra.mxu0 %v218
    %1731 = vmatprep.subr.mxu0 0.0
    %1732 = vmatpush1.msra.mxu0 %v217
    %1733 = vmatprep.subr.mxu0 0.0
    %1734 = vmatpush1.msra.mxu0 %v216
    %1735 = vmatprep.subr.mxu0 0.0
    %1736 = vmatpush1.msra.mxu0 %v215
    %1737 = vmatprep.subr.mxu0 0.0
    %1738 = vmatpush1.msra.mxu0 %v214
    %1739 = vmatprep.subr.mxu0 0.0
    %1740 = vmatpush1.msra.mxu0 %v213
    %1741 = vmatprep.subr.mxu0 0.0
    %1742 = vmatpush1.msra.mxu0 %v212
    %1743 = vmatprep.subr.mxu0 0.0
    %1744 = vmatpush1.msra.mxu0 %v211
    %1745 = vmatprep.subr.mxu0 0.0
    %1746 = vmatpush1.msra.mxu0 %v210
    %1747 = vmatprep.subr.mxu0 0.0
    %1748 = vmatpush1.msra.mxu0 %v209
    %1749 = vmatprep.subr.mxu0 0.0
    %1750 = vmatpush1.msra.mxu0 %v208
    %1751 = vmatprep.subr.mxu0 0.0
    %1752 = vmatpush1.msra.mxu0 %v207
    %1753 = vmatprep.subr.mxu0 0.0
    %1754 = vmatpush2.msra.mxu0 0.0
    %1755 = vmatprep.subr.mxu0 0.0
    %1756 = vmatpush2.msra.mxu0 0.0
    %1757 = vmatprep.subr.mxu0 0.0
    %1758 = vmatpush2.msra.mxu0 0.0
    %1759 = vmatprep.subr.mxu0 0.0
    %1760 = vmatpush2.msra.mxu0 0.0
    %1761 = vmatprep.subr.mxu0 0.0
    %1762 = vmatpush2.msra.mxu0 0.0
    %1763 = vmatprep.subr.mxu0 0.0
    %1764 = vmatpush2.msra.mxu0 0.0
    %1765 = vmatprep.subr.mxu0 0.0
    %1766 = vmatpush2.msra.mxu0 0.0
    %1767 = vmatprep.subr.mxu0 0.0
    %1768 = vmatpush2.msra.mxu0 0.0
    %1769 = vmatprep.subr.mxu0 0.0
    %1770 = vmatpush2.msra.mxu0 0.0
    %1771 = vmatprep.subr.mxu0 0.0
    %1772 = vmatpush2.msra.mxu0 0.0
    %1773 = vmatprep.subr.mxu0 0.0
    %1774 = vmatpush2.msra.mxu0 0.0
    %1775 = vmatprep.subr.mxu0 0.0
    %1776 = vmatpush2.msra.mxu0 0.0
    %1777 = vmatprep.subr.mxu0 0.0
    %1778 = vmatpush2.msra.mxu0 0.0
    %1779 = vmatprep.subr.mxu0 0.0
    %1780 = vmatpush2.msra.mxu0 0.0
    %1781 = vmatprep.subr.mxu0 0.0
    %1782 = vmatpush2.msra.mxu0 0.0
    %1783 = vmatprep.subr.mxu0 0.0
    %1784 = vmatpush2.msra.mxu0 0.0
    %1785 = vmatprep.mubr.f32.mxu0 0.0
    %1786 = vmatmul.mubr.f32.gmra.mxu0 %v1719
    %v1787 = vpop.f32.mrf.mxu0
    %v1788 = vadd.f32 %v190, %v1787
    %v1789 = vpop.f32.mrf.mxu0
    %1790 = vdwg.mxu0
    %v1791 = vmul.f32 %v1578, 0.5
    %v1792 = vadd.f32 %v1791, %v1788
    %v1793 = vsub.f32 1.0, %v1596
    %v1794 = vmul.f32 %v1592, %v1793
    %v1795 = vmul.f32 %v1596, 0.021
    %v1796 = vadd.f32 %v1794, %v1795
    %v1797 = vmul.f32 %v1596, 0.132
    %v1798 = vadd.f32 %v1593, %v1797
    %v1799 = vmul.f32 %v1796, %v1796
    %v1800 = vsub.f32 %v1799, %v1796
    %v1801 = vsub.f32 %v1800, %v1798
    %v1802 = vadd.f32 %v1801, %v1792
    %v1803 = vadd.f32 %v1796, %v1802
    %vm1804 = vcmp.gt.f32.partialorder %v1803, 0.5
    %v1805 = vsel %vm1804, 1, 0
    %v1806 = vcvt.s32.f32 %v1805
    %v1808 = vsel %vm46, %v1806, 0
    %1810 = vmatprep.subr.mxu0 0.0
    %1811 = vmatpush1.msra.mxu0 0.0
    %1812 = vmatprep.subr.mxu0 0.0
    %1813 = vmatpush1.msra.mxu0 0.0
    %1814 = vmatprep.subr.mxu0 0.0
    %1815 = vmatpush1.msra.mxu0 0.0
    %1816 = vmatprep.subr.mxu0 0.0
    %1817 = vmatpush1.msra.mxu0 0.0
    %1818 = vmatprep.subr.mxu0 0.0
    %1819 = vmatpush1.msra.mxu0 0.0
    %1820 = vmatprep.subr.mxu0 0.0
    %1821 = vmatpush1.msra.mxu0 0.0
    %1822 = vmatprep.subr.mxu0 0.0
    %1823 = vmatpush1.msra.mxu0 0.0
    %1824 = vmatprep.subr.mxu0 0.0
    %1825 = vmatpush1.msra.mxu0 0.0
    %1826 = vmatprep.subr.mxu0 0.0
    %1827 = vmatpush1.msra.mxu0 0.0
    %1828 = vmatprep.subr.mxu0 0.0
    %1829 = vmatpush1.msra.mxu0 0.0
    %1830 = vmatprep.subr.mxu0 0.0
    %1831 = vmatpush1.msra.mxu0 0.0
    %1832 = vmatprep.subr.mxu0 0.0
    %1833 = vmatpush1.msra.mxu0 0.0
    %1834 = vmatprep.subr.mxu0 0.0
    %1835 = vmatpush1.msra.mxu0 %v302
    %1836 = vmatprep.subr.mxu0 0.0
    %1837 = vmatpush1.msra.mxu0 %v301
    %1838 = vmatprep.subr.mxu0 0.0
    %1839 = vmatpush1.msra.mxu0 %v300
    %1840 = vmatprep.subr.mxu0 0.0
    %1841 = vmatpush1.msra.mxu0 %v299
    %1842 = vmatprep.subr.mxu0 0.0
    %1843 = vmatpush2.msra.mxu0 0.0
    %1844 = vmatprep.subr.mxu0 0.0
    %1845 = vmatpush2.msra.mxu0 0.0
    %1846 = vmatprep.subr.mxu0 0.0
    %1847 = vmatpush2.msra.mxu0 0.0
    %1848 = vmatprep.subr.mxu0 0.0
    %1849 = vmatpush2.msra.mxu0 0.0
    %1850 = vmatprep.subr.mxu0 0.0
    %1851 = vmatpush2.msra.mxu0 0.0
    %1852 = vmatprep.subr.mxu0 0.0
    %1853 = vmatpush2.msra.mxu0 0.0
    %1854 = vmatprep.subr.mxu0 0.0
    %1855 = vmatpush2.msra.mxu0 0.0
    %1856 = vmatprep.subr.mxu0 0.0
    %1857 = vmatpush2.msra.mxu0 0.0
    %1858 = vmatprep.subr.mxu0 0.0
    %1859 = vmatpush2.msra.mxu0 0.0
    %1860 = vmatprep.subr.mxu0 0.0
    %1861 = vmatpush2.msra.mxu0 0.0
    %1862 = vmatprep.subr.mxu0 0.0
    %1863 = vmatpush2.msra.mxu0 0.0
    %1864 = vmatprep.subr.mxu0 0.0
    %1865 = vmatpush2.msra.mxu0 0.0
    %1866 = vmatprep.subr.mxu0 0.0
    %1867 = vmatpush2.msra.mxu0 0.0
    %1868 = vmatprep.subr.mxu0 0.0
    %1869 = vmatpush2.msra.mxu0 0.0
    %1870 = vmatprep.subr.mxu0 0.0
    %1871 = vmatpush2.msra.mxu0 0.0
    %1872 = vmatprep.subr.mxu0 0.0
    %1873 = vmatpush2.msra.mxu0 0.0
    %1874 = vmatprep.mubr.f32.mxu0 0.0
    %1875 = vmatmul.mubr.f32.gmra.mxu0 %v1808
    %v1876 = vpop.f32.mrf.mxu0
    %v1877 = vadd.f32 %v197, %v1876
    %v1878 = vpop.f32.mrf.mxu0
    %1879 = vdwg.mxu0
    %1881 = vrot.lane.b32.xlu0 %v1788, 96
    %v1882 = vpop.permute.xlu0 %1881
    %v1884 = vadd.f32 %v1877, %v1882
    %v1885 = vmul.f32 %v1676, 0.5
    %v1886 = vadd.f32 %v1885, %v1884
    %v1887 = vsub.f32 1.0, %v1694
    %v1888 = vmul.f32 %v1690, %v1887
    %v1889 = vmul.f32 %v1694, 0.021
    %v1890 = vadd.f32 %v1888, %v1889
    %v1891 = vmul.f32 %v1694, 0.132
    %v1892 = vadd.f32 %v1691, %v1891
    %v1893 = vmul.f32 %v1890, %v1890
    %v1894 = vsub.f32 %v1893, %v1890
    %v1895 = vsub.f32 %v1894, %v1892
    %v1896 = vadd.f32 %v1895, %v1886
    %v1897 = vadd.f32 %v1890, %v1896
    %vm1898 = vcmp.gt.f32.partialorder %v1897, 0.5
    %v1899 = vsel %vm1898, 1, 0
    %v1900 = vcvt.s32.f32 %v1899
    %v1901 = vadd.f32 %v1695, %v1900
    %v1902 = vmul.f32 %v1901, 0.125
    %1903 = vst.msk [vmem:[#allocation3] sm:$0xff] %vm46, %v1902
    // Predicated region
    $region30: #{tpu_custom_call.1} parent=1 // pred_check
      _
    $region31: #{tpu_custom_call.1} parent=1 // pred_check_branch
      %1905 = sbr.rel (0) target = $region33
    $region32: #{tpu_custom_call.1} parent=1 // pred_region
      %s1907 = ssub.s32 128, 128
      %1908 = vsyncadd [#allocation4], %s1907
      %s1910 = sshll.u32 [#allocation3], 4
      %s1911 = int_to_ptr.vmem [resolvable:$true] %s1910
      %1913 = dma.vmem_to_hbm [thread:$0]  %s1911, 128, %s7, [#allocation4]
    $region33: #{tpu_custom_call.1} parent=1 // pred_fallthru
      _
    // Predicated region
    $region34: #{tpu_custom_call.1} parent=1 // pred_check
      _
    $region35: #{tpu_custom_call.1} parent=1 // pred_check_branch
      %1915 = sbr.rel (0) target = $region37
    $region36: #{tpu_custom_call.1} parent=1 // pred_region
      %1916 = dma.done [#allocation4], 128
    $region37: #{tpu_custom_call.1} parent=1 // pred_fallthru
      _
    %1917 = vsyncpa [#allocation4], 1

</llo_original>
